<compile_context>
chip_gen: v7x
topology: tpu7x:2x2x1
jax: 0.10.0
libtpu: 0.0.40
codegen_flags: <defaults>
</compile_context>

<pallas_src>
import functools

import jax
import jax.numpy as jnp
from jax.experimental import pallas as pl
from jax.experimental.pallas import tpu as pltpu


# ----------------------------------------------------------------------------
# Fused decoder kernel: all LSTM layers + final Linear in one pallas_call.
#
# Ref order:
#   x_ref                                  (T*Bp, E)   flattened [features; embeddings]
#   (w_ih_l, w_hh_l, b_l) * num_layers     (E_l, 4H), (H, 4H), (1, 4H)   [i,f,o,g] order
#   lin_w_ref, lin_b_ref                   (H, V), (1, V)
#   out_ref                                (T*Bp, V)
#   seq_ref   (scratch)                    (T*Bp, H)   inter-layer hidden sequence
#   gates_ref (scratch)                    (T*Bp, 4H)  hoisted input-projection pre-gates
# ----------------------------------------------------------------------------
def _decoder_fused_kernel(num_layers, T, Bp, *refs):
    x_ref = refs[0]
    lin_w_ref = refs[1 + 3 * num_layers]
    lin_b_ref = refs[2 + 3 * num_layers]
    out_ref = refs[3 + 3 * num_layers]
    seq_ref = refs[4 + 3 * num_layers]
    gates_ref = refs[5 + 3 * num_layers]

    H = seq_ref.shape[-1]

    for layer in range(num_layers):
        # Weights stay resident in VMEM; loads hoisted out of the time loop
        # (JAX does not CSE broadcasts/loads inside fori_loop).
        w_ih = refs[1 + 3 * layer][...]            # (E_l, 4H)
        w_hh = refs[2 + 3 * layer][...]            # (H, 4H)
        b = refs[3 + 3 * layer][...]               # (1, 4H)
        in_ref = x_ref if layer == 0 else seq_ref

        # Hoisted input projection + bias for ALL timesteps: one big
        # (T*Bp, E_l) @ (E_l, 4H) MXU matmul.  Reads all of seq_ref (for
        # layer > 0) before the loop below overwrites it -> in-place reuse is
        # safe by construction.
        gates_ref[...] = (
            jnp.dot(in_ref[...], w_ih, preferred_element_type=jnp.float32) + b)

        def step(t, carry, w_hh=w_hh):
            h, c = carry
            row = pl.multiple_of(t * Bp, Bp)       # sublane-aligned offset
            # Serial per-step work: only the recurrent matmul (K = H).
            gates = gates_ref[pl.ds(row, Bp), :] + jnp.dot(
                h, w_hh, preferred_element_type=jnp.float32)    # (Bp, 4H)

            # Gate column order is [i, f, o, g] (permuted at init time), so
            # sigmoid covers only the first 3H lanes and tanh the last H.
            s = jax.nn.sigmoid(gates[:, :3 * H])
            g_g = jnp.tanh(gates[:, 3 * H:])
            i_g = s[:, 0 * H:1 * H]
            f_g = s[:, 1 * H:2 * H]
            o_g = s[:, 2 * H:3 * H]

            c_new = f_g * c + i_g * g_g
            h_new = o_g * jnp.tanh(c_new)

            seq_ref[pl.ds(row, Bp), :] = h_new
            return h_new, c_new

        zeros = jnp.zeros((Bp, H), jnp.float32)    # PyTorch zero-init state
        # Fully unroll the short fixed-trip recurrence for LLO scheduler
        # visibility (overlaps consecutive steps' MXU/EUP/VPU work).
        jax.lax.fori_loop(0, T, step, (zeros, zeros), unroll=True)

    # Final Linear over the whole hidden sequence: (T*Bp, H) @ (H, V) + b.
    logits = (jnp.dot(seq_ref[...], lin_w_ref[...],
                      preferred_element_type=jnp.float32)
              + lin_b_ref[...])
    out_ref[...] = logits.astype(out_ref.dtype)


def decoder_rnn_fused(x_flat, lstm_params, lin_w_t, lin_b, *, T, Bp):
    """x_flat: (T*Bp, E); lstm_params: [(w_ih_t, w_hh_t, b)]; lin_w_t: (H, V); lin_b: (1, V)."""
    num_layers = len(lstm_params)
    E = x_flat.shape[-1]
    H = lin_w_t.shape[0]
    V = lin_w_t.shape[1]

    inputs = [x_flat]
    in_specs = [pl.BlockSpec((T * Bp, E), lambda i: (0, 0))]
    for (w_ih_t, w_hh_t, b) in lstm_params:
        inputs += [w_ih_t, w_hh_t, b]
        in_specs += [
            pl.BlockSpec(w_ih_t.shape, lambda i: (0, 0)),
            pl.BlockSpec(w_hh_t.shape, lambda i: (0, 0)),
            pl.BlockSpec(b.shape, lambda i: (0, 0)),
        ]
    inputs += [lin_w_t, lin_b]
    in_specs += [
        pl.BlockSpec(lin_w_t.shape, lambda i: (0, 0)),
        pl.BlockSpec(lin_b.shape, lambda i: (0, 0)),
    ]

    kernel = functools.partial(_decoder_fused_kernel, num_layers, T, Bp)

    return pl.pallas_call(
        kernel,
        out_shape=jax.ShapeDtypeStruct((T * Bp, V), jnp.float32),
        grid_spec=pltpu.PrefetchScalarGridSpec(
            num_scalar_prefetch=0,
            grid=(1,),
            in_specs=in_specs,
            out_specs=pl.BlockSpec((T * Bp, V), lambda i: (0, 0)),
            scratch_shapes=[
                pltpu.VMEM((T * Bp, H), jnp.float32),       # seq_ref
                pltpu.VMEM((T * Bp, 4 * H), jnp.float32),   # gates_ref
            ],
        ),
        compiler_params=pltpu.CompilerParams(
            dimension_semantics=("arbitrary",)),
    )(*inputs)


# ----------------------------------------------------------------------------
# DecoderRNN forward (glue in plain JAX, all compute in one Pallas kernel)
# ----------------------------------------------------------------------------
def decoder_rnn_forward(params, features, captions):
    """features: (B, E) float32; captions: (T, B) int32 -> (T+1, B, V)."""
    B, E = features.shape
    # Embedding lookup (gather) + dropout (eval-mode identity).
    # TODO(synk): move the gather/concat/pad into the kernel via scalar
    #             prefetch + pl.Element index_map to avoid one HBM round-trip.
    emb = jnp.take(params["embed"], captions, axis=0)          # (T, B, E)
    # cat(features.unsqueeze(0), embeddings, dim=0)
    x = jnp.concatenate([features[None, :, :], emb], axis=0)   # (T+1, B, E)

    Tp1 = x.shape[0]
    Bp = max(8, ((B + 7) // 8) * 8)                            # pad to sublane height
    if Bp != B:
        x = jnp.pad(x, ((0, 0), (0, Bp - B), (0, 0)))
    x_flat = x.reshape(Tp1 * Bp, E)

    out = decoder_rnn_fused(x_flat, params["lstm"], params["lin_w_t"],
                            params["lin_b"], T=Tp1, Bp=Bp)
    V = params["lin_w_t"].shape[1]
    return out.reshape(Tp1, Bp, V)[:, :B, :]


# ----------------------------------------------------------------------------
# Pure-JAX reference (for correctness check) — same parameter layout
# ([i, f, o, g] column order), mathematically identical to PyTorch's LSTM.
# ----------------------------------------------------------------------------
def decoder_rnn_reference(params, features, captions):
    emb = jnp.take(params["embed"], captions, axis=0)
    x = jnp.concatenate([features[None, :, :], emb], axis=0)
    for (w_ih_t, w_hh_t, b) in params["lstm"]:
        T, B, _ = x.shape
        H = w_hh_t.shape[0]
        h = jnp.zeros((B, H), jnp.float32)
        c = jnp.zeros((B, H), jnp.float32)
        outs = []
        for t in range(T):
            gates = x[t] @ w_ih_t + h @ w_hh_t + b
            i_g = jax.nn.sigmoid(gates[:, 0 * H:1 * H])
            f_g = jax.nn.sigmoid(gates[:, 1 * H:2 * H])
            o_g = jax.nn.sigmoid(gates[:, 2 * H:3 * H])
            g_g = jnp.tanh(gates[:, 3 * H:4 * H])
            c = f_g * c + i_g * g_g
            h = o_g * jnp.tanh(c)
            outs.append(h)
        x = jnp.stack(outs, axis=0)
    return x @ params["lin_w_t"] + params["lin_b"]


# ----------------------------------------------------------------------------
# Deterministic parameter init (PyTorch-like uniform(-1/sqrt(H), 1/sqrt(H))).
# Weights are stored transposed (in, 4H), with gate columns permuted from the
# PyTorch order [i, f, g, o] to [i, f, o, g] so the kernel can apply sigmoid to
# the first 3H lanes and tanh to the last H, and the two biases are summed.
# (A PyTorch checkpoint conversion must apply the same permutation.)
# ----------------------------------------------------------------------------
def _reorder_ifgo_to_ifog(x):
    i, f, g, o = jnp.split(x, 4, axis=-1)
    return jnp.concatenate([i, f, o, g], axis=-1)


def init_params(key, embed_size, hidden_size, vocab_size, num_layers):
    keys = jax.random.split(key, 1 + 4 * num_layers + 2)
    k = iter(keys)
    bound = 1.0 / jnp.sqrt(hidden_size)
    params = {}
    params["embed"] = jax.random.normal(next(k), (vocab_size, embed_size),
                                        jnp.float32)
    lstm = []
    in_size = embed_size
    for _ in range(num_layers):
        w_ih = jax.random.uniform(next(k), (4 * hidden_size, in_size),
                                  jnp.float32, -bound, bound)
        w_hh = jax.random.uniform(next(k), (4 * hidden_size, hidden_size),
                                  jnp.float32, -bound, bound)
        b_ih = jax.random.uniform(next(k), (4 * hidden_size,),
                                  jnp.float32, -bound, bound)
        b_hh = jax.random.uniform(next(k), (4 * hidden_size,),
                                  jnp.float32, -bound, bound)
        w_ih_t = _reorder_ifgo_to_ifog(w_ih.T)                 # (in_size, 4H)
        w_hh_t = _reorder_ifgo_to_ifog(w_hh.T)                 # (H, 4H)
        b = _reorder_ifgo_to_ifog((b_ih + b_hh)[None, :])      # (1, 4H)
        lstm.append((w_ih_t, w_hh_t, b))
        in_size = hidden_size
    params["lstm"] = lstm
    lin_w = jax.random.uniform(next(k), (vocab_size, hidden_size),
                               jnp.float32, -bound, bound)
    lin_b = jax.random.uniform(next(k), (vocab_size,),
                               jnp.float32, -bound, bound)
    params["lin_w_t"] = lin_w.T
    params["lin_b"] = lin_b[None, :]
    return params


if __name__ == "__main__":
    embed_size = 32
    hidden_size = 32
    vocab_size = 128
    num_layers = 2
    seq_len = 8
    batch = 2

    root = jax.random.PRNGKey(0)
    k_par, k_feat, k_cap = jax.random.split(root, 3)

    params = init_params(k_par, embed_size, hidden_size, vocab_size, num_layers)
    features = jax.random.normal(k_feat, (batch, embed_size), jnp.float32)
    captions = jax.random.randint(k_cap, (seq_len, batch), 0, vocab_size,
                                  jnp.int32)

    out = decoder_rnn_forward(params, features, captions)
    out = jax.block_until_ready(out)

    assert out.shape == (seq_len + 1, batch, vocab_size), out.shape

    ref = decoder_rnn_reference(params, features, captions)
    assert jnp.allclose(out, ref, rtol=1e-3, atol=1e-3), (
        float(jnp.max(jnp.abs(out - ref))))

    print("KERNEL_OK")
</pallas_src>

<mosaic_0001>
module attributes {stable_mosaic.version = 11 : i64} {
  func.func @_decoder_fused_kernel(%arg0: i32, %arg1: memref<72x32xf32, #tpu.memory_space<vmem>>, %arg2: memref<32x128xf32, #tpu.memory_space<vmem>>, %arg3: memref<32x128xf32, #tpu.memory_space<vmem>>, %arg4: memref<1x128xf32, #tpu.memory_space<vmem>>, %arg5: memref<32x128xf32, #tpu.memory_space<vmem>>, %arg6: memref<32x128xf32, #tpu.memory_space<vmem>>, %arg7: memref<1x128xf32, #tpu.memory_space<vmem>>, %arg8: memref<32x128xf32, #tpu.memory_space<vmem>>, %arg9: memref<1x128xf32, #tpu.memory_space<vmem>>, %arg10: memref<72x128xf32, #tpu.memory_space<vmem>>, %arg11: memref<72x32xf32, #tpu.memory_space<vmem>>, %arg12: memref<72x128xf32, #tpu.memory_space<vmem>>) attributes {dimension_semantics = [#tpu.dimension_semantics<arbitrary>], iteration_bounds = array<i64: 1>, scalar_prefetch = 0 : i64, scratch_operands = 2 : i64, tpu.core_type = #tpu.core_type<tc>, window_params = [{pipeline_mode = #tpu.pipeline_mode<synchronous>, transform_indices = @transform_0, window_bounds = array<i64: 72, 32>}, {pipeline_mode = #tpu.pipeline_mode<synchronous>, transform_indices = @transform_1, window_bounds = array<i64: 32, 128>}, {pipeline_mode = #tpu.pipeline_mode<synchronous>, transform_indices = @transform_2, window_bounds = array<i64: 32, 128>}, {pipeline_mode = #tpu.pipeline_mode<synchronous>, transform_indices = @transform_3, window_bounds = array<i64: 1, 128>}, {pipeline_mode = #tpu.pipeline_mode<synchronous>, transform_indices = @transform_4, window_bounds = array<i64: 32, 128>}, {pipeline_mode = #tpu.pipeline_mode<synchronous>, transform_indices = @transform_5, window_bounds = array<i64: 32, 128>}, {pipeline_mode = #tpu.pipeline_mode<synchronous>, transform_indices = @transform_6, window_bounds = array<i64: 1, 128>}, {pipeline_mode = #tpu.pipeline_mode<synchronous>, transform_indices = @transform_7, window_bounds = array<i64: 32, 128>}, {pipeline_mode = #tpu.pipeline_mode<synchronous>, transform_indices = @transform_8, window_bounds = array<i64: 1, 128>}, {pipeline_mode = #tpu.pipeline_mode<synchronous>, transform_indices = @transform_9, window_bounds = array<i64: 72, 128>}]} {
    %c0 = arith.constant 0 : index
    %c0_0 = arith.constant 0 : index
    %0 = vector.load %arg2[%c0, %c0_0] : memref<32x128xf32, #tpu.memory_space<vmem>>, vector<32x128xf32>
    %c0_1 = arith.constant 0 : index
    %c0_2 = arith.constant 0 : index
    %1 = vector.load %arg3[%c0_1, %c0_2] : memref<32x128xf32, #tpu.memory_space<vmem>>, vector<32x128xf32>
    %c0_3 = arith.constant 0 : index
    %c0_4 = arith.constant 0 : index
    %2 = vector.load %arg4[%c0_3, %c0_4] : memref<1x128xf32, #tpu.memory_space<vmem>>, vector<1x128xf32>
    %c0_5 = arith.constant 0 : index
    %c0_6 = arith.constant 0 : index
    %3 = vector.load %arg1[%c0_5, %c0_6] : memref<72x32xf32, #tpu.memory_space<vmem>>, vector<72x32xf32>
    %cst = arith.constant dense<0.000000e+00> : vector<72x128xf32>
    %4 = tpu.matmul %3, %0, %cst {dimension_numbers = #tpu.dot_dimension_numbers<[1], [0], [0], [1], [0, 0, 1, 1], [], []>} : vector<72x32xf32>, vector<32x128xf32>, vector<72x128xf32> -> vector<72x128xf32>
    %5 = vector.broadcast %2 : vector<1x128xf32> to vector<72x128xf32>
    %6 = arith.addf %4, %5 : vector<72x128xf32>
    %c0_7 = arith.constant 0 : index
    %c0_8 = arith.constant 0 : index
    %7 = vector.load %arg12[%c0_7, %c0_8] : memref<72x128xf32, #tpu.memory_space<vmem>>, vector<72x128xf32>
    tpu.vector_store %arg12[%c0_7, %c0_8], %6 {strides = array<i32>} : memref<72x128xf32, #tpu.memory_space<vmem>>, vector<72x128xf32>,
    %cst_9 = arith.constant 0.000000e+00 : f32
    %8 = vector.broadcast %cst_9 : f32 to vector<8x32xf32>
    %c0_i32 = arith.constant 0 : i32
    %c8_i32 = arith.constant 8 : i32
    %9 = arith.muli %c0_i32, %c8_i32 : i32
    %10 = tpu.assume_multiple %9, 8 : i32
    %11 = arith.index_cast %10 : i32 to index
    %c0_10 = arith.constant 0 : index
    %12 = vector.load %arg12[%11, %c0_10] : memref<72x128xf32, #tpu.memory_space<vmem>>, vector<8x128xf32>
    %cst_11 = arith.constant dense<0.000000e+00> : vector<8x128xf32>
    %13 = tpu.matmul %8, %1, %cst_11 {dimension_numbers = #tpu.dot_dimension_numbers<[1], [0], [0], [1], [0, 0, 1, 1], [], []>} : vector<8x32xf32>, vector<32x128xf32>, vector<8x128xf32> -> vector<8x128xf32>
    %14 = arith.addf %12, %13 : vector<8x128xf32>
    %15 = vector.extract_strided_slice %14 {offsets = [0, 0], sizes = [8, 96], strides = [1, 1]} : vector<8x128xf32> to vector<8x96xf32>
    %16 = arith.negf %15 : vector<8x96xf32>
    %17 = math.exp %16 : vector<8x96xf32>
    %cst_12 = arith.constant 1.000000e+00 : f32
    %18 = vector.broadcast %cst_12 : f32 to vector<8x96xf32>
    %19 = arith.addf %18, %17 : vector<8x96xf32>
    %20 = arith.divf %18, %19 : vector<8x96xf32>
    %21 = vector.extract_strided_slice %14 {offsets = [0, 96], sizes = [8, 32], strides = [1, 1]} : vector<8x128xf32> to vector<8x32xf32>
    %22 = math.tanh %21 : vector<8x32xf32>
    %23 = vector.extract_strided_slice %20 {offsets = [0, 0], sizes = [8, 32], strides = [1, 1]} : vector<8x96xf32> to vector<8x32xf32>
    %24 = vector.extract_strided_slice %20 {offsets = [0, 32], sizes = [8, 32], strides = [1, 1]} : vector<8x96xf32> to vector<8x32xf32>
    %25 = vector.extract_strided_slice %20 {offsets = [0, 64], sizes = [8, 32], strides = [1, 1]} : vector<8x96xf32> to vector<8x32xf32>
    %26 = arith.mulf %24, %8 : vector<8x32xf32>
    %27 = arith.mulf %23, %22 : vector<8x32xf32>
    %28 = arith.addf %26, %27 : vector<8x32xf32>
    %29 = math.tanh %28 : vector<8x32xf32>
    %30 = arith.mulf %25, %29 : vector<8x32xf32>
    %31 = arith.index_cast %10 : i32 to index
    %c0_13 = arith.constant 0 : index
    %32 = vector.load %arg11[%31, %c0_13] : memref<72x32xf32, #tpu.memory_space<vmem>>, vector<8x32xf32>
    tpu.vector_store %arg11[%31, %c0_13], %30 {strides = array<i32>} : memref<72x32xf32, #tpu.memory_space<vmem>>, vector<8x32xf32>,
    %c1_i32 = arith.constant 1 : i32
    %c8_i32_14 = arith.constant 8 : i32
    %33 = arith.muli %c1_i32, %c8_i32_14 : i32
    %34 = tpu.assume_multiple %33, 8 : i32
    %35 = arith.index_cast %34 : i32 to index
    %c0_15 = arith.constant 0 : index
    %36 = vector.load %arg12[%35, %c0_15] : memref<72x128xf32, #tpu.memory_space<vmem>>, vector<8x128xf32>
    %cst_16 = arith.constant dense<0.000000e+00> : vector<8x128xf32>
    %37 = tpu.matmul %30, %1, %cst_16 {dimension_numbers = #tpu.dot_dimension_numbers<[1], [0], [0], [1], [0, 0, 1, 1], [], []>} : vector<8x32xf32>, vector<32x128xf32>, vector<8x128xf32> -> vector<8x128xf32>
    %38 = arith.addf %36, %37 : vector<8x128xf32>
    %39 = vector.extract_strided_slice %38 {offsets = [0, 0], sizes = [8, 96], strides = [1, 1]} : vector<8x128xf32> to vector<8x96xf32>
    %40 = arith.negf %39 : vector<8x96xf32>
    %41 = math.exp %40 : vector<8x96xf32>
    %cst_17 = arith.constant 1.000000e+00 : f32
    %42 = vector.broadcast %cst_17 : f32 to vector<8x96xf32>
    %43 = arith.addf %42, %41 : vector<8x96xf32>
    %44 = arith.divf %42, %43 : vector<8x96xf32>
    %45 = vector.extract_strided_slice %38 {offsets = [0, 96], sizes = [8, 32], strides = [1, 1]} : vector<8x128xf32> to vector<8x32xf32>
    %46 = math.tanh %45 : vector<8x32xf32>
    %47 = vector.extract_strided_slice %44 {offsets = [0, 0], sizes = [8, 32], strides = [1, 1]} : vector<8x96xf32> to vector<8x32xf32>
    %48 = vector.extract_strided_slice %44 {offsets = [0, 32], sizes = [8, 32], strides = [1, 1]} : vector<8x96xf32> to vector<8x32xf32>
    %49 = vector.extract_strided_slice %44 {offsets = [0, 64], sizes = [8, 32], strides = [1, 1]} : vector<8x96xf32> to vector<8x32xf32>
    %50 = arith.mulf %48, %28 : vector<8x32xf32>
    %51 = arith.mulf %47, %46 : vector<8x32xf32>
    %52 = arith.addf %50, %51 : vector<8x32xf32>
    %53 = math.tanh %52 : vector<8x32xf32>
    %54 = arith.mulf %49, %53 : vector<8x32xf32>
    %55 = arith.index_cast %34 : i32 to index
    %c0_18 = arith.constant 0 : index
    %56 = vector.load %arg11[%55, %c0_18] : memref<72x32xf32, #tpu.memory_space<vmem>>, vector<8x32xf32>
    tpu.vector_store %arg11[%55, %c0_18], %54 {strides = array<i32>} : memref<72x32xf32, #tpu.memory_space<vmem>>, vector<8x32xf32>,
    %c2_i32 = arith.constant 2 : i32
    %c8_i32_19 = arith.constant 8 : i32
    %57 = arith.muli %c2_i32, %c8_i32_19 : i32
    %58 = tpu.assume_multiple %57, 8 : i32
    %59 = arith.index_cast %58 : i32 to index
    %c0_20 = arith.constant 0 : index
    %60 = vector.load %arg12[%59, %c0_20] : memref<72x128xf32, #tpu.memory_space<vmem>>, vector<8x128xf32>
    %cst_21 = arith.constant dense<0.000000e+00> : vector<8x128xf32>
    %61 = tpu.matmul %54, %1, %cst_21 {dimension_numbers = #tpu.dot_dimension_numbers<[1], [0], [0], [1], [0, 0, 1, 1], [], []>} : vector<8x32xf32>, vector<32x128xf32>, vector<8x128xf32> -> vector<8x128xf32>
    %62 = arith.addf %60, %61 : vector<8x128xf32>
    %63 = vector.extract_strided_slice %62 {offsets = [0, 0], sizes = [8, 96], strides = [1, 1]} : vector<8x128xf32> to vector<8x96xf32>
    %64 = arith.negf %63 : vector<8x96xf32>
    %65 = math.exp %64 : vector<8x96xf32>
    %cst_22 = arith.constant 1.000000e+00 : f32
    %66 = vector.broadcast %cst_22 : f32 to vector<8x96xf32>
    %67 = arith.addf %66, %65 : vector<8x96xf32>
    %68 = arith.divf %66, %67 : vector<8x96xf32>
    %69 = vector.extract_strided_slice %62 {offsets = [0, 96], sizes = [8, 32], strides = [1, 1]} : vector<8x128xf32> to vector<8x32xf32>
    %70 = math.tanh %69 : vector<8x32xf32>
    %71 = vector.extract_strided_slice %68 {offsets = [0, 0], sizes = [8, 32], strides = [1, 1]} : vector<8x96xf32> to vector<8x32xf32>
    %72 = vector.extract_strided_slice %68 {offsets = [0, 32], sizes = [8, 32], strides = [1, 1]} : vector<8x96xf32> to vector<8x32xf32>
    %73 = vector.extract_strided_slice %68 {offsets = [0, 64], sizes = [8, 32], strides = [1, 1]} : vector<8x96xf32> to vector<8x32xf32>
    %74 = arith.mulf %72, %52 : vector<8x32xf32>
    %75 = arith.mulf %71, %70 : vector<8x32xf32>
    %76 = arith.addf %74, %75 : vector<8x32xf32>
    %77 = math.tanh %76 : vector<8x32xf32>
    %78 = arith.mulf %73, %77 : vector<8x32xf32>
    %79 = arith.index_cast %58 : i32 to index
    %c0_23 = arith.constant 0 : index
    %80 = vector.load %arg11[%79, %c0_23] : memref<72x32xf32, #tpu.memory_space<vmem>>, vector<8x32xf32>
    tpu.vector_store %arg11[%79, %c0_23], %78 {strides = array<i32>} : memref<72x32xf32, #tpu.memory_space<vmem>>, vector<8x32xf32>,
    %c3_i32 = arith.constant 3 : i32
    %c8_i32_24 = arith.constant 8 : i32
    %81 = arith.muli %c3_i32, %c8_i32_24 : i32
    %82 = tpu.assume_multiple %81, 8 : i32
    %83 = arith.index_cast %82 : i32 to index
    %c0_25 = arith.constant 0 : index
    %84 = vector.load %arg12[%83, %c0_25] : memref<72x128xf32, #tpu.memory_space<vmem>>, vector<8x128xf32>
    %cst_26 = arith.constant dense<0.000000e+00> : vector<8x128xf32>
    %85 = tpu.matmul %78, %1, %cst_26 {dimension_numbers = #tpu.dot_dimension_numbers<[1], [0], [0], [1], [0, 0, 1, 1], [], []>} : vector<8x32xf32>, vector<32x128xf32>, vector<8x128xf32> -> vector<8x128xf32>
    %86 = arith.addf %84, %85 : vector<8x128xf32>
    %87 = vector.extract_strided_slice %86 {offsets = [0, 0], sizes = [8, 96], strides = [1, 1]} : vector<8x128xf32> to vector<8x96xf32>
    %88 = arith.negf %87 : vector<8x96xf32>
    %89 = math.exp %88 : vector<8x96xf32>
    %cst_27 = arith.constant 1.000000e+00 : f32
    %90 = vector.broadcast %cst_27 : f32 to vector<8x96xf32>
    %91 = arith.addf %90, %89 : vector<8x96xf32>
    %92 = arith.divf %90, %91 : vector<8x96xf32>
    %93 = vector.extract_strided_slice %86 {offsets = [0, 96], sizes = [8, 32], strides = [1, 1]} : vector<8x128xf32> to vector<8x32xf32>
    %94 = math.tanh %93 : vector<8x32xf32>
    %95 = vector.extract_strided_slice %92 {offsets = [0, 0], sizes = [8, 32], strides = [1, 1]} : vector<8x96xf32> to vector<8x32xf32>
    %96 = vector.extract_strided_slice %92 {offsets = [0, 32], sizes = [8, 32], strides = [1, 1]} : vector<8x96xf32> to vector<8x32xf32>
    %97 = vector.extract_strided_slice %92 {offsets = [0, 64], sizes = [8, 32], strides = [1, 1]} : vector<8x96xf32> to vector<8x32xf32>
    %98 = arith.mulf %96, %76 : vector<8x32xf32>
    %99 = arith.mulf %95, %94 : vector<8x32xf32>
    %100 = arith.addf %98, %99 : vector<8x32xf32>
    %101 = math.tanh %100 : vector<8x32xf32>
    %102 = arith.mulf %97, %101 : vector<8x32xf32>
    %103 = arith.index_cast %82 : i32 to index
    %c0_28 = arith.constant 0 : index
    %104 = vector.load %arg11[%103, %c0_28] : memref<72x32xf32, #tpu.memory_space<vmem>>, vector<8x32xf32>
    tpu.vector_store %arg11[%103, %c0_28], %102 {strides = array<i32>} : memref<72x32xf32, #tpu.memory_space<vmem>>, vector<8x32xf32>,
    %c4_i32 = arith.constant 4 : i32
    %c8_i32_29 = arith.constant 8 : i32
    %105 = arith.muli %c4_i32, %c8_i32_29 : i32
    %106 = tpu.assume_multiple %105, 8 : i32
    %107 = arith.index_cast %106 : i32 to index
    %c0_30 = arith.constant 0 : index
    %108 = vector.load %arg12[%107, %c0_30] : memref<72x128xf32, #tpu.memory_space<vmem>>, vector<8x128xf32>
    %cst_31 = arith.constant dense<0.000000e+00> : vector<8x128xf32>
    %109 = tpu.matmul %102, %1, %cst_31 {dimension_numbers = #tpu.dot_dimension_numbers<[1], [0], [0], [1], [0, 0, 1, 1], [], []>} : vector<8x32xf32>, vector<32x128xf32>, vector<8x128xf32> -> vector<8x128xf32>
    %110 = arith.addf %108, %109 : vector<8x128xf32>
    %111 = vector.extract_strided_slice %110 {offsets = [0, 0], sizes = [8, 96], strides = [1, 1]} : vector<8x128xf32> to vector<8x96xf32>
    %112 = arith.negf %111 : vector<8x96xf32>
    %113 = math.exp %112 : vector<8x96xf32>
    %cst_32 = arith.constant 1.000000e+00 : f32
    %114 = vector.broadcast %cst_32 : f32 to vector<8x96xf32>
    %115 = arith.addf %114, %113 : vector<8x96xf32>
    %116 = arith.divf %114, %115 : vector<8x96xf32>
    %117 = vector.extract_strided_slice %110 {offsets = [0, 96], sizes = [8, 32], strides = [1, 1]} : vector<8x128xf32> to vector<8x32xf32>
    %118 = math.tanh %117 : vector<8x32xf32>
    %119 = vector.extract_strided_slice %116 {offsets = [0, 0], sizes = [8, 32], strides = [1, 1]} : vector<8x96xf32> to vector<8x32xf32>
    %120 = vector.extract_strided_slice %116 {offsets = [0, 32], sizes = [8, 32], strides = [1, 1]} : vector<8x96xf32> to vector<8x32xf32>
    %121 = vector.extract_strided_slice %116 {offsets = [0, 64], sizes = [8, 32], strides = [1, 1]} : vector<8x96xf32> to vector<8x32xf32>
    %122 = arith.mulf %120, %100 : vector<8x32xf32>
    %123 = arith.mulf %119, %118 : vector<8x32xf32>
    %124 = arith.addf %122, %123 : vector<8x32xf32>
    %125 = math.tanh %124 : vector<8x32xf32>
    %126 = arith.mulf %121, %125 : vector<8x32xf32>
    %127 = arith.index_cast %106 : i32 to index
    %c0_33 = arith.constant 0 : index
    %128 = vector.load %arg11[%127, %c0_33] : memref<72x32xf32, #tpu.memory_space<vmem>>, vector<8x32xf32>
    tpu.vector_store %arg11[%127, %c0_33], %126 {strides = array<i32>} : memref<72x32xf32, #tpu.memory_space<vmem>>, vector<8x32xf32>,
    %c5_i32 = arith.constant 5 : i32
    %c8_i32_34 = arith.constant 8 : i32
    %129 = arith.muli %c5_i32, %c8_i32_34 : i32
    %130 = tpu.assume_multiple %129, 8 : i32
    %131 = arith.index_cast %130 : i32 to index
    %c0_35 = arith.constant 0 : index
    %132 = vector.load %arg12[%131, %c0_35] : memref<72x128xf32, #tpu.memory_space<vmem>>, vector<8x128xf32>
    %cst_36 = arith.constant dense<0.000000e+00> : vector<8x128xf32>
    %133 = tpu.matmul %126, %1, %cst_36 {dimension_numbers = #tpu.dot_dimension_numbers<[1], [0], [0], [1], [0, 0, 1, 1], [], []>} : vector<8x32xf32>, vector<32x128xf32>, vector<8x128xf32> -> vector<8x128xf32>
    %134 = arith.addf %132, %133 : vector<8x128xf32>
    %135 = vector.extract_strided_slice %134 {offsets = [0, 0], sizes = [8, 96], strides = [1, 1]} : vector<8x128xf32> to vector<8x96xf32>
    %136 = arith.negf %135 : vector<8x96xf32>
    %137 = math.exp %136 : vector<8x96xf32>
    %cst_37 = arith.constant 1.000000e+00 : f32
    %138 = vector.broadcast %cst_37 : f32 to vector<8x96xf32>
    %139 = arith.addf %138, %137 : vector<8x96xf32>
    %140 = arith.divf %138, %139 : vector<8x96xf32>
    %141 = vector.extract_strided_slice %134 {offsets = [0, 96], sizes = [8, 32], strides = [1, 1]} : vector<8x128xf32> to vector<8x32xf32>
    %142 = math.tanh %141 : vector<8x32xf32>
    %143 = vector.extract_strided_slice %140 {offsets = [0, 0], sizes = [8, 32], strides = [1, 1]} : vector<8x96xf32> to vector<8x32xf32>
    %144 = vector.extract_strided_slice %140 {offsets = [0, 32], sizes = [8, 32], strides = [1, 1]} : vector<8x96xf32> to vector<8x32xf32>
    %145 = vector.extract_strided_slice %140 {offsets = [0, 64], sizes = [8, 32], strides = [1, 1]} : vector<8x96xf32> to vector<8x32xf32>
    %146 = arith.mulf %144, %124 : vector<8x32xf32>
    %147 = arith.mulf %143, %142 : vector<8x32xf32>
    %148 = arith.addf %146, %147 : vector<8x32xf32>
    %149 = math.tanh %148 : vector<8x32xf32>
    %150 = arith.mulf %145, %149 : vector<8x32xf32>
    %151 = arith.index_cast %130 : i32 to index
    %c0_38 = arith.constant 0 : index
    %152 = vector.load %arg11[%151, %c0_38] : memref<72x32xf32, #tpu.memory_space<vmem>>, vector<8x32xf32>
    tpu.vector_store %arg11[%151, %c0_38], %150 {strides = array<i32>} : memref<72x32xf32, #tpu.memory_space<vmem>>, vector<8x32xf32>,
    %c6_i32 = arith.constant 6 : i32
    %c8_i32_39 = arith.constant 8 : i32
    %153 = arith.muli %c6_i32, %c8_i32_39 : i32
    %154 = tpu.assume_multiple %153, 8 : i32
    %155 = arith.index_cast %154 : i32 to index
    %c0_40 = arith.constant 0 : index
    %156 = vector.load %arg12[%155, %c0_40] : memref<72x128xf32, #tpu.memory_space<vmem>>, vector<8x128xf32>
    %cst_41 = arith.constant dense<0.000000e+00> : vector<8x128xf32>
    %157 = tpu.matmul %150, %1, %cst_41 {dimension_numbers = #tpu.dot_dimension_numbers<[1], [0], [0], [1], [0, 0, 1, 1], [], []>} : vector<8x32xf32>, vector<32x128xf32>, vector<8x128xf32> -> vector<8x128xf32>
    %158 = arith.addf %156, %157 : vector<8x128xf32>
    %159 = vector.extract_strided_slice %158 {offsets = [0, 0], sizes = [8, 96], strides = [1, 1]} : vector<8x128xf32> to vector<8x96xf32>
    %160 = arith.negf %159 : vector<8x96xf32>
    %161 = math.exp %160 : vector<8x96xf32>
    %cst_42 = arith.constant 1.000000e+00 : f32
    %162 = vector.broadcast %cst_42 : f32 to vector<8x96xf32>
    %163 = arith.addf %162, %161 : vector<8x96xf32>
    %164 = arith.divf %162, %163 : vector<8x96xf32>
    %165 = vector.extract_strided_slice %158 {offsets = [0, 96], sizes = [8, 32], strides = [1, 1]} : vector<8x128xf32> to vector<8x32xf32>
    %166 = math.tanh %165 : vector<8x32xf32>
    %167 = vector.extract_strided_slice %164 {offsets = [0, 0], sizes = [8, 32], strides = [1, 1]} : vector<8x96xf32> to vector<8x32xf32>
    %168 = vector.extract_strided_slice %164 {offsets = [0, 32], sizes = [8, 32], strides = [1, 1]} : vector<8x96xf32> to vector<8x32xf32>
    %169 = vector.extract_strided_slice %164 {offsets = [0, 64], sizes = [8, 32], strides = [1, 1]} : vector<8x96xf32> to vector<8x32xf32>
    %170 = arith.mulf %168, %148 : vector<8x32xf32>
    %171 = arith.mulf %167, %166 : vector<8x32xf32>
    %172 = arith.addf %170, %171 : vector<8x32xf32>
    %173 = math.tanh %172 : vector<8x32xf32>
    %174 = arith.mulf %169, %173 : vector<8x32xf32>
    %175 = arith.index_cast %154 : i32 to index
    %c0_43 = arith.constant 0 : index
    %176 = vector.load %arg11[%175, %c0_43] : memref<72x32xf32, #tpu.memory_space<vmem>>, vector<8x32xf32>
    tpu.vector_store %arg11[%175, %c0_43], %174 {strides = array<i32>} : memref<72x32xf32, #tpu.memory_space<vmem>>, vector<8x32xf32>,
    %c7_i32 = arith.constant 7 : i32
    %c8_i32_44 = arith.constant 8 : i32
    %177 = arith.muli %c7_i32, %c8_i32_44 : i32
    %178 = tpu.assume_multiple %177, 8 : i32
    %179 = arith.index_cast %178 : i32 to index
    %c0_45 = arith.constant 0 : index
    %180 = vector.load %arg12[%179, %c0_45] : memref<72x128xf32, #tpu.memory_space<vmem>>, vector<8x128xf32>
    %cst_46 = arith.constant dense<0.000000e+00> : vector<8x128xf32>
    %181 = tpu.matmul %174, %1, %cst_46 {dimension_numbers = #tpu.dot_dimension_numbers<[1], [0], [0], [1], [0, 0, 1, 1], [], []>} : vector<8x32xf32>, vector<32x128xf32>, vector<8x128xf32> -> vector<8x128xf32>
    %182 = arith.addf %180, %181 : vector<8x128xf32>
    %183 = vector.extract_strided_slice %182 {offsets = [0, 0], sizes = [8, 96], strides = [1, 1]} : vector<8x128xf32> to vector<8x96xf32>
    %184 = arith.negf %183 : vector<8x96xf32>
    %185 = math.exp %184 : vector<8x96xf32>
    %cst_47 = arith.constant 1.000000e+00 : f32
    %186 = vector.broadcast %cst_47 : f32 to vector<8x96xf32>
    %187 = arith.addf %186, %185 : vector<8x96xf32>
    %188 = arith.divf %186, %187 : vector<8x96xf32>
    %189 = vector.extract_strided_slice %182 {offsets = [0, 96], sizes = [8, 32], strides = [1, 1]} : vector<8x128xf32> to vector<8x32xf32>
    %190 = math.tanh %189 : vector<8x32xf32>
    %191 = vector.extract_strided_slice %188 {offsets = [0, 0], sizes = [8, 32], strides = [1, 1]} : vector<8x96xf32> to vector<8x32xf32>
    %192 = vector.extract_strided_slice %188 {offsets = [0, 32], sizes = [8, 32], strides = [1, 1]} : vector<8x96xf32> to vector<8x32xf32>
    %193 = vector.extract_strided_slice %188 {offsets = [0, 64], sizes = [8, 32], strides = [1, 1]} : vector<8x96xf32> to vector<8x32xf32>
    %194 = arith.mulf %192, %172 : vector<8x32xf32>
    %195 = arith.mulf %191, %190 : vector<8x32xf32>
    %196 = arith.addf %194, %195 : vector<8x32xf32>
    %197 = math.tanh %196 : vector<8x32xf32>
    %198 = arith.mulf %193, %197 : vector<8x32xf32>
    %199 = arith.index_cast %178 : i32 to index
    %c0_48 = arith.constant 0 : index
    %200 = vector.load %arg11[%199, %c0_48] : memref<72x32xf32, #tpu.memory_space<vmem>>, vector<8x32xf32>
    tpu.vector_store %arg11[%199, %c0_48], %198 {strides = array<i32>} : memref<72x32xf32, #tpu.memory_space<vmem>>, vector<8x32xf32>,
    %c8_i32_49 = arith.constant 8 : i32
    %c8_i32_50 = arith.constant 8 : i32
    %201 = arith.muli %c8_i32_49, %c8_i32_50 : i32
    %202 = tpu.assume_multiple %201, 8 : i32
    %203 = arith.index_cast %202 : i32 to index
    %c0_51 = arith.constant 0 : index
    %204 = vector.load %arg12[%203, %c0_51] : memref<72x128xf32, #tpu.memory_space<vmem>>, vector<8x128xf32>
    %cst_52 = arith.constant dense<0.000000e+00> : vector<8x128xf32>
    %205 = tpu.matmul %198, %1, %cst_52 {dimension_numbers = #tpu.dot_dimension_numbers<[1], [0], [0], [1], [0, 0, 1, 1], [], []>} : vector<8x32xf32>, vector<32x128xf32>, vector<8x128xf32> -> vector<8x128xf32>
    %206 = arith.addf %204, %205 : vector<8x128xf32>
    %207 = vector.extract_strided_slice %206 {offsets = [0, 0], sizes = [8, 96], strides = [1, 1]} : vector<8x128xf32> to vector<8x96xf32>
    %208 = arith.negf %207 : vector<8x96xf32>
    %209 = math.exp %208 : vector<8x96xf32>
    %cst_53 = arith.constant 1.000000e+00 : f32
    %210 = vector.broadcast %cst_53 : f32 to vector<8x96xf32>
    %211 = arith.addf %210, %209 : vector<8x96xf32>
    %212 = arith.divf %210, %211 : vector<8x96xf32>
    %213 = vector.extract_strided_slice %206 {offsets = [0, 96], sizes = [8, 32], strides = [1, 1]} : vector<8x128xf32> to vector<8x32xf32>
    %214 = math.tanh %213 : vector<8x32xf32>
    %215 = vector.extract_strided_slice %212 {offsets = [0, 0], sizes = [8, 32], strides = [1, 1]} : vector<8x96xf32> to vector<8x32xf32>
    %216 = vector.extract_strided_slice %212 {offsets = [0, 32], sizes = [8, 32], strides = [1, 1]} : vector<8x96xf32> to vector<8x32xf32>
    %217 = vector.extract_strided_slice %212 {offsets = [0, 64], sizes = [8, 32], strides = [1, 1]} : vector<8x96xf32> to vector<8x32xf32>
    %218 = arith.mulf %216, %196 : vector<8x32xf32>
    %219 = arith.mulf %215, %214 : vector<8x32xf32>
    %220 = arith.addf %218, %219 : vector<8x32xf32>
    %221 = math.tanh %220 : vector<8x32xf32>
    %222 = arith.mulf %217, %221 : vector<8x32xf32>
    %223 = arith.index_cast %202 : i32 to index
    %c0_54 = arith.constant 0 : index
    %224 = vector.load %arg11[%223, %c0_54] : memref<72x32xf32, #tpu.memory_space<vmem>>, vector<8x32xf32>
    tpu.vector_store %arg11[%223, %c0_54], %222 {strides = array<i32>} : memref<72x32xf32, #tpu.memory_space<vmem>>, vector<8x32xf32>,
    %c9_i32 = arith.constant 9 : i32
    %c0_55 = arith.constant 0 : index
    %c0_56 = arith.constant 0 : index
    %225 = vector.load %arg5[%c0_55, %c0_56] : memref<32x128xf32, #tpu.memory_space<vmem>>, vector<32x128xf32>
    %c0_57 = arith.constant 0 : index
    %c0_58 = arith.constant 0 : index
    %226 = vector.load %arg6[%c0_57, %c0_58] : memref<32x128xf32, #tpu.memory_space<vmem>>, vector<32x128xf32>
    %c0_59 = arith.constant 0 : index
    %c0_60 = arith.constant 0 : index
    %227 = vector.load %arg7[%c0_59, %c0_60] : memref<1x128xf32, #tpu.memory_space<vmem>>, vector<1x128xf32>
    %c0_61 = arith.constant 0 : index
    %c0_62 = arith.constant 0 : index
    %228 = vector.load %arg11[%c0_61, %c0_62] : memref<72x32xf32, #tpu.memory_space<vmem>>, vector<72x32xf32>
    %cst_63 = arith.constant dense<0.000000e+00> : vector<72x128xf32>
    %229 = tpu.matmul %228, %225, %cst_63 {dimension_numbers = #tpu.dot_dimension_numbers<[1], [0], [0], [1], [0, 0, 1, 1], [], []>} : vector<72x32xf32>, vector<32x128xf32>, vector<72x128xf32> -> vector<72x128xf32>
    %230 = vector.broadcast %227 : vector<1x128xf32> to vector<72x128xf32>
    %231 = arith.addf %229, %230 : vector<72x128xf32>
    %c0_64 = arith.constant 0 : index
    %c0_65 = arith.constant 0 : index
    %232 = vector.load %arg12[%c0_64, %c0_65] : memref<72x128xf32, #tpu.memory_space<vmem>>, vector<72x128xf32>
    tpu.vector_store %arg12[%c0_64, %c0_65], %231 {strides = array<i32>} : memref<72x128xf32, #tpu.memory_space<vmem>>, vector<72x128xf32>,
    %cst_66 = arith.constant 0.000000e+00 : f32
    %233 = vector.broadcast %cst_66 : f32 to vector<8x32xf32>
    %c0_i32_67 = arith.constant 0 : i32
    %c8_i32_68 = arith.constant 8 : i32
    %234 = arith.muli %c0_i32_67, %c8_i32_68 : i32
    %235 = tpu.assume_multiple %234, 8 : i32
    %236 = arith.index_cast %235 : i32 to index
    %c0_69 = arith.constant 0 : index
    %237 = vector.load %arg12[%236, %c0_69] : memref<72x128xf32, #tpu.memory_space<vmem>>, vector<8x128xf32>
    %cst_70 = arith.constant dense<0.000000e+00> : vector<8x128xf32>
    %238 = tpu.matmul %233, %226, %cst_70 {dimension_numbers = #tpu.dot_dimension_numbers<[1], [0], [0], [1], [0, 0, 1, 1], [], []>} : vector<8x32xf32>, vector<32x128xf32>, vector<8x128xf32> -> vector<8x128xf32>
    %239 = arith.addf %237, %238 : vector<8x128xf32>
    %240 = vector.extract_strided_slice %239 {offsets = [0, 0], sizes = [8, 96], strides = [1, 1]} : vector<8x128xf32> to vector<8x96xf32>
    %241 = arith.negf %240 : vector<8x96xf32>
    %242 = math.exp %241 : vector<8x96xf32>
    %cst_71 = arith.constant 1.000000e+00 : f32
    %243 = vector.broadcast %cst_71 : f32 to vector<8x96xf32>
    %244 = arith.addf %243, %242 : vector<8x96xf32>
    %245 = arith.divf %243, %244 : vector<8x96xf32>
    %246 = vector.extract_strided_slice %239 {offsets = [0, 96], sizes = [8, 32], strides = [1, 1]} : vector<8x128xf32> to vector<8x32xf32>
    %247 = math.tanh %246 : vector<8x32xf32>
    %248 = vector.extract_strided_slice %245 {offsets = [0, 0], sizes = [8, 32], strides = [1, 1]} : vector<8x96xf32> to vector<8x32xf32>
    %249 = vector.extract_strided_slice %245 {offsets = [0, 32], sizes = [8, 32], strides = [1, 1]} : vector<8x96xf32> to vector<8x32xf32>
    %250 = vector.extract_strided_slice %245 {offsets = [0, 64], sizes = [8, 32], strides = [1, 1]} : vector<8x96xf32> to vector<8x32xf32>
    %251 = arith.mulf %249, %233 : vector<8x32xf32>
    %252 = arith.mulf %248, %247 : vector<8x32xf32>
    %253 = arith.addf %251, %252 : vector<8x32xf32>
    %254 = math.tanh %253 : vector<8x32xf32>
    %255 = arith.mulf %250, %254 : vector<8x32xf32>
    %256 = arith.index_cast %235 : i32 to index
    %c0_72 = arith.constant 0 : index
    %257 = vector.load %arg11[%256, %c0_72] : memref<72x32xf32, #tpu.memory_space<vmem>>, vector<8x32xf32>
    tpu.vector_store %arg11[%256, %c0_72], %255 {strides = array<i32>} : memref<72x32xf32, #tpu.memory_space<vmem>>, vector<8x32xf32>,
    %c1_i32_73 = arith.constant 1 : i32
    %c8_i32_74 = arith.constant 8 : i32
    %258 = arith.muli %c1_i32_73, %c8_i32_74 : i32
    %259 = tpu.assume_multiple %258, 8 : i32
    %260 = arith.index_cast %259 : i32 to index
    %c0_75 = arith.constant 0 : index
    %261 = vector.load %arg12[%260, %c0_75] : memref<72x128xf32, #tpu.memory_space<vmem>>, vector<8x128xf32>
    %cst_76 = arith.constant dense<0.000000e+00> : vector<8x128xf32>
    %262 = tpu.matmul %255, %226, %cst_76 {dimension_numbers = #tpu.dot_dimension_numbers<[1], [0], [0], [1], [0, 0, 1, 1], [], []>} : vector<8x32xf32>, vector<32x128xf32>, vector<8x128xf32> -> vector<8x128xf32>
    %263 = arith.addf %261, %262 : vector<8x128xf32>
    %264 = vector.extract_strided_slice %263 {offsets = [0, 0], sizes = [8, 96], strides = [1, 1]} : vector<8x128xf32> to vector<8x96xf32>
    %265 = arith.negf %264 : vector<8x96xf32>
    %266 = math.exp %265 : vector<8x96xf32>
    %cst_77 = arith.constant 1.000000e+00 : f32
    %267 = vector.broadcast %cst_77 : f32 to vector<8x96xf32>
    %268 = arith.addf %267, %266 : vector<8x96xf32>
    %269 = arith.divf %267, %268 : vector<8x96xf32>
    %270 = vector.extract_strided_slice %263 {offsets = [0, 96], sizes = [8, 32], strides = [1, 1]} : vector<8x128xf32> to vector<8x32xf32>
    %271 = math.tanh %270 : vector<8x32xf32>
    %272 = vector.extract_strided_slice %269 {offsets = [0, 0], sizes = [8, 32], strides = [1, 1]} : vector<8x96xf32> to vector<8x32xf32>
    %273 = vector.extract_strided_slice %269 {offsets = [0, 32], sizes = [8, 32], strides = [1, 1]} : vector<8x96xf32> to vector<8x32xf32>
    %274 = vector.extract_strided_slice %269 {offsets = [0, 64], sizes = [8, 32], strides = [1, 1]} : vector<8x96xf32> to vector<8x32xf32>
    %275 = arith.mulf %273, %253 : vector<8x32xf32>
    %276 = arith.mulf %272, %271 : vector<8x32xf32>
    %277 = arith.addf %275, %276 : vector<8x32xf32>
    %278 = math.tanh %277 : vector<8x32xf32>
    %279 = arith.mulf %274, %278 : vector<8x32xf32>
    %280 = arith.index_cast %259 : i32 to index
    %c0_78 = arith.constant 0 : index
    %281 = vector.load %arg11[%280, %c0_78] : memref<72x32xf32, #tpu.memory_space<vmem>>, vector<8x32xf32>
    tpu.vector_store %arg11[%280, %c0_78], %279 {strides = array<i32>} : memref<72x32xf32, #tpu.memory_space<vmem>>, vector<8x32xf32>,
    %c2_i32_79 = arith.constant 2 : i32
    %c8_i32_80 = arith.constant 8 : i32
    %282 = arith.muli %c2_i32_79, %c8_i32_80 : i32
    %283 = tpu.assume_multiple %282, 8 : i32
    %284 = arith.index_cast %283 : i32 to index
    %c0_81 = arith.constant 0 : index
    %285 = vector.load %arg12[%284, %c0_81] : memref<72x128xf32, #tpu.memory_space<vmem>>, vector<8x128xf32>
    %cst_82 = arith.constant dense<0.000000e+00> : vector<8x128xf32>
    %286 = tpu.matmul %279, %226, %cst_82 {dimension_numbers = #tpu.dot_dimension_numbers<[1], [0], [0], [1], [0, 0, 1, 1], [], []>} : vector<8x32xf32>, vector<32x128xf32>, vector<8x128xf32> -> vector<8x128xf32>
    %287 = arith.addf %285, %286 : vector<8x128xf32>
    %288 = vector.extract_strided_slice %287 {offsets = [0, 0], sizes = [8, 96], strides = [1, 1]} : vector<8x128xf32> to vector<8x96xf32>
    %289 = arith.negf %288 : vector<8x96xf32>
    %290 = math.exp %289 : vector<8x96xf32>
    %cst_83 = arith.constant 1.000000e+00 : f32
    %291 = vector.broadcast %cst_83 : f32 to vector<8x96xf32>
    %292 = arith.addf %291, %290 : vector<8x96xf32>
    %293 = arith.divf %291, %292 : vector<8x96xf32>
    %294 = vector.extract_strided_slice %287 {offsets = [0, 96], sizes = [8, 32], strides = [1, 1]} : vector<8x128xf32> to vector<8x32xf32>
    %295 = math.tanh %294 : vector<8x32xf32>
    %296 = vector.extract_strided_slice %293 {offsets = [0, 0], sizes = [8, 32], strides = [1, 1]} : vector<8x96xf32> to vector<8x32xf32>
    %297 = vector.extract_strided_slice %293 {offsets = [0, 32], sizes = [8, 32], strides = [1, 1]} : vector<8x96xf32> to vector<8x32xf32>
    %298 = vector.extract_strided_slice %293 {offsets = [0, 64], sizes = [8, 32], strides = [1, 1]} : vector<8x96xf32> to vector<8x32xf32>
    %299 = arith.mulf %297, %277 : vector<8x32xf32>
    %300 = arith.mulf %296, %295 : vector<8x32xf32>
    %301 = arith.addf %299, %300 : vector<8x32xf32>
    %302 = math.tanh %301 : vector<8x32xf32>
    %303 = arith.mulf %298, %302 : vector<8x32xf32>
    %304 = arith.index_cast %283 : i32 to index
    %c0_84 = arith.constant 0 : index
    %305 = vector.load %arg11[%304, %c0_84] : memref<72x32xf32, #tpu.memory_space<vmem>>, vector<8x32xf32>
    tpu.vector_store %arg11[%304, %c0_84], %303 {strides = array<i32>} : memref<72x32xf32, #tpu.memory_space<vmem>>, vector<8x32xf32>,
    %c3_i32_85 = arith.constant 3 : i32
    %c8_i32_86 = arith.constant 8 : i32
    %306 = arith.muli %c3_i32_85, %c8_i32_86 : i32
    %307 = tpu.assume_multiple %306, 8 : i32
    %308 = arith.index_cast %307 : i32 to index
    %c0_87 = arith.constant 0 : index
    %309 = vector.load %arg12[%308, %c0_87] : memref<72x128xf32, #tpu.memory_space<vmem>>, vector<8x128xf32>
    %cst_88 = arith.constant dense<0.000000e+00> : vector<8x128xf32>
    %310 = tpu.matmul %303, %226, %cst_88 {dimension_numbers = #tpu.dot_dimension_numbers<[1], [0], [0], [1], [0, 0, 1, 1], [], []>} : vector<8x32xf32>, vector<32x128xf32>, vector<8x128xf32> -> vector<8x128xf32>
    %311 = arith.addf %309, %310 : vector<8x128xf32>
    %312 = vector.extract_strided_slice %311 {offsets = [0, 0], sizes = [8, 96], strides = [1, 1]} : vector<8x128xf32> to vector<8x96xf32>
    %313 = arith.negf %312 : vector<8x96xf32>
    %314 = math.exp %313 : vector<8x96xf32>
    %cst_89 = arith.constant 1.000000e+00 : f32
    %315 = vector.broadcast %cst_89 : f32 to vector<8x96xf32>
    %316 = arith.addf %315, %314 : vector<8x96xf32>
    %317 = arith.divf %315, %316 : vector<8x96xf32>
    %318 = vector.extract_strided_slice %311 {offsets = [0, 96], sizes = [8, 32], strides = [1, 1]} : vector<8x128xf32> to vector<8x32xf32>
    %319 = math.tanh %318 : vector<8x32xf32>
    %320 = vector.extract_strided_slice %317 {offsets = [0, 0], sizes = [8, 32], strides = [1, 1]} : vector<8x96xf32> to vector<8x32xf32>
    %321 = vector.extract_strided_slice %317 {offsets = [0, 32], sizes = [8, 32], strides = [1, 1]} : vector<8x96xf32> to vector<8x32xf32>
    %322 = vector.extract_strided_slice %317 {offsets = [0, 64], sizes = [8, 32], strides = [1, 1]} : vector<8x96xf32> to vector<8x32xf32>
    %323 = arith.mulf %321, %301 : vector<8x32xf32>
    %324 = arith.mulf %320, %319 : vector<8x32xf32>
    %325 = arith.addf %323, %324 : vector<8x32xf32>
    %326 = math.tanh %325 : vector<8x32xf32>
    %327 = arith.mulf %322, %326 : vector<8x32xf32>
    %328 = arith.index_cast %307 : i32 to index
    %c0_90 = arith.constant 0 : index
    %329 = vector.load %arg11[%328, %c0_90] : memref<72x32xf32, #tpu.memory_space<vmem>>, vector<8x32xf32>
    tpu.vector_store %arg11[%328, %c0_90], %327 {strides = array<i32>} : memref<72x32xf32, #tpu.memory_space<vmem>>, vector<8x32xf32>,
    %c4_i32_91 = arith.constant 4 : i32
    %c8_i32_92 = arith.constant 8 : i32
    %330 = arith.muli %c4_i32_91, %c8_i32_92 : i32
    %331 = tpu.assume_multiple %330, 8 : i32
    %332 = arith.index_cast %331 : i32 to index
    %c0_93 = arith.constant 0 : index
    %333 = vector.load %arg12[%332, %c0_93] : memref<72x128xf32, #tpu.memory_space<vmem>>, vector<8x128xf32>
    %cst_94 = arith.constant dense<0.000000e+00> : vector<8x128xf32>
    %334 = tpu.matmul %327, %226, %cst_94 {dimension_numbers = #tpu.dot_dimension_numbers<[1], [0], [0], [1], [0, 0, 1, 1], [], []>} : vector<8x32xf32>, vector<32x128xf32>, vector<8x128xf32> -> vector<8x128xf32>
    %335 = arith.addf %333, %334 : vector<8x128xf32>
    %336 = vector.extract_strided_slice %335 {offsets = [0, 0], sizes = [8, 96], strides = [1, 1]} : vector<8x128xf32> to vector<8x96xf32>
    %337 = arith.negf %336 : vector<8x96xf32>
    %338 = math.exp %337 : vector<8x96xf32>
    %cst_95 = arith.constant 1.000000e+00 : f32
    %339 = vector.broadcast %cst_95 : f32 to vector<8x96xf32>
    %340 = arith.addf %339, %338 : vector<8x96xf32>
    %341 = arith.divf %339, %340 : vector<8x96xf32>
    %342 = vector.extract_strided_slice %335 {offsets = [0, 96], sizes = [8, 32], strides = [1, 1]} : vector<8x128xf32> to vector<8x32xf32>
    %343 = math.tanh %342 : vector<8x32xf32>
    %344 = vector.extract_strided_slice %341 {offsets = [0, 0], sizes = [8, 32], strides = [1, 1]} : vector<8x96xf32> to vector<8x32xf32>
    %345 = vector.extract_strided_slice %341 {offsets = [0, 32], sizes = [8, 32], strides = [1, 1]} : vector<8x96xf32> to vector<8x32xf32>
    %346 = vector.extract_strided_slice %341 {offsets = [0, 64], sizes = [8, 32], strides = [1, 1]} : vector<8x96xf32> to vector<8x32xf32>
    %347 = arith.mulf %345, %325 : vector<8x32xf32>
    %348 = arith.mulf %344, %343 : vector<8x32xf32>
    %349 = arith.addf %347, %348 : vector<8x32xf32>
    %350 = math.tanh %349 : vector<8x32xf32>
    %351 = arith.mulf %346, %350 : vector<8x32xf32>
    %352 = arith.index_cast %331 : i32 to index
    %c0_96 = arith.constant 0 : index
    %353 = vector.load %arg11[%352, %c0_96] : memref<72x32xf32, #tpu.memory_space<vmem>>, vector<8x32xf32>
    tpu.vector_store %arg11[%352, %c0_96], %351 {strides = array<i32>} : memref<72x32xf32, #tpu.memory_space<vmem>>, vector<8x32xf32>,
    %c5_i32_97 = arith.constant 5 : i32
    %c8_i32_98 = arith.constant 8 : i32
    %354 = arith.muli %c5_i32_97, %c8_i32_98 : i32
    %355 = tpu.assume_multiple %354, 8 : i32
    %356 = arith.index_cast %355 : i32 to index
    %c0_99 = arith.constant 0 : index
    %357 = vector.load %arg12[%356, %c0_99] : memref<72x128xf32, #tpu.memory_space<vmem>>, vector<8x128xf32>
    %cst_100 = arith.constant dense<0.000000e+00> : vector<8x128xf32>
    %358 = tpu.matmul %351, %226, %cst_100 {dimension_numbers = #tpu.dot_dimension_numbers<[1], [0], [0], [1], [0, 0, 1, 1], [], []>} : vector<8x32xf32>, vector<32x128xf32>, vector<8x128xf32> -> vector<8x128xf32>
    %359 = arith.addf %357, %358 : vector<8x128xf32>
    %360 = vector.extract_strided_slice %359 {offsets = [0, 0], sizes = [8, 96], strides = [1, 1]} : vector<8x128xf32> to vector<8x96xf32>
    %361 = arith.negf %360 : vector<8x96xf32>
    %362 = math.exp %361 : vector<8x96xf32>
    %cst_101 = arith.constant 1.000000e+00 : f32
    %363 = vector.broadcast %cst_101 : f32 to vector<8x96xf32>
    %364 = arith.addf %363, %362 : vector<8x96xf32>
    %365 = arith.divf %363, %364 : vector<8x96xf32>
    %366 = vector.extract_strided_slice %359 {offsets = [0, 96], sizes = [8, 32], strides = [1, 1]} : vector<8x128xf32> to vector<8x32xf32>
    %367 = math.tanh %366 : vector<8x32xf32>
    %368 = vector.extract_strided_slice %365 {offsets = [0, 0], sizes = [8, 32], strides = [1, 1]} : vector<8x96xf32> to vector<8x32xf32>
    %369 = vector.extract_strided_slice %365 {offsets = [0, 32], sizes = [8, 32], strides = [1, 1]} : vector<8x96xf32> to vector<8x32xf32>
    %370 = vector.extract_strided_slice %365 {offsets = [0, 64], sizes = [8, 32], strides = [1, 1]} : vector<8x96xf32> to vector<8x32xf32>
    %371 = arith.mulf %369, %349 : vector<8x32xf32>
    %372 = arith.mulf %368, %367 : vector<8x32xf32>
    %373 = arith.addf %371, %372 : vector<8x32xf32>
    %374 = math.tanh %373 : vector<8x32xf32>
    %375 = arith.mulf %370, %374 : vector<8x32xf32>
    %376 = arith.index_cast %355 : i32 to index
    %c0_102 = arith.constant 0 : index
    %377 = vector.load %arg11[%376, %c0_102] : memref<72x32xf32, #tpu.memory_space<vmem>>, vector<8x32xf32>
    tpu.vector_store %arg11[%376, %c0_102], %375 {strides = array<i32>} : memref<72x32xf32, #tpu.memory_space<vmem>>, vector<8x32xf32>,
    %c6_i32_103 = arith.constant 6 : i32
    %c8_i32_104 = arith.constant 8 : i32
    %378 = arith.muli %c6_i32_103, %c8_i32_104 : i32
    %379 = tpu.assume_multiple %378, 8 : i32
    %380 = arith.index_cast %379 : i32 to index
    %c0_105 = arith.constant 0 : index
    %381 = vector.load %arg12[%380, %c0_105] : memref<72x128xf32, #tpu.memory_space<vmem>>, vector<8x128xf32>
    %cst_106 = arith.constant dense<0.000000e+00> : vector<8x128xf32>
    %382 = tpu.matmul %375, %226, %cst_106 {dimension_numbers = #tpu.dot_dimension_numbers<[1], [0], [0], [1], [0, 0, 1, 1], [], []>} : vector<8x32xf32>, vector<32x128xf32>, vector<8x128xf32> -> vector<8x128xf32>
    %383 = arith.addf %381, %382 : vector<8x128xf32>
    %384 = vector.extract_strided_slice %383 {offsets = [0, 0], sizes = [8, 96], strides = [1, 1]} : vector<8x128xf32> to vector<8x96xf32>
    %385 = arith.negf %384 : vector<8x96xf32>
    %386 = math.exp %385 : vector<8x96xf32>
    %cst_107 = arith.constant 1.000000e+00 : f32
    %387 = vector.broadcast %cst_107 : f32 to vector<8x96xf32>
    %388 = arith.addf %387, %386 : vector<8x96xf32>
    %389 = arith.divf %387, %388 : vector<8x96xf32>
    %390 = vector.extract_strided_slice %383 {offsets = [0, 96], sizes = [8, 32], strides = [1, 1]} : vector<8x128xf32> to vector<8x32xf32>
    %391 = math.tanh %390 : vector<8x32xf32>
    %392 = vector.extract_strided_slice %389 {offsets = [0, 0], sizes = [8, 32], strides = [1, 1]} : vector<8x96xf32> to vector<8x32xf32>
    %393 = vector.extract_strided_slice %389 {offsets = [0, 32], sizes = [8, 32], strides = [1, 1]} : vector<8x96xf32> to vector<8x32xf32>
    %394 = vector.extract_strided_slice %389 {offsets = [0, 64], sizes = [8, 32], strides = [1, 1]} : vector<8x96xf32> to vector<8x32xf32>
    %395 = arith.mulf %393, %373 : vector<8x32xf32>
    %396 = arith.mulf %392, %391 : vector<8x32xf32>
    %397 = arith.addf %395, %396 : vector<8x32xf32>
    %398 = math.tanh %397 : vector<8x32xf32>
    %399 = arith.mulf %394, %398 : vector<8x32xf32>
    %400 = arith.index_cast %379 : i32 to index
    %c0_108 = arith.constant 0 : index
    %401 = vector.load %arg11[%400, %c0_108] : memref<72x32xf32, #tpu.memory_space<vmem>>, vector<8x32xf32>
    tpu.vector_store %arg11[%400, %c0_108], %399 {strides = array<i32>} : memref<72x32xf32, #tpu.memory_space<vmem>>, vector<8x32xf32>,
    %c7_i32_109 = arith.constant 7 : i32
    %c8_i32_110 = arith.constant 8 : i32
    %402 = arith.muli %c7_i32_109, %c8_i32_110 : i32
    %403 = tpu.assume_multiple %402, 8 : i32
    %404 = arith.index_cast %403 : i32 to index
    %c0_111 = arith.constant 0 : index
    %405 = vector.load %arg12[%404, %c0_111] : memref<72x128xf32, #tpu.memory_space<vmem>>, vector<8x128xf32>
    %cst_112 = arith.constant dense<0.000000e+00> : vector<8x128xf32>
    %406 = tpu.matmul %399, %226, %cst_112 {dimension_numbers = #tpu.dot_dimension_numbers<[1], [0], [0], [1], [0, 0, 1, 1], [], []>} : vector<8x32xf32>, vector<32x128xf32>, vector<8x128xf32> -> vector<8x128xf32>
    %407 = arith.addf %405, %406 : vector<8x128xf32>
    %408 = vector.extract_strided_slice %407 {offsets = [0, 0], sizes = [8, 96], strides = [1, 1]} : vector<8x128xf32> to vector<8x96xf32>
    %409 = arith.negf %408 : vector<8x96xf32>
    %410 = math.exp %409 : vector<8x96xf32>
    %cst_113 = arith.constant 1.000000e+00 : f32
    %411 = vector.broadcast %cst_113 : f32 to vector<8x96xf32>
    %412 = arith.addf %411, %410 : vector<8x96xf32>
    %413 = arith.divf %411, %412 : vector<8x96xf32>
    %414 = vector.extract_strided_slice %407 {offsets = [0, 96], sizes = [8, 32], strides = [1, 1]} : vector<8x128xf32> to vector<8x32xf32>
    %415 = math.tanh %414 : vector<8x32xf32>
    %416 = vector.extract_strided_slice %413 {offsets = [0, 0], sizes = [8, 32], strides = [1, 1]} : vector<8x96xf32> to vector<8x32xf32>
    %417 = vector.extract_strided_slice %413 {offsets = [0, 32], sizes = [8, 32], strides = [1, 1]} : vector<8x96xf32> to vector<8x32xf32>
    %418 = vector.extract_strided_slice %413 {offsets = [0, 64], sizes = [8, 32], strides = [1, 1]} : vector<8x96xf32> to vector<8x32xf32>
    %419 = arith.mulf %417, %397 : vector<8x32xf32>
    %420 = arith.mulf %416, %415 : vector<8x32xf32>
    %421 = arith.addf %419, %420 : vector<8x32xf32>
    %422 = math.tanh %421 : vector<8x32xf32>
    %423 = arith.mulf %418, %422 : vector<8x32xf32>
    %424 = arith.index_cast %403 : i32 to index
    %c0_114 = arith.constant 0 : index
    %425 = vector.load %arg11[%424, %c0_114] : memref<72x32xf32, #tpu.memory_space<vmem>>, vector<8x32xf32>
    tpu.vector_store %arg11[%424, %c0_114], %423 {strides = array<i32>} : memref<72x32xf32, #tpu.memory_space<vmem>>, vector<8x32xf32>,
    %c8_i32_115 = arith.constant 8 : i32
    %c8_i32_116 = arith.constant 8 : i32
    %426 = arith.muli %c8_i32_115, %c8_i32_116 : i32
    %427 = tpu.assume_multiple %426, 8 : i32
    %428 = arith.index_cast %427 : i32 to index
    %c0_117 = arith.constant 0 : index
    %429 = vector.load %arg12[%428, %c0_117] : memref<72x128xf32, #tpu.memory_space<vmem>>, vector<8x128xf32>
    %cst_118 = arith.constant dense<0.000000e+00> : vector<8x128xf32>
    %430 = tpu.matmul %423, %226, %cst_118 {dimension_numbers = #tpu.dot_dimension_numbers<[1], [0], [0], [1], [0, 0, 1, 1], [], []>} : vector<8x32xf32>, vector<32x128xf32>, vector<8x128xf32> -> vector<8x128xf32>
    %431 = arith.addf %429, %430 : vector<8x128xf32>
    %432 = vector.extract_strided_slice %431 {offsets = [0, 0], sizes = [8, 96], strides = [1, 1]} : vector<8x128xf32> to vector<8x96xf32>
    %433 = arith.negf %432 : vector<8x96xf32>
    %434 = math.exp %433 : vector<8x96xf32>
    %cst_119 = arith.constant 1.000000e+00 : f32
    %435 = vector.broadcast %cst_119 : f32 to vector<8x96xf32>
    %436 = arith.addf %435, %434 : vector<8x96xf32>
    %437 = arith.divf %435, %436 : vector<8x96xf32>
    %438 = vector.extract_strided_slice %431 {offsets = [0, 96], sizes = [8, 32], strides = [1, 1]} : vector<8x128xf32> to vector<8x32xf32>
    %439 = math.tanh %438 : vector<8x32xf32>
    %440 = vector.extract_strided_slice %437 {offsets = [0, 0], sizes = [8, 32], strides = [1, 1]} : vector<8x96xf32> to vector<8x32xf32>
    %441 = vector.extract_strided_slice %437 {offsets = [0, 32], sizes = [8, 32], strides = [1, 1]} : vector<8x96xf32> to vector<8x32xf32>
    %442 = vector.extract_strided_slice %437 {offsets = [0, 64], sizes = [8, 32], strides = [1, 1]} : vector<8x96xf32> to vector<8x32xf32>
    %443 = arith.mulf %441, %421 : vector<8x32xf32>
    %444 = arith.mulf %440, %439 : vector<8x32xf32>
    %445 = arith.addf %443, %444 : vector<8x32xf32>
    %446 = math.tanh %445 : vector<8x32xf32>
    %447 = arith.mulf %442, %446 : vector<8x32xf32>
    %448 = arith.index_cast %427 : i32 to index
    %c0_120 = arith.constant 0 : index
    %449 = vector.load %arg11[%448, %c0_120] : memref<72x32xf32, #tpu.memory_space<vmem>>, vector<8x32xf32>
    tpu.vector_store %arg11[%448, %c0_120], %447 {strides = array<i32>} : memref<72x32xf32, #tpu.memory_space<vmem>>, vector<8x32xf32>,
    %c9_i32_121 = arith.constant 9 : i32
    %c0_122 = arith.constant 0 : index
    %c0_123 = arith.constant 0 : index
    %450 = vector.load %arg11[%c0_122, %c0_123] : memref<72x32xf32, #tpu.memory_space<vmem>>, vector<72x32xf32>
    %c0_124 = arith.constant 0 : index
    %c0_125 = arith.constant 0 : index
    %451 = vector.load %arg8[%c0_124, %c0_125] : memref<32x128xf32, #tpu.memory_space<vmem>>, vector<32x128xf32>
    %cst_126 = arith.constant dense<0.000000e+00> : vector<72x128xf32>
    %452 = tpu.matmul %450, %451, %cst_126 {dimension_numbers = #tpu.dot_dimension_numbers<[1], [0], [0], [1], [0, 0, 1, 1], [], []>} : vector<72x32xf32>, vector<32x128xf32>, vector<72x128xf32> -> vector<72x128xf32>
    %c0_127 = arith.constant 0 : index
    %c0_128 = arith.constant 0 : index
    %453 = vector.load %arg9[%c0_127, %c0_128] : memref<1x128xf32, #tpu.memory_space<vmem>>, vector<1x128xf32>
    %454 = vector.broadcast %453 : vector<1x128xf32> to vector<72x128xf32>
    %455 = arith.addf %452, %454 : vector<72x128xf32>
    %c0_129 = arith.constant 0 : index
    %c0_130 = arith.constant 0 : index
    %456 = vector.load %arg10[%c0_129, %c0_130] : memref<72x128xf32, #tpu.memory_space<vmem>>, vector<72x128xf32>
    tpu.vector_store %arg10[%c0_129, %c0_130], %455 {strides = array<i32>} : memref<72x128xf32, #tpu.memory_space<vmem>>, vector<72x128xf32>,
    return
  }
  func.func @transform_0(%arg0: i32) -> (i32, i32) {
    %c0_i32 = arith.constant 0 : i32
    %c0_i32_0 = arith.constant 0 : i32
    %c0_i32_1 = arith.constant 0 : i32
    return %c0_i32, %c0_i32_0 : i32, i32
  }
  func.func @transform_1(%arg0: i32) -> (i32, i32) {
    %c0_i32 = arith.constant 0 : i32
    %c0_i32_0 = arith.constant 0 : i32
    %c0_i32_1 = arith.constant 0 : i32
    return %c0_i32, %c0_i32_0 : i32, i32
  }
  func.func @transform_2(%arg0: i32) -> (i32, i32) {
    %c0_i32 = arith.constant 0 : i32
    %c0_i32_0 = arith.constant 0 : i32
    %c0_i32_1 = arith.constant 0 : i32
    return %c0_i32, %c0_i32_0 : i32, i32
  }
  func.func @transform_3(%arg0: i32) -> (i32, i32) {
    %c0_i32 = arith.constant 0 : i32
    %c0_i32_0 = arith.constant 0 : i32
    %c0_i32_1 = arith.constant 0 : i32
    return %c0_i32, %c0_i32_0 : i32, i32
  }
  func.func @transform_4(%arg0: i32) -> (i32, i32) {
    %c0_i32 = arith.constant 0 : i32
    %c0_i32_0 = arith.constant 0 : i32
    %c0_i32_1 = arith.constant 0 : i32
    return %c0_i32, %c0_i32_0 : i32, i32
  }
  func.func @transform_5(%arg0: i32) -> (i32, i32) {
    %c0_i32 = arith.constant 0 : i32
    %c0_i32_0 = arith.constant 0 : i32
    %c0_i32_1 = arith.constant 0 : i32
    return %c0_i32, %c0_i32_0 : i32, i32
  }
  func.func @transform_6(%arg0: i32) -> (i32, i32) {
    %c0_i32 = arith.constant 0 : i32
    %c0_i32_0 = arith.constant 0 : i32
    %c0_i32_1 = arith.constant 0 : i32
    return %c0_i32, %c0_i32_0 : i32, i32
  }
  func.func @transform_7(%arg0: i32) -> (i32, i32) {
    %c0_i32 = arith.constant 0 : i32
    %c0_i32_0 = arith.constant 0 : i32
    %c0_i32_1 = arith.constant 0 : i32
    return %c0_i32, %c0_i32_0 : i32, i32
  }
  func.func @transform_8(%arg0: i32) -> (i32, i32) {
    %c0_i32 = arith.constant 0 : i32
    %c0_i32_0 = arith.constant 0 : i32
    %c0_i32_1 = arith.constant 0 : i32
    return %c0_i32, %c0_i32_0 : i32, i32
  }
  func.func @transform_9(%arg0: i32) -> (i32, i32) {
    %c0_i32 = arith.constant 0 : i32
    %c0_i32_0 = arith.constant 0 : i32
    %c0_i32_1 = arith.constant 0 : i32
    return %c0_i32, %c0_i32_0 : i32, i32
  }
}

</mosaic_0001>

<llo_original>
// kernel: tpu_custom_call.1
$region0: #{tpu_custom_call.1}
  #allocation0 [shape = 'u32[]', space=smem, size = 0x4, offset = 0x4, fixed_abs, tag = 'smem constant byte address 0x4 - core index']
  #allocation1 [shape = 'u32[144,128]{1,0:T(1,128)}', space=vmem, size = 0x12000, scoped, tag = 'internal scratch']
  #allocation2 [shape = 'f32[72,32]{1,0:T(8,128)}', space=vmem, size = 0x9000, scoped, tag = 'scratch operand']
  #allocation3 [shape = 'f32[72,128]{1,0:T(8,128)}', space=vmem, size = 0x9000, scoped, tag = 'scratch operand']
  %s0 = inlined_call_operand.vmem [shape: f32[72,32], index: 0, kind: input, shape index: {}]
  %s1 = inlined_call_operand.vmem [shape: f32[32,128], index: 1, kind: input, shape index: {}]
  %s2 = inlined_call_operand.vmem [shape: f32[32,128], index: 2, kind: input, shape index: {}]
  %s3 = inlined_call_operand.vmem [shape: f32[1,128], index: 3, kind: input, shape index: {}]
  %s4 = inlined_call_operand.vmem [shape: f32[32,128], index: 4, kind: input, shape index: {}]
  %s5 = inlined_call_operand.hbm [shape: f32[32,128], index: 5, kind: input, shape index: {}]
  %s6 = inlined_call_operand.vmem [shape: f32[1,128], index: 6, kind: input, shape index: {}]
  %s7 = inlined_call_operand.vmem [shape: f32[32,128], index: 7, kind: input, shape index: {}]
  %s8 = inlined_call_operand.vmem [shape: f32[1,128], index: 8, kind: input, shape index: {}]
  %s9 = inlined_call_operand.hbm [shape: f32[72,128], index: 9, kind: output, shape index: {}]
  %s10 = sld [smem:[#allocation0]]
  $region50: #{tpu_custom_call.1} parent=0
    _
  %s12 = ssub.s32 1, %s10
  %s13 = scalar_select 0, %s12, %s10
  $region1: #{tpu_custom_call.1} parent=0
    #allocation4 [shape = 'u8[16384]{0}', space=vmem, size = 0x4000, scoped, tag = 'input window, operand 5, single buffered']
    #allocation5 [shape = 's32[1]{0}', space=sflag, size = 0x4, scoped, tag = 'scoped memory for tpu_custom_call.1']
    #allocation6 [shape = 's32[1]{0}', space=sflag, size = 0x4, scoped, tag = 'scoped memory for tpu_custom_call.1']
    #allocation7 [shape = 'u8[36864]{0}', space=vmem, size = 0x9000, scoped, tag = 'output window, operand 0, single buffered']
    %14 = vsyncpa [#allocation5], 0
    %15 = vsyncpa [#allocation6], 0
    // Predicated region
    $region2: #{tpu_custom_call.1} parent=1 // pred_check
      _
    $region3: #{tpu_custom_call.1} parent=1 // pred_check_branch
      %17 = sbr.rel (0) target = $region5
    $region4: #{tpu_custom_call.1} parent=1 // pred_region
      _
    $region5: #{tpu_custom_call.1} parent=1 // pred_fallthru
      _
    // Predicated region
    $region6: #{tpu_custom_call.1} parent=1 // pred_check
      _
    $region7: #{tpu_custom_call.1} parent=1 // pred_check_branch
      %19 = sbr.rel (0) target = $region9
    $region8: #{tpu_custom_call.1} parent=1 // pred_region
      _
    $region9: #{tpu_custom_call.1} parent=1 // pred_fallthru
      _
    // Predicated region
    $region10: #{tpu_custom_call.1} parent=1 // pred_check
      _
    $region11: #{tpu_custom_call.1} parent=1 // pred_check_branch
      %21 = sbr.rel (0) target = $region13
    $region12: #{tpu_custom_call.1} parent=1 // pred_region
      _
    $region13: #{tpu_custom_call.1} parent=1 // pred_fallthru
      _
    // Predicated region
    $region14: #{tpu_custom_call.1} parent=1 // pred_check
      _
    $region15: #{tpu_custom_call.1} parent=1 // pred_check_branch
      %23 = sbr.rel (0) target = $region17
    $region16: #{tpu_custom_call.1} parent=1 // pred_region
      _
    $region17: #{tpu_custom_call.1} parent=1 // pred_fallthru
      _
    // Predicated region
    $region18: #{tpu_custom_call.1} parent=1 // pred_check
      _
    $region19: #{tpu_custom_call.1} parent=1 // pred_check_branch
      %25 = sbr.rel (0) target = $region21
    $region20: #{tpu_custom_call.1} parent=1 // pred_region
      _
    $region21: #{tpu_custom_call.1} parent=1 // pred_fallthru
      _
    // Predicated region
    $region22: #{tpu_custom_call.1} parent=1 // pred_check
      _
    $region23: #{tpu_custom_call.1} parent=1 // pred_check_branch
      %27 = sbr.rel (0) target = $region25
    $region24: #{tpu_custom_call.1} parent=1 // pred_region
      %s29 = ssub.s32 512, 512
      %30 = vsyncadd [#allocation5], %s29
      %s31 = sshll.u32 [#allocation4], 4
      %s32 = int_to_ptr.vmem [resolvable:$true] %s31
      %37 = dma.hbm_to_vmem [thread:$0]  %s5, 512, %s32, [#allocation5], 128, 128, 8
    $region25: #{tpu_custom_call.1} parent=1 // pred_fallthru
      _
    // Predicated region
    $region26: #{tpu_custom_call.1} parent=1 // pred_check
      _
    $region27: #{tpu_custom_call.1} parent=1 // pred_check_branch
      %39 = sbr.rel (0) target = $region29
    $region28: #{tpu_custom_call.1} parent=1 // pred_region
      _
    $region29: #{tpu_custom_call.1} parent=1 // pred_fallthru
      _
    // Predicated region
    $region30: #{tpu_custom_call.1} parent=1 // pred_check
      _
    $region31: #{tpu_custom_call.1} parent=1 // pred_check_branch
      %41 = sbr.rel (0) target = $region33
    $region32: #{tpu_custom_call.1} parent=1 // pred_region
      _
    $region33: #{tpu_custom_call.1} parent=1 // pred_fallthru
      _
    // Predicated region
    $region34: #{tpu_custom_call.1} parent=1 // pred_check
      _
    $region35: #{tpu_custom_call.1} parent=1 // pred_check_branch
      %43 = sbr.rel (0) target = $region37
    $region36: #{tpu_custom_call.1} parent=1 // pred_region
      _
    $region37: #{tpu_custom_call.1} parent=1 // pred_fallthru
      _
    // Predicated region
    $region38: #{tpu_custom_call.1} parent=1 // pred_check
      _
    $region39: #{tpu_custom_call.1} parent=1 // pred_check_branch
      %45 = sbr.rel (0) target = $region41
    $region40: #{tpu_custom_call.1} parent=1 // pred_region
      %46 = dma.done [#allocation5], 512
    $region41: #{tpu_custom_call.1} parent=1 // pred_fallthru
      _
    %v47 = vld [vmem:[%s1] sm:$0xff]
    %v48 = vld [vmem:[%s1 + $0x8] sm:$0xff]
    %v49 = vld [vmem:[%s1 + $0x10] sm:$0xff]
    %v50 = vld [vmem:[%s1 + $0x18] sm:$0xff]
    %v51 = vld [vmem:[%s2] sm:$0xff]
    %v52 = vld [vmem:[%s2 + $0x8] sm:$0xff]
    %v53 = vld [vmem:[%s2 + $0x10] sm:$0xff]
    %v54 = vld [vmem:[%s2 + $0x18] sm:$0xff]
    %v55 = vld [vmem:[%s3] sm:$0x1]
    %v56 = vld [vmem:[%s0] sm:$0xff]
    %v57 = vld [vmem:[%s0 + $0x8] sm:$0xff]
    %v58 = vld [vmem:[%s0 + $0x10] sm:$0xff]
    %v59 = vld [vmem:[%s0 + $0x18] sm:$0xff]
    %v60 = vld [vmem:[%s0 + $0x20] sm:$0xff]
    %v61 = vld [vmem:[%s0 + $0x28] sm:$0xff]
    %v62 = vld [vmem:[%s0 + $0x30] sm:$0xff]
    %v63 = vld [vmem:[%s0 + $0x38] sm:$0xff]
    %v64 = vld [vmem:[%s0 + $0x40] sm:$0xff]
    %v66 = vlaneseq
    %v67 = vshrl.u32 %v66, 7
    %v68 = vsub.s32 0, %v67
    %v69 = vrot.slane %v55, %v68
    %vm71 = vcmask 261120
    %v73 = vsel %vm71, %v56, 0
    %v76 = vsel %vm71, %v57, 0
    %v79 = vsel %vm71, %v58, 0
    %v82 = vsel %vm71, %v59, 0
    %v85 = vsel %vm71, %v60, 0
    %v88 = vsel %vm71, %v61, 0
    %v91 = vsel %vm71, %v62, 0
    %v94 = vsel %vm71, %v63, 0
    %v97 = vsel %vm71, %v64, 0
    %99 = vmatprep.subr.mxu0 0.0
    %100 = vmatpush1.msra.mxu0 %v47
    %101 = vmatprep.subr.mxu0 0.0
    %102 = vmatpush1.msra.mxu0 %v48
    %103 = vmatprep.subr.mxu0 0.0
    %104 = vmatpush1.msra.mxu0 %v49
    %105 = vmatprep.subr.mxu0 0.0
    %106 = vmatpush1.msra.mxu0 %v50
    %107 = vmatprep.subr.mxu0 0.0
    %108 = vmatpush1.msra.mxu0 0.0
    %109 = vmatprep.subr.mxu0 0.0
    %110 = vmatpush1.msra.mxu0 0.0
    %111 = vmatprep.subr.mxu0 0.0
    %112 = vmatpush1.msra.mxu0 0.0
    %113 = vmatprep.subr.mxu0 0.0
    %114 = vmatpush1.msra.mxu0 0.0
    %115 = vmatprep.subr.mxu0 0.0
    %116 = vmatpush1.msra.mxu0 0.0
    %117 = vmatprep.subr.mxu0 0.0
    %118 = vmatpush1.msra.mxu0 0.0
    %119 = vmatprep.subr.mxu0 0.0
    %120 = vmatpush1.msra.mxu0 0.0
    %121 = vmatprep.subr.mxu0 0.0
    %122 = vmatpush1.msra.mxu0 0.0
    %123 = vmatprep.subr.mxu0 0.0
    %124 = vmatpush1.msra.mxu0 0.0
    %125 = vmatprep.subr.mxu0 0.0
    %126 = vmatpush1.msra.mxu0 0.0
    %127 = vmatprep.subr.mxu0 0.0
    %128 = vmatpush1.msra.mxu0 0.0
    %129 = vmatprep.subr.mxu0 0.0
    %130 = vmatpush1.msra.mxu0 0.0
    %131 = vmatprep.subr.mxu0 0.0
    %132 = vmatpush1.msra.mxu0 0.0
    %133 = vmatprep.subr.mxu0 0.0
    %134 = vmatpush1.msra.mxu0 0.0
    %135 = vmatprep.subr.mxu0 0.0
    %136 = vmatpush1.msra.mxu0 0.0
    %137 = vmatprep.subr.mxu0 0.0
    %138 = vmatpush1.msra.mxu0 0.0
    %139 = vmatprep.subr.mxu0 0.0
    %140 = vmatpush1.msra.mxu0 0.0
    %141 = vmatprep.subr.mxu0 0.0
    %142 = vmatpush1.msra.mxu0 0.0
    %143 = vmatprep.subr.mxu0 0.0
    %144 = vmatpush1.msra.mxu0 0.0
    %145 = vmatprep.subr.mxu0 0.0
    %146 = vmatpush1.msra.mxu0 0.0
    %147 = vmatprep.subr.mxu0 0.0
    %148 = vmatpush1.msra.mxu0 0.0
    %149 = vmatprep.subr.mxu0 0.0
    %150 = vmatpush1.msra.mxu0 0.0
    %151 = vmatprep.subr.mxu0 0.0
    %152 = vmatpush1.msra.mxu0 0.0
    %153 = vmatprep.subr.mxu0 0.0
    %154 = vmatpush1.msra.mxu0 0.0
    %155 = vmatprep.subr.mxu0 0.0
    %156 = vmatpush1.msra.mxu0 0.0
    %157 = vmatprep.subr.mxu0 0.0
    %158 = vmatpush1.msra.mxu0 0.0
    %159 = vmatprep.subr.mxu0 0.0
    %160 = vmatpush1.msra.mxu0 0.0
    %161 = vmatprep.subr.mxu0 0.0
    %162 = vmatpush1.msra.mxu0 0.0
    %163 = vmatprep.mubr.f32.mxu0 0.0
    %164 = vmatmul.mubr.f32.gmra.mrb[0].mxu0 %v73
    %v165 = vpop.f32.mrb[0].mxu0
    %v166 = vadd.f32 %v69, %v165
    %v167 = vpop.f32.mrb[0].mxu0
    %168 = vmatprep.mubr.f32.mxu0 0.0
    %169 = vmatmul.mubr.f32.gmra.mrb[0].mxu0 %v76
    %v170 = vpop.f32.mrb[0].mxu0
    %v171 = vadd.f32 %v69, %v170
    %v172 = vpop.f32.mrb[0].mxu0
    %173 = vmatprep.mubr.f32.mxu0 0.0
    %174 = vmatmul.mubr.f32.gmra.mrb[0].mxu0 %v79
    %v175 = vpop.f32.mrb[0].mxu0
    %v176 = vadd.f32 %v69, %v175
    %v177 = vpop.f32.mrb[0].mxu0
    %178 = vmatprep.mubr.f32.mxu0 0.0
    %179 = vmatmul.mubr.f32.gmra.mrb[0].mxu0 %v82
    %v180 = vpop.f32.mrb[0].mxu0
    %v181 = vadd.f32 %v69, %v180
    %v182 = vpop.f32.mrb[0].mxu0
    %183 = vmatprep.mubr.f32.mxu0 0.0
    %184 = vmatmul.mubr.f32.gmra.mrb[0].mxu0 %v85
    %v185 = vpop.f32.mrb[0].mxu0
    %v186 = vadd.f32 %v69, %v185
    %v187 = vpop.f32.mrb[0].mxu0
    %188 = vmatprep.mubr.f32.mxu0 0.0
    %189 = vmatmul.mubr.f32.gmra.mrb[0].mxu0 %v88
    %v190 = vpop.f32.mrb[0].mxu0
    %v191 = vadd.f32 %v69, %v190
    %v192 = vpop.f32.mrb[0].mxu0
    %193 = vmatprep.mubr.f32.mxu0 0.0
    %194 = vmatmul.mubr.f32.gmra.mrb[0].mxu0 %v91
    %v195 = vpop.f32.mrb[0].mxu0
    %v196 = vadd.f32 %v69, %v195
    %v197 = vpop.f32.mrb[0].mxu0
    %198 = vmatprep.mubr.f32.mxu0 0.0
    %199 = vmatmul.mubr.f32.gmra.mrb[0].mxu0 %v94
    %v200 = vpop.f32.mrb[0].mxu0
    %v201 = vadd.f32 %v69, %v200
    %v202 = vpop.f32.mrb[0].mxu0
    %203 = vmatprep.mubr.f32.mxu0 0.0
    %204 = vmatmul.mubr.f32.gmra.mrb[0].mxu0 %v97
    %v205 = vpop.f32.mrb[0].mxu0
    %v206 = vadd.f32 %v69, %v205
    %v207 = vpop.f32.mrb[0].mxu0
    %208 = vdwg.mxu0
    %209 = vst [vmem:[#allocation3] sm:$0xff] %v166
    %210 = vst [vmem:[#allocation3 + $0x8] sm:$0xff] %v171
    %211 = vst [vmem:[#allocation3 + $0x10] sm:$0xff] %v176
    %212 = vst [vmem:[#allocation3 + $0x18] sm:$0xff] %v181
    %213 = vst [vmem:[#allocation3 + $0x20] sm:$0xff] %v186
    %214 = vst [vmem:[#allocation3 + $0x28] sm:$0xff] %v191
    %215 = vst [vmem:[#allocation3 + $0x30] sm:$0xff] %v196
    %216 = vst [vmem:[#allocation3 + $0x38] sm:$0xff] %v201
    %217 = vst [vmem:[#allocation3 + $0x40] sm:$0xff] %v206
    %v218 = vld [vmem:[#allocation3] sm:$0xff]
    %v220 = vsel %vm71, 0.0, 0
    %222 = vmatprep.subr.mxu0 0.0
    %223 = vmatpush1.msra.mxu0 %v51
    %224 = vmatprep.subr.mxu0 0.0
    %225 = vmatpush1.msra.mxu0 %v52
    %226 = vmatprep.subr.mxu0 0.0
    %227 = vmatpush1.msra.mxu0 %v53
    %228 = vmatprep.subr.mxu0 0.0
    %229 = vmatpush1.msra.mxu0 %v54
    %230 = vmatprep.subr.mxu0 0.0
    %231 = vmatpush1.msra.mxu0 0.0
    %232 = vmatprep.subr.mxu0 0.0
    %233 = vmatpush1.msra.mxu0 0.0
    %234 = vmatprep.subr.mxu0 0.0
    %235 = vmatpush1.msra.mxu0 0.0
    %236 = vmatprep.subr.mxu0 0.0
    %237 = vmatpush1.msra.mxu0 0.0
    %238 = vmatprep.subr.mxu0 0.0
    %239 = vmatpush1.msra.mxu0 0.0
    %240 = vmatprep.subr.mxu0 0.0
    %241 = vmatpush1.msra.mxu0 0.0
    %242 = vmatprep.subr.mxu0 0.0
    %243 = vmatpush1.msra.mxu0 0.0
    %244 = vmatprep.subr.mxu0 0.0
    %245 = vmatpush1.msra.mxu0 0.0
    %246 = vmatprep.subr.mxu0 0.0
    %247 = vmatpush1.msra.mxu0 0.0
    %248 = vmatprep.subr.mxu0 0.0
    %249 = vmatpush1.msra.mxu0 0.0
    %250 = vmatprep.subr.mxu0 0.0
    %251 = vmatpush1.msra.mxu0 0.0
    %252 = vmatprep.subr.mxu0 0.0
    %253 = vmatpush1.msra.mxu0 0.0
    %254 = vmatprep.subr.mxu0 0.0
    %255 = vmatpush1.msra.mxu0 0.0
    %256 = vmatprep.subr.mxu0 0.0
    %257 = vmatpush1.msra.mxu0 0.0
    %258 = vmatprep.subr.mxu0 0.0
    %259 = vmatpush1.msra.mxu0 0.0
    %260 = vmatprep.subr.mxu0 0.0
    %261 = vmatpush1.msra.mxu0 0.0
    %262 = vmatprep.subr.mxu0 0.0
    %263 = vmatpush1.msra.mxu0 0.0
    %264 = vmatprep.subr.mxu0 0.0
    %265 = vmatpush1.msra.mxu0 0.0
    %266 = vmatprep.subr.mxu0 0.0
    %267 = vmatpush1.msra.mxu0 0.0
    %268 = vmatprep.subr.mxu0 0.0
    %269 = vmatpush1.msra.mxu0 0.0
    %270 = vmatprep.subr.mxu0 0.0
    %271 = vmatpush1.msra.mxu0 0.0
    %272 = vmatprep.subr.mxu0 0.0
    %273 = vmatpush1.msra.mxu0 0.0
    %274 = vmatprep.subr.mxu0 0.0
    %275 = vmatpush1.msra.mxu0 0.0
    %276 = vmatprep.subr.mxu0 0.0
    %277 = vmatpush1.msra.mxu0 0.0
    %278 = vmatprep.subr.mxu0 0.0
    %279 = vmatpush1.msra.mxu0 0.0
    %280 = vmatprep.subr.mxu0 0.0
    %281 = vmatpush1.msra.mxu0 0.0
    %282 = vmatprep.subr.mxu0 0.0
    %283 = vmatpush1.msra.mxu0 0.0
    %284 = vmatprep.subr.mxu0 0.0
    %285 = vmatpush1.msra.mxu0 0.0
    %286 = vmatprep.mubr.f32.mxu0 0.0
    %287 = vmatmul.mubr.f32.gmra.mrb[0].mxu0 %v220
    %v288 = vpop.f32.mrb[0].mxu0
    %v289 = vadd.f32 0.0, %v288
    %v290 = vpop.f32.mrb[0].mxu0
    %291 = vdwg.mxu0
    %v292 = vadd.f32 %v218, %v289
    %v293 = vxor.u32 %v292, 2147483648
    %v294 = vmul.f32 %v293, 1.442695
    %v295 = vpow.pop %v294
    %v296 = vadd.f32 %v295, 1.0
    %v297 = vrcp.pop %v296
    %v298 = vmul.f32 1.0, %v297
    %v299 = vtanh.pop %v292
    %v300 = vmul.f32 %v298, 0.0
    %302 = vrot.lane.b32.xlu0 %v299, 32
    %v303 = vpop.permute.xlu0 %302
    %v305 = vmul.f32 %v298, %v303
    %307 = vrot.lane.b32.xlu0 %v305, 32
    %v308 = vpop.permute.xlu0 %307
    %v310 = vadd.f32 %v300, %v308
    %v311 = vtanh.pop %v310
    %313 = vrot.lane.b32.xlu0 %v311, 32
    %v314 = vpop.permute.xlu0 %313
    %v316 = vmul.f32 %v298, %v314
    %318 = vrot.lane.b32.xlu0 %v316, 64
    %v319 = vpop.permute.xlu0 %318
    %321 = vst.msk [vmem:[#allocation2] sm:$0xff] %vm71, %v319
    %s322 = scalar_lea.vmem [#allocation3], 8
    %v323 = vld [vmem:[%s322] sm:$0xff]
    %v324 = vsel %vm71, %v319, 0
    %326 = vmatprep.subr.mxu0 0.0
    %327 = vmatpush1.msra.mxu0 %v51
    %328 = vmatprep.subr.mxu0 0.0
    %329 = vmatpush1.msra.mxu0 %v52
    %330 = vmatprep.subr.mxu0 0.0
    %331 = vmatpush1.msra.mxu0 %v53
    %332 = vmatprep.subr.mxu0 0.0
    %333 = vmatpush1.msra.mxu0 %v54
    %334 = vmatprep.subr.mxu0 0.0
    %335 = vmatpush1.msra.mxu0 0.0
    %336 = vmatprep.subr.mxu0 0.0
    %337 = vmatpush1.msra.mxu0 0.0
    %338 = vmatprep.subr.mxu0 0.0
    %339 = vmatpush1.msra.mxu0 0.0
    %340 = vmatprep.subr.mxu0 0.0
    %341 = vmatpush1.msra.mxu0 0.0
    %342 = vmatprep.subr.mxu0 0.0
    %343 = vmatpush1.msra.mxu0 0.0
    %344 = vmatprep.subr.mxu0 0.0
    %345 = vmatpush1.msra.mxu0 0.0
    %346 = vmatprep.subr.mxu0 0.0
    %347 = vmatpush1.msra.mxu0 0.0
    %348 = vmatprep.subr.mxu0 0.0
    %349 = vmatpush1.msra.mxu0 0.0
    %350 = vmatprep.subr.mxu0 0.0
    %351 = vmatpush1.msra.mxu0 0.0
    %352 = vmatprep.subr.mxu0 0.0
    %353 = vmatpush1.msra.mxu0 0.0
    %354 = vmatprep.subr.mxu0 0.0
    %355 = vmatpush1.msra.mxu0 0.0
    %356 = vmatprep.subr.mxu0 0.0
    %357 = vmatpush1.msra.mxu0 0.0
    %358 = vmatprep.subr.mxu0 0.0
    %359 = vmatpush1.msra.mxu0 0.0
    %360 = vmatprep.subr.mxu0 0.0
    %361 = vmatpush1.msra.mxu0 0.0
    %362 = vmatprep.subr.mxu0 0.0
    %363 = vmatpush1.msra.mxu0 0.0
    %364 = vmatprep.subr.mxu0 0.0
    %365 = vmatpush1.msra.mxu0 0.0
    %366 = vmatprep.subr.mxu0 0.0
    %367 = vmatpush1.msra.mxu0 0.0
    %368 = vmatprep.subr.mxu0 0.0
    %369 = vmatpush1.msra.mxu0 0.0
    %370 = vmatprep.subr.mxu0 0.0
    %371 = vmatpush1.msra.mxu0 0.0
    %372 = vmatprep.subr.mxu0 0.0
    %373 = vmatpush1.msra.mxu0 0.0
    %374 = vmatprep.subr.mxu0 0.0
    %375 = vmatpush1.msra.mxu0 0.0
    %376 = vmatprep.subr.mxu0 0.0
    %377 = vmatpush1.msra.mxu0 0.0
    %378 = vmatprep.subr.mxu0 0.0
    %379 = vmatpush1.msra.mxu0 0.0
    %380 = vmatprep.subr.mxu0 0.0
    %381 = vmatpush1.msra.mxu0 0.0
    %382 = vmatprep.subr.mxu0 0.0
    %383 = vmatpush1.msra.mxu0 0.0
    %384 = vmatprep.subr.mxu0 0.0
    %385 = vmatpush1.msra.mxu0 0.0
    %386 = vmatprep.subr.mxu0 0.0
    %387 = vmatpush1.msra.mxu0 0.0
    %388 = vmatprep.subr.mxu0 0.0
    %389 = vmatpush1.msra.mxu0 0.0
    %390 = vmatprep.mubr.f32.mxu0 0.0
    %391 = vmatmul.mubr.f32.gmra.mrb[0].mxu0 %v324
    %v392 = vpop.f32.mrb[0].mxu0
    %v393 = vadd.f32 0.0, %v392
    %v394 = vpop.f32.mrb[0].mxu0
    %395 = vdwg.mxu0
    %v396 = vadd.f32 %v323, %v393
    %v397 = vxor.u32 %v396, 2147483648
    %v398 = vmul.f32 %v397, 1.442695
    %v399 = vpow.pop %v398
    %v400 = vadd.f32 %v399, 1.0
    %v401 = vrcp.pop %v400
    %v402 = vmul.f32 1.0, %v401
    %v403 = vtanh.pop %v396
    %v404 = vmul.f32 %v402, %v310
    %406 = vrot.lane.b32.xlu0 %v403, 32
    %v407 = vpop.permute.xlu0 %406
    %v409 = vmul.f32 %v402, %v407
    %411 = vrot.lane.b32.xlu0 %v409, 32
    %v412 = vpop.permute.xlu0 %411
    %v414 = vadd.f32 %v404, %v412
    %v415 = vtanh.pop %v414
    %417 = vrot.lane.b32.xlu0 %v415, 32
    %v418 = vpop.permute.xlu0 %417
    %v420 = vmul.f32 %v402, %v418
    %422 = vrot.lane.b32.xlu0 %v420, 64
    %v423 = vpop.permute.xlu0 %422
    %s425 = scalar_lea.vmem [#allocation2], 8
    %426 = vst.msk [vmem:[%s425] sm:$0xff] %vm71, %v423
    %s427 = scalar_lea.vmem [#allocation3], 16
    %v428 = vld [vmem:[%s427] sm:$0xff]
    %v429 = vsel %vm71, %v423, 0
    %431 = vmatprep.subr.mxu0 0.0
    %432 = vmatpush1.msra.mxu0 %v51
    %433 = vmatprep.subr.mxu0 0.0
    %434 = vmatpush1.msra.mxu0 %v52
    %435 = vmatprep.subr.mxu0 0.0
    %436 = vmatpush1.msra.mxu0 %v53
    %437 = vmatprep.subr.mxu0 0.0
    %438 = vmatpush1.msra.mxu0 %v54
    %439 = vmatprep.subr.mxu0 0.0
    %440 = vmatpush1.msra.mxu0 0.0
    %441 = vmatprep.subr.mxu0 0.0
    %442 = vmatpush1.msra.mxu0 0.0
    %443 = vmatprep.subr.mxu0 0.0
    %444 = vmatpush1.msra.mxu0 0.0
    %445 = vmatprep.subr.mxu0 0.0
    %446 = vmatpush1.msra.mxu0 0.0
    %447 = vmatprep.subr.mxu0 0.0
    %448 = vmatpush1.msra.mxu0 0.0
    %449 = vmatprep.subr.mxu0 0.0
    %450 = vmatpush1.msra.mxu0 0.0
    %451 = vmatprep.subr.mxu0 0.0
    %452 = vmatpush1.msra.mxu0 0.0
    %453 = vmatprep.subr.mxu0 0.0
    %454 = vmatpush1.msra.mxu0 0.0
    %455 = vmatprep.subr.mxu0 0.0
    %456 = vmatpush1.msra.mxu0 0.0
    %457 = vmatprep.subr.mxu0 0.0
    %458 = vmatpush1.msra.mxu0 0.0
    %459 = vmatprep.subr.mxu0 0.0
    %460 = vmatpush1.msra.mxu0 0.0
    %461 = vmatprep.subr.mxu0 0.0
    %462 = vmatpush1.msra.mxu0 0.0
    %463 = vmatprep.subr.mxu0 0.0
    %464 = vmatpush1.msra.mxu0 0.0
    %465 = vmatprep.subr.mxu0 0.0
    %466 = vmatpush1.msra.mxu0 0.0
    %467 = vmatprep.subr.mxu0 0.0
    %468 = vmatpush1.msra.mxu0 0.0
    %469 = vmatprep.subr.mxu0 0.0
    %470 = vmatpush1.msra.mxu0 0.0
    %471 = vmatprep.subr.mxu0 0.0
    %472 = vmatpush1.msra.mxu0 0.0
    %473 = vmatprep.subr.mxu0 0.0
    %474 = vmatpush1.msra.mxu0 0.0
    %475 = vmatprep.subr.mxu0 0.0
    %476 = vmatpush1.msra.mxu0 0.0
    %477 = vmatprep.subr.mxu0 0.0
    %478 = vmatpush1.msra.mxu0 0.0
    %479 = vmatprep.subr.mxu0 0.0
    %480 = vmatpush1.msra.mxu0 0.0
    %481 = vmatprep.subr.mxu0 0.0
    %482 = vmatpush1.msra.mxu0 0.0
    %483 = vmatprep.subr.mxu0 0.0
    %484 = vmatpush1.msra.mxu0 0.0
    %485 = vmatprep.subr.mxu0 0.0
    %486 = vmatpush1.msra.mxu0 0.0
    %487 = vmatprep.subr.mxu0 0.0
    %488 = vmatpush1.msra.mxu0 0.0
    %489 = vmatprep.subr.mxu0 0.0
    %490 = vmatpush1.msra.mxu0 0.0
    %491 = vmatprep.subr.mxu0 0.0
    %492 = vmatpush1.msra.mxu0 0.0
    %493 = vmatprep.subr.mxu0 0.0
    %494 = vmatpush1.msra.mxu0 0.0
    %495 = vmatprep.mubr.f32.mxu0 0.0
    %496 = vmatmul.mubr.f32.gmra.mrb[0].mxu0 %v429
    %v497 = vpop.f32.mrb[0].mxu0
    %v498 = vadd.f32 0.0, %v497
    %v499 = vpop.f32.mrb[0].mxu0
    %500 = vdwg.mxu0
    %v501 = vadd.f32 %v428, %v498
    %v502 = vxor.u32 %v501, 2147483648
    %v503 = vmul.f32 %v502, 1.442695
    %v504 = vpow.pop %v503
    %v505 = vadd.f32 %v504, 1.0
    %v506 = vrcp.pop %v505
    %v507 = vmul.f32 1.0, %v506
    %v508 = vtanh.pop %v501
    %v509 = vmul.f32 %v507, %v414
    %511 = vrot.lane.b32.xlu0 %v508, 32
    %v512 = vpop.permute.xlu0 %511
    %v514 = vmul.f32 %v507, %v512
    %516 = vrot.lane.b32.xlu0 %v514, 32
    %v517 = vpop.permute.xlu0 %516
    %v519 = vadd.f32 %v509, %v517
    %v520 = vtanh.pop %v519
    %522 = vrot.lane.b32.xlu0 %v520, 32
    %v523 = vpop.permute.xlu0 %522
    %v525 = vmul.f32 %v507, %v523
    %527 = vrot.lane.b32.xlu0 %v525, 64
    %v528 = vpop.permute.xlu0 %527
    %s530 = scalar_lea.vmem [#allocation2], 16
    %531 = vst.msk [vmem:[%s530] sm:$0xff] %vm71, %v528
    %s532 = scalar_lea.vmem [#allocation3], 24
    %v533 = vld [vmem:[%s532] sm:$0xff]
    %v534 = vsel %vm71, %v528, 0
    %536 = vmatprep.subr.mxu0 0.0
    %537 = vmatpush1.msra.mxu0 %v51
    %538 = vmatprep.subr.mxu0 0.0
    %539 = vmatpush1.msra.mxu0 %v52
    %540 = vmatprep.subr.mxu0 0.0
    %541 = vmatpush1.msra.mxu0 %v53
    %542 = vmatprep.subr.mxu0 0.0
    %543 = vmatpush1.msra.mxu0 %v54
    %544 = vmatprep.subr.mxu0 0.0
    %545 = vmatpush1.msra.mxu0 0.0
    %546 = vmatprep.subr.mxu0 0.0
    %547 = vmatpush1.msra.mxu0 0.0
    %548 = vmatprep.subr.mxu0 0.0
    %549 = vmatpush1.msra.mxu0 0.0
    %550 = vmatprep.subr.mxu0 0.0
    %551 = vmatpush1.msra.mxu0 0.0
    %552 = vmatprep.subr.mxu0 0.0
    %553 = vmatpush1.msra.mxu0 0.0
    %554 = vmatprep.subr.mxu0 0.0
    %555 = vmatpush1.msra.mxu0 0.0
    %556 = vmatprep.subr.mxu0 0.0
    %557 = vmatpush1.msra.mxu0 0.0
    %558 = vmatprep.subr.mxu0 0.0
    %559 = vmatpush1.msra.mxu0 0.0
    %560 = vmatprep.subr.mxu0 0.0
    %561 = vmatpush1.msra.mxu0 0.0
    %562 = vmatprep.subr.mxu0 0.0
    %563 = vmatpush1.msra.mxu0 0.0
    %564 = vmatprep.subr.mxu0 0.0
    %565 = vmatpush1.msra.mxu0 0.0
    %566 = vmatprep.subr.mxu0 0.0
    %567 = vmatpush1.msra.mxu0 0.0
    %568 = vmatprep.subr.mxu0 0.0
    %569 = vmatpush1.msra.mxu0 0.0
    %570 = vmatprep.subr.mxu0 0.0
    %571 = vmatpush1.msra.mxu0 0.0
    %572 = vmatprep.subr.mxu0 0.0
    %573 = vmatpush1.msra.mxu0 0.0
    %574 = vmatprep.subr.mxu0 0.0
    %575 = vmatpush1.msra.mxu0 0.0
    %576 = vmatprep.subr.mxu0 0.0
    %577 = vmatpush1.msra.mxu0 0.0
    %578 = vmatprep.subr.mxu0 0.0
    %579 = vmatpush1.msra.mxu0 0.0
    %580 = vmatprep.subr.mxu0 0.0
    %581 = vmatpush1.msra.mxu0 0.0
    %582 = vmatprep.subr.mxu0 0.0
    %583 = vmatpush1.msra.mxu0 0.0
    %584 = vmatprep.subr.mxu0 0.0
    %585 = vmatpush1.msra.mxu0 0.0
    %586 = vmatprep.subr.mxu0 0.0
    %587 = vmatpush1.msra.mxu0 0.0
    %588 = vmatprep.subr.mxu0 0.0
    %589 = vmatpush1.msra.mxu0 0.0
    %590 = vmatprep.subr.mxu0 0.0
    %591 = vmatpush1.msra.mxu0 0.0
    %592 = vmatprep.subr.mxu0 0.0
    %593 = vmatpush1.msra.mxu0 0.0
    %594 = vmatprep.subr.mxu0 0.0
    %595 = vmatpush1.msra.mxu0 0.0
    %596 = vmatprep.subr.mxu0 0.0
    %597 = vmatpush1.msra.mxu0 0.0
    %598 = vmatprep.subr.mxu0 0.0
    %599 = vmatpush1.msra.mxu0 0.0
    %600 = vmatprep.mubr.f32.mxu0 0.0
    %601 = vmatmul.mubr.f32.gmra.mrb[0].mxu0 %v534
    %v602 = vpop.f32.mrb[0].mxu0
    %v603 = vadd.f32 0.0, %v602
    %v604 = vpop.f32.mrb[0].mxu0
    %605 = vdwg.mxu0
    %v606 = vadd.f32 %v533, %v603
    %v607 = vxor.u32 %v606, 2147483648
    %v608 = vmul.f32 %v607, 1.442695
    %v609 = vpow.pop %v608
    %v610 = vadd.f32 %v609, 1.0
    %v611 = vrcp.pop %v610
    %v612 = vmul.f32 1.0, %v611
    %v613 = vtanh.pop %v606
    %v614 = vmul.f32 %v612, %v519
    %616 = vrot.lane.b32.xlu0 %v613, 32
    %v617 = vpop.permute.xlu0 %616
    %v619 = vmul.f32 %v612, %v617
    %621 = vrot.lane.b32.xlu0 %v619, 32
    %v622 = vpop.permute.xlu0 %621
    %v624 = vadd.f32 %v614, %v622
    %v625 = vtanh.pop %v624
    %627 = vrot.lane.b32.xlu0 %v625, 32
    %v628 = vpop.permute.xlu0 %627
    %v630 = vmul.f32 %v612, %v628
    %632 = vrot.lane.b32.xlu0 %v630, 64
    %v633 = vpop.permute.xlu0 %632
    %s635 = scalar_lea.vmem [#allocation2], 24
    %636 = vst.msk [vmem:[%s635] sm:$0xff] %vm71, %v633
    %s637 = scalar_lea.vmem [#allocation3], 32
    %v638 = vld [vmem:[%s637] sm:$0xff]
    %v639 = vsel %vm71, %v633, 0
    %641 = vmatprep.subr.mxu0 0.0
    %642 = vmatpush1.msra.mxu0 %v51
    %643 = vmatprep.subr.mxu0 0.0
    %644 = vmatpush1.msra.mxu0 %v52
    %645 = vmatprep.subr.mxu0 0.0
    %646 = vmatpush1.msra.mxu0 %v53
    %647 = vmatprep.subr.mxu0 0.0
    %648 = vmatpush1.msra.mxu0 %v54
    %649 = vmatprep.subr.mxu0 0.0
    %650 = vmatpush1.msra.mxu0 0.0
    %651 = vmatprep.subr.mxu0 0.0
    %652 = vmatpush1.msra.mxu0 0.0
    %653 = vmatprep.subr.mxu0 0.0
    %654 = vmatpush1.msra.mxu0 0.0
    %655 = vmatprep.subr.mxu0 0.0
    %656 = vmatpush1.msra.mxu0 0.0
    %657 = vmatprep.subr.mxu0 0.0
    %658 = vmatpush1.msra.mxu0 0.0
    %659 = vmatprep.subr.mxu0 0.0
    %660 = vmatpush1.msra.mxu0 0.0
    %661 = vmatprep.subr.mxu0 0.0
    %662 = vmatpush1.msra.mxu0 0.0
    %663 = vmatprep.subr.mxu0 0.0
    %664 = vmatpush1.msra.mxu0 0.0
    %665 = vmatprep.subr.mxu0 0.0
    %666 = vmatpush1.msra.mxu0 0.0
    %667 = vmatprep.subr.mxu0 0.0
    %668 = vmatpush1.msra.mxu0 0.0
    %669 = vmatprep.subr.mxu0 0.0
    %670 = vmatpush1.msra.mxu0 0.0
    %671 = vmatprep.subr.mxu0 0.0
    %672 = vmatpush1.msra.mxu0 0.0
    %673 = vmatprep.subr.mxu0 0.0
    %674 = vmatpush1.msra.mxu0 0.0
    %675 = vmatprep.subr.mxu0 0.0
    %676 = vmatpush1.msra.mxu0 0.0
    %677 = vmatprep.subr.mxu0 0.0
    %678 = vmatpush1.msra.mxu0 0.0
    %679 = vmatprep.subr.mxu0 0.0
    %680 = vmatpush1.msra.mxu0 0.0
    %681 = vmatprep.subr.mxu0 0.0
    %682 = vmatpush1.msra.mxu0 0.0
    %683 = vmatprep.subr.mxu0 0.0
    %684 = vmatpush1.msra.mxu0 0.0
    %685 = vmatprep.subr.mxu0 0.0
    %686 = vmatpush1.msra.mxu0 0.0
    %687 = vmatprep.subr.mxu0 0.0
    %688 = vmatpush1.msra.mxu0 0.0
    %689 = vmatprep.subr.mxu0 0.0
    %690 = vmatpush1.msra.mxu0 0.0
    %691 = vmatprep.subr.mxu0 0.0
    %692 = vmatpush1.msra.mxu0 0.0
    %693 = vmatprep.subr.mxu0 0.0
    %694 = vmatpush1.msra.mxu0 0.0
    %695 = vmatprep.subr.mxu0 0.0
    %696 = vmatpush1.msra.mxu0 0.0
    %697 = vmatprep.subr.mxu0 0.0
    %698 = vmatpush1.msra.mxu0 0.0
    %699 = vmatprep.subr.mxu0 0.0
    %700 = vmatpush1.msra.mxu0 0.0
    %701 = vmatprep.subr.mxu0 0.0
    %702 = vmatpush1.msra.mxu0 0.0
    %703 = vmatprep.subr.mxu0 0.0
    %704 = vmatpush1.msra.mxu0 0.0
    %705 = vmatprep.mubr.f32.mxu0 0.0
    %706 = vmatmul.mubr.f32.gmra.mrb[0].mxu0 %v639
    %v707 = vpop.f32.mrb[0].mxu0
    %v708 = vadd.f32 0.0, %v707
    %v709 = vpop.f32.mrb[0].mxu0
    %710 = vdwg.mxu0
    %v711 = vadd.f32 %v638, %v708
    %v712 = vxor.u32 %v711, 2147483648
    %v713 = vmul.f32 %v712, 1.442695
    %v714 = vpow.pop %v713
    %v715 = vadd.f32 %v714, 1.0
    %v716 = vrcp.pop %v715
    %v717 = vmul.f32 1.0, %v716
    %v718 = vtanh.pop %v711
    %v719 = vmul.f32 %v717, %v624
    %721 = vrot.lane.b32.xlu0 %v718, 32
    %v722 = vpop.permute.xlu0 %721
    %v724 = vmul.f32 %v717, %v722
    %726 = vrot.lane.b32.xlu0 %v724, 32
    %v727 = vpop.permute.xlu0 %726
    %v729 = vadd.f32 %v719, %v727
    %v730 = vtanh.pop %v729
    %732 = vrot.lane.b32.xlu0 %v730, 32
    %v733 = vpop.permute.xlu0 %732
    %v735 = vmul.f32 %v717, %v733
    %737 = vrot.lane.b32.xlu0 %v735, 64
    %v738 = vpop.permute.xlu0 %737
    %s740 = scalar_lea.vmem [#allocation2], 32
    %741 = vst.msk [vmem:[%s740] sm:$0xff] %vm71, %v738
    %s742 = scalar_lea.vmem [#allocation3], 40
    %v743 = vld [vmem:[%s742] sm:$0xff]
    %v744 = vsel %vm71, %v738, 0
    %746 = vmatprep.subr.mxu0 0.0
    %747 = vmatpush1.msra.mxu0 %v51
    %748 = vmatprep.subr.mxu0 0.0
    %749 = vmatpush1.msra.mxu0 %v52
    %750 = vmatprep.subr.mxu0 0.0
    %751 = vmatpush1.msra.mxu0 %v53
    %752 = vmatprep.subr.mxu0 0.0
    %753 = vmatpush1.msra.mxu0 %v54
    %754 = vmatprep.subr.mxu0 0.0
    %755 = vmatpush1.msra.mxu0 0.0
    %756 = vmatprep.subr.mxu0 0.0
    %757 = vmatpush1.msra.mxu0 0.0
    %758 = vmatprep.subr.mxu0 0.0
    %759 = vmatpush1.msra.mxu0 0.0
    %760 = vmatprep.subr.mxu0 0.0
    %761 = vmatpush1.msra.mxu0 0.0
    %762 = vmatprep.subr.mxu0 0.0
    %763 = vmatpush1.msra.mxu0 0.0
    %764 = vmatprep.subr.mxu0 0.0
    %765 = vmatpush1.msra.mxu0 0.0
    %766 = vmatprep.subr.mxu0 0.0
    %767 = vmatpush1.msra.mxu0 0.0
    %768 = vmatprep.subr.mxu0 0.0
    %769 = vmatpush1.msra.mxu0 0.0
    %770 = vmatprep.subr.mxu0 0.0
    %771 = vmatpush1.msra.mxu0 0.0
    %772 = vmatprep.subr.mxu0 0.0
    %773 = vmatpush1.msra.mxu0 0.0
    %774 = vmatprep.subr.mxu0 0.0
    %775 = vmatpush1.msra.mxu0 0.0
    %776 = vmatprep.subr.mxu0 0.0
    %777 = vmatpush1.msra.mxu0 0.0
    %778 = vmatprep.subr.mxu0 0.0
    %779 = vmatpush1.msra.mxu0 0.0
    %780 = vmatprep.subr.mxu0 0.0
    %781 = vmatpush1.msra.mxu0 0.0
    %782 = vmatprep.subr.mxu0 0.0
    %783 = vmatpush1.msra.mxu0 0.0
    %784 = vmatprep.subr.mxu0 0.0
    %785 = vmatpush1.msra.mxu0 0.0
    %786 = vmatprep.subr.mxu0 0.0
    %787 = vmatpush1.msra.mxu0 0.0
    %788 = vmatprep.subr.mxu0 0.0
    %789 = vmatpush1.msra.mxu0 0.0
    %790 = vmatprep.subr.mxu0 0.0
    %791 = vmatpush1.msra.mxu0 0.0
    %792 = vmatprep.subr.mxu0 0.0
    %793 = vmatpush1.msra.mxu0 0.0
    %794 = vmatprep.subr.mxu0 0.0
    %795 = vmatpush1.msra.mxu0 0.0
    %796 = vmatprep.subr.mxu0 0.0
    %797 = vmatpush1.msra.mxu0 0.0
    %798 = vmatprep.subr.mxu0 0.0
    %799 = vmatpush1.msra.mxu0 0.0
    %800 = vmatprep.subr.mxu0 0.0
    %801 = vmatpush1.msra.mxu0 0.0
    %802 = vmatprep.subr.mxu0 0.0
    %803 = vmatpush1.msra.mxu0 0.0
    %804 = vmatprep.subr.mxu0 0.0
    %805 = vmatpush1.msra.mxu0 0.0
    %806 = vmatprep.subr.mxu0 0.0
    %807 = vmatpush1.msra.mxu0 0.0
    %808 = vmatprep.subr.mxu0 0.0
    %809 = vmatpush1.msra.mxu0 0.0
    %810 = vmatprep.mubr.f32.mxu0 0.0
    %811 = vmatmul.mubr.f32.gmra.mrb[0].mxu0 %v744
    %v812 = vpop.f32.mrb[0].mxu0
    %v813 = vadd.f32 0.0, %v812
    %v814 = vpop.f32.mrb[0].mxu0
    %815 = vdwg.mxu0
    %v816 = vadd.f32 %v743, %v813
    %v817 = vxor.u32 %v816, 2147483648
    %v818 = vmul.f32 %v817, 1.442695
    %v819 = vpow.pop %v818
    %v820 = vadd.f32 %v819, 1.0
    %v821 = vrcp.pop %v820
    %v822 = vmul.f32 1.0, %v821
    %v823 = vtanh.pop %v816
    %v824 = vmul.f32 %v822, %v729
    %826 = vrot.lane.b32.xlu0 %v823, 32
    %v827 = vpop.permute.xlu0 %826
    %v829 = vmul.f32 %v822, %v827
    %831 = vrot.lane.b32.xlu0 %v829, 32
    %v832 = vpop.permute.xlu0 %831
    %v834 = vadd.f32 %v824, %v832
    %v835 = vtanh.pop %v834
    %837 = vrot.lane.b32.xlu0 %v835, 32
    %v838 = vpop.permute.xlu0 %837
    %v840 = vmul.f32 %v822, %v838
    %842 = vrot.lane.b32.xlu0 %v840, 64
    %v843 = vpop.permute.xlu0 %842
    %s845 = scalar_lea.vmem [#allocation2], 40
    %846 = vst.msk [vmem:[%s845] sm:$0xff] %vm71, %v843
    %s847 = scalar_lea.vmem [#allocation3], 48
    %v848 = vld [vmem:[%s847] sm:$0xff]
    %v849 = vsel %vm71, %v843, 0
    %851 = vmatprep.subr.mxu0 0.0
    %852 = vmatpush1.msra.mxu0 %v51
    %853 = vmatprep.subr.mxu0 0.0
    %854 = vmatpush1.msra.mxu0 %v52
    %855 = vmatprep.subr.mxu0 0.0
    %856 = vmatpush1.msra.mxu0 %v53
    %857 = vmatprep.subr.mxu0 0.0
    %858 = vmatpush1.msra.mxu0 %v54
    %859 = vmatprep.subr.mxu0 0.0
    %860 = vmatpush1.msra.mxu0 0.0
    %861 = vmatprep.subr.mxu0 0.0
    %862 = vmatpush1.msra.mxu0 0.0
    %863 = vmatprep.subr.mxu0 0.0
    %864 = vmatpush1.msra.mxu0 0.0
    %865 = vmatprep.subr.mxu0 0.0
    %866 = vmatpush1.msra.mxu0 0.0
    %867 = vmatprep.subr.mxu0 0.0
    %868 = vmatpush1.msra.mxu0 0.0
    %869 = vmatprep.subr.mxu0 0.0
    %870 = vmatpush1.msra.mxu0 0.0
    %871 = vmatprep.subr.mxu0 0.0
    %872 = vmatpush1.msra.mxu0 0.0
    %873 = vmatprep.subr.mxu0 0.0
    %874 = vmatpush1.msra.mxu0 0.0
    %875 = vmatprep.subr.mxu0 0.0
    %876 = vmatpush1.msra.mxu0 0.0
    %877 = vmatprep.subr.mxu0 0.0
    %878 = vmatpush1.msra.mxu0 0.0
    %879 = vmatprep.subr.mxu0 0.0
    %880 = vmatpush1.msra.mxu0 0.0
    %881 = vmatprep.subr.mxu0 0.0
    %882 = vmatpush1.msra.mxu0 0.0
    %883 = vmatprep.subr.mxu0 0.0
    %884 = vmatpush1.msra.mxu0 0.0
    %885 = vmatprep.subr.mxu0 0.0
    %886 = vmatpush1.msra.mxu0 0.0
    %887 = vmatprep.subr.mxu0 0.0
    %888 = vmatpush1.msra.mxu0 0.0
    %889 = vmatprep.subr.mxu0 0.0
    %890 = vmatpush1.msra.mxu0 0.0
    %891 = vmatprep.subr.mxu0 0.0
    %892 = vmatpush1.msra.mxu0 0.0
    %893 = vmatprep.subr.mxu0 0.0
    %894 = vmatpush1.msra.mxu0 0.0
    %895 = vmatprep.subr.mxu0 0.0
    %896 = vmatpush1.msra.mxu0 0.0
    %897 = vmatprep.subr.mxu0 0.0
    %898 = vmatpush1.msra.mxu0 0.0
    %899 = vmatprep.subr.mxu0 0.0
    %900 = vmatpush1.msra.mxu0 0.0
    %901 = vmatprep.subr.mxu0 0.0
    %902 = vmatpush1.msra.mxu0 0.0
    %903 = vmatprep.subr.mxu0 0.0
    %904 = vmatpush1.msra.mxu0 0.0
    %905 = vmatprep.subr.mxu0 0.0
    %906 = vmatpush1.msra.mxu0 0.0
    %907 = vmatprep.subr.mxu0 0.0
    %908 = vmatpush1.msra.mxu0 0.0
    %909 = vmatprep.subr.mxu0 0.0
    %910 = vmatpush1.msra.mxu0 0.0
    %911 = vmatprep.subr.mxu0 0.0
    %912 = vmatpush1.msra.mxu0 0.0
    %913 = vmatprep.subr.mxu0 0.0
    %914 = vmatpush1.msra.mxu0 0.0
    %915 = vmatprep.mubr.f32.mxu0 0.0
    %916 = vmatmul.mubr.f32.gmra.mrb[0].mxu0 %v849
    %v917 = vpop.f32.mrb[0].mxu0
    %v918 = vadd.f32 0.0, %v917
    %v919 = vpop.f32.mrb[0].mxu0
    %920 = vdwg.mxu0
    %v921 = vadd.f32 %v848, %v918
    %v922 = vxor.u32 %v921, 2147483648
    %v923 = vmul.f32 %v922, 1.442695
    %v924 = vpow.pop %v923
    %v925 = vadd.f32 %v924, 1.0
    %v926 = vrcp.pop %v925
    %v927 = vmul.f32 1.0, %v926
    %v928 = vtanh.pop %v921
    %v929 = vmul.f32 %v927, %v834
    %931 = vrot.lane.b32.xlu0 %v928, 32
    %v932 = vpop.permute.xlu0 %931
    %v934 = vmul.f32 %v927, %v932
    %936 = vrot.lane.b32.xlu0 %v934, 32
    %v937 = vpop.permute.xlu0 %936
    %v939 = vadd.f32 %v929, %v937
    %v940 = vtanh.pop %v939
    %942 = vrot.lane.b32.xlu0 %v940, 32
    %v943 = vpop.permute.xlu0 %942
    %v945 = vmul.f32 %v927, %v943
    %947 = vrot.lane.b32.xlu0 %v945, 64
    %v948 = vpop.permute.xlu0 %947
    %s950 = scalar_lea.vmem [#allocation2], 48
    %951 = vst.msk [vmem:[%s950] sm:$0xff] %vm71, %v948
    %s952 = scalar_lea.vmem [#allocation3], 56
    %v953 = vld [vmem:[%s952] sm:$0xff]
    %v954 = vsel %vm71, %v948, 0
    %956 = vmatprep.subr.mxu0 0.0
    %957 = vmatpush1.msra.mxu0 %v51
    %958 = vmatprep.subr.mxu0 0.0
    %959 = vmatpush1.msra.mxu0 %v52
    %960 = vmatprep.subr.mxu0 0.0
    %961 = vmatpush1.msra.mxu0 %v53
    %962 = vmatprep.subr.mxu0 0.0
    %963 = vmatpush1.msra.mxu0 %v54
    %964 = vmatprep.subr.mxu0 0.0
    %965 = vmatpush1.msra.mxu0 0.0
    %966 = vmatprep.subr.mxu0 0.0
    %967 = vmatpush1.msra.mxu0 0.0
    %968 = vmatprep.subr.mxu0 0.0
    %969 = vmatpush1.msra.mxu0 0.0
    %970 = vmatprep.subr.mxu0 0.0
    %971 = vmatpush1.msra.mxu0 0.0
    %972 = vmatprep.subr.mxu0 0.0
    %973 = vmatpush1.msra.mxu0 0.0
    %974 = vmatprep.subr.mxu0 0.0
    %975 = vmatpush1.msra.mxu0 0.0
    %976 = vmatprep.subr.mxu0 0.0
    %977 = vmatpush1.msra.mxu0 0.0
    %978 = vmatprep.subr.mxu0 0.0
    %979 = vmatpush1.msra.mxu0 0.0
    %980 = vmatprep.subr.mxu0 0.0
    %981 = vmatpush1.msra.mxu0 0.0
    %982 = vmatprep.subr.mxu0 0.0
    %983 = vmatpush1.msra.mxu0 0.0
    %984 = vmatprep.subr.mxu0 0.0
    %985 = vmatpush1.msra.mxu0 0.0
    %986 = vmatprep.subr.mxu0 0.0
    %987 = vmatpush1.msra.mxu0 0.0
    %988 = vmatprep.subr.mxu0 0.0
    %989 = vmatpush1.msra.mxu0 0.0
    %990 = vmatprep.subr.mxu0 0.0
    %991 = vmatpush1.msra.mxu0 0.0
    %992 = vmatprep.subr.mxu0 0.0
    %993 = vmatpush1.msra.mxu0 0.0
    %994 = vmatprep.subr.mxu0 0.0
    %995 = vmatpush1.msra.mxu0 0.0
    %996 = vmatprep.subr.mxu0 0.0
    %997 = vmatpush1.msra.mxu0 0.0
    %998 = vmatprep.subr.mxu0 0.0
    %999 = vmatpush1.msra.mxu0 0.0
    %1000 = vmatprep.subr.mxu0 0.0
    %1001 = vmatpush1.msra.mxu0 0.0
    %1002 = vmatprep.subr.mxu0 0.0
    %1003 = vmatpush1.msra.mxu0 0.0
    %1004 = vmatprep.subr.mxu0 0.0
    %1005 = vmatpush1.msra.mxu0 0.0
    %1006 = vmatprep.subr.mxu0 0.0
    %1007 = vmatpush1.msra.mxu0 0.0
    %1008 = vmatprep.subr.mxu0 0.0
    %1009 = vmatpush1.msra.mxu0 0.0
    %1010 = vmatprep.subr.mxu0 0.0
    %1011 = vmatpush1.msra.mxu0 0.0
    %1012 = vmatprep.subr.mxu0 0.0
    %1013 = vmatpush1.msra.mxu0 0.0
    %1014 = vmatprep.subr.mxu0 0.0
    %1015 = vmatpush1.msra.mxu0 0.0
    %1016 = vmatprep.subr.mxu0 0.0
    %1017 = vmatpush1.msra.mxu0 0.0
    %1018 = vmatprep.subr.mxu0 0.0
    %1019 = vmatpush1.msra.mxu0 0.0
    %1020 = vmatprep.mubr.f32.mxu0 0.0
    %1021 = vmatmul.mubr.f32.gmra.mrb[0].mxu0 %v954
    %v1022 = vpop.f32.mrb[0].mxu0
    %v1023 = vadd.f32 0.0, %v1022
    %v1024 = vpop.f32.mrb[0].mxu0
    %1025 = vdwg.mxu0
    %v1026 = vadd.f32 %v953, %v1023
    %v1027 = vxor.u32 %v1026, 2147483648
    %v1028 = vmul.f32 %v1027, 1.442695
    %v1029 = vpow.pop %v1028
    %v1030 = vadd.f32 %v1029, 1.0
    %v1031 = vrcp.pop %v1030
    %v1032 = vmul.f32 1.0, %v1031
    %v1033 = vtanh.pop %v1026
    %v1034 = vmul.f32 %v1032, %v939
    %1036 = vrot.lane.b32.xlu0 %v1033, 32
    %v1037 = vpop.permute.xlu0 %1036
    %v1039 = vmul.f32 %v1032, %v1037
    %1041 = vrot.lane.b32.xlu0 %v1039, 32
    %v1042 = vpop.permute.xlu0 %1041
    %v1044 = vadd.f32 %v1034, %v1042
    %v1045 = vtanh.pop %v1044
    %1047 = vrot.lane.b32.xlu0 %v1045, 32
    %v1048 = vpop.permute.xlu0 %1047
    %v1050 = vmul.f32 %v1032, %v1048
    %1052 = vrot.lane.b32.xlu0 %v1050, 64
    %v1053 = vpop.permute.xlu0 %1052
    %s1055 = scalar_lea.vmem [#allocation2], 56
    %1056 = vst.msk [vmem:[%s1055] sm:$0xff] %vm71, %v1053
    %s1057 = scalar_lea.vmem [#allocation3], 64
    %v1058 = vld [vmem:[%s1057] sm:$0xff]
    %v1059 = vsel %vm71, %v1053, 0
    %1061 = vmatprep.subr.mxu0 0.0
    %1062 = vmatpush1.msra.mxu0 %v51
    %1063 = vmatprep.subr.mxu0 0.0
    %1064 = vmatpush1.msra.mxu0 %v52
    %1065 = vmatprep.subr.mxu0 0.0
    %1066 = vmatpush1.msra.mxu0 %v53
    %1067 = vmatprep.subr.mxu0 0.0
    %1068 = vmatpush1.msra.mxu0 %v54
    %1069 = vmatprep.subr.mxu0 0.0
    %1070 = vmatpush1.msra.mxu0 0.0
    %1071 = vmatprep.subr.mxu0 0.0
    %1072 = vmatpush1.msra.mxu0 0.0
    %1073 = vmatprep.subr.mxu0 0.0
    %1074 = vmatpush1.msra.mxu0 0.0
    %1075 = vmatprep.subr.mxu0 0.0
    %1076 = vmatpush1.msra.mxu0 0.0
    %1077 = vmatprep.subr.mxu0 0.0
    %1078 = vmatpush1.msra.mxu0 0.0
    %1079 = vmatprep.subr.mxu0 0.0
    %1080 = vmatpush1.msra.mxu0 0.0
    %1081 = vmatprep.subr.mxu0 0.0
    %1082 = vmatpush1.msra.mxu0 0.0
    %1083 = vmatprep.subr.mxu0 0.0
    %1084 = vmatpush1.msra.mxu0 0.0
    %1085 = vmatprep.subr.mxu0 0.0
    %1086 = vmatpush1.msra.mxu0 0.0
    %1087 = vmatprep.subr.mxu0 0.0
    %1088 = vmatpush1.msra.mxu0 0.0
    %1089 = vmatprep.subr.mxu0 0.0
    %1090 = vmatpush1.msra.mxu0 0.0
    %1091 = vmatprep.subr.mxu0 0.0
    %1092 = vmatpush1.msra.mxu0 0.0
    %1093 = vmatprep.subr.mxu0 0.0
    %1094 = vmatpush1.msra.mxu0 0.0
    %1095 = vmatprep.subr.mxu0 0.0
    %1096 = vmatpush1.msra.mxu0 0.0
    %1097 = vmatprep.subr.mxu0 0.0
    %1098 = vmatpush1.msra.mxu0 0.0
    %1099 = vmatprep.subr.mxu0 0.0
    %1100 = vmatpush1.msra.mxu0 0.0
    %1101 = vmatprep.subr.mxu0 0.0
    %1102 = vmatpush1.msra.mxu0 0.0
    %1103 = vmatprep.subr.mxu0 0.0
    %1104 = vmatpush1.msra.mxu0 0.0
    %1105 = vmatprep.subr.mxu0 0.0
    %1106 = vmatpush1.msra.mxu0 0.0
    %1107 = vmatprep.subr.mxu0 0.0
    %1108 = vmatpush1.msra.mxu0 0.0
    %1109 = vmatprep.subr.mxu0 0.0
    %1110 = vmatpush1.msra.mxu0 0.0
    %1111 = vmatprep.subr.mxu0 0.0
    %1112 = vmatpush1.msra.mxu0 0.0
    %1113 = vmatprep.subr.mxu0 0.0
    %1114 = vmatpush1.msra.mxu0 0.0
    %1115 = vmatprep.subr.mxu0 0.0
    %1116 = vmatpush1.msra.mxu0 0.0
    %1117 = vmatprep.subr.mxu0 0.0
    %1118 = vmatpush1.msra.mxu0 0.0
    %1119 = vmatprep.subr.mxu0 0.0
    %1120 = vmatpush1.msra.mxu0 0.0
    %1121 = vmatprep.subr.mxu0 0.0
    %1122 = vmatpush1.msra.mxu0 0.0
    %1123 = vmatprep.subr.mxu0 0.0
    %1124 = vmatpush1.msra.mxu0 0.0
    %1125 = vmatprep.mubr.f32.mxu0 0.0
    %1126 = vmatmul.mubr.f32.gmra.mrb[0].mxu0 %v1059
    %v1127 = vpop.f32.mrb[0].mxu0
    %v1128 = vadd.f32 0.0, %v1127
    %v1129 = vpop.f32.mrb[0].mxu0
    %1130 = vdwg.mxu0
    %v1131 = vadd.f32 %v1058, %v1128
    %v1132 = vxor.u32 %v1131, 2147483648
    %v1133 = vmul.f32 %v1132, 1.442695
    %v1134 = vpow.pop %v1133
    %v1135 = vadd.f32 %v1134, 1.0
    %v1136 = vrcp.pop %v1135
    %v1137 = vmul.f32 1.0, %v1136
    %v1138 = vtanh.pop %v1131
    %v1139 = vmul.f32 %v1137, %v1044
    %1141 = vrot.lane.b32.xlu0 %v1138, 32
    %v1142 = vpop.permute.xlu0 %1141
    %v1144 = vmul.f32 %v1137, %v1142
    %1146 = vrot.lane.b32.xlu0 %v1144, 32
    %v1147 = vpop.permute.xlu0 %1146
    %v1149 = vadd.f32 %v1139, %v1147
    %v1150 = vtanh.pop %v1149
    %1152 = vrot.lane.b32.xlu0 %v1150, 32
    %v1153 = vpop.permute.xlu0 %1152
    %v1155 = vmul.f32 %v1137, %v1153
    %1157 = vrot.lane.b32.xlu0 %v1155, 64
    %v1158 = vpop.permute.xlu0 %1157
    %s1160 = scalar_lea.vmem [#allocation2], 64
    %1161 = vst.msk [vmem:[%s1160] sm:$0xff] %vm71, %v1158
    %v1162 = vld [vmem:[%s4] sm:$0xff]
    %v1163 = vld [vmem:[%s4 + $0x8] sm:$0xff]
    %v1164 = vld [vmem:[%s4 + $0x10] sm:$0xff]
    %v1165 = vld [vmem:[%s4 + $0x18] sm:$0xff]
    %v1166 = vld [vmem:[#allocation4] sm:$0xff]
    %v1167 = vld [vmem:[#allocation4 + $0x8] sm:$0xff]
    %v1168 = vld [vmem:[#allocation4 + $0x10] sm:$0xff]
    %v1169 = vld [vmem:[#allocation4 + $0x18] sm:$0xff]
    %v1170 = vld [vmem:[%s6] sm:$0x1]
    %v1171 = vld [vmem:[#allocation2] sm:$0xff]
    %v1172 = vld [vmem:[#allocation2 + $0x8] sm:$0xff]
    %v1173 = vld [vmem:[#allocation2 + $0x10] sm:$0xff]
    %v1174 = vld [vmem:[#allocation2 + $0x18] sm:$0xff]
    %v1175 = vld [vmem:[#allocation2 + $0x20] sm:$0xff]
    %v1176 = vld [vmem:[#allocation2 + $0x28] sm:$0xff]
    %v1177 = vld [vmem:[#allocation2 + $0x30] sm:$0xff]
    %v1178 = vld [vmem:[#allocation2 + $0x38] sm:$0xff]
    %v1179 = vld [vmem:[#allocation2 + $0x40] sm:$0xff]
    %v1181 = vlaneseq
    %v1182 = vshrl.u32 %v1181, 7
    %v1183 = vsub.s32 0, %v1182
    %v1184 = vrot.slane %v1170, %v1183
    %v1187 = vsel %vm71, %v1171, 0
    %v1190 = vsel %vm71, %v1172, 0
    %v1193 = vsel %vm71, %v1173, 0
    %v1196 = vsel %vm71, %v1174, 0
    %v1199 = vsel %vm71, %v1175, 0
    %v1202 = vsel %vm71, %v1176, 0
    %v1205 = vsel %vm71, %v1177, 0
    %v1208 = vsel %vm71, %v1178, 0
    %v1211 = vsel %vm71, %v1179, 0
    %1213 = vmatprep.subr.mxu0 0.0
    %1214 = vmatpush1.msra.mxu0 %v1162
    %1215 = vmatprep.subr.mxu0 0.0
    %1216 = vmatpush1.msra.mxu0 %v1163
    %1217 = vmatprep.subr.mxu0 0.0
    %1218 = vmatpush1.msra.mxu0 %v1164
    %1219 = vmatprep.subr.mxu0 0.0
    %1220 = vmatpush1.msra.mxu0 %v1165
    %1221 = vmatprep.subr.mxu0 0.0
    %1222 = vmatpush1.msra.mxu0 0.0
    %1223 = vmatprep.subr.mxu0 0.0
    %1224 = vmatpush1.msra.mxu0 0.0
    %1225 = vmatprep.subr.mxu0 0.0
    %1226 = vmatpush1.msra.mxu0 0.0
    %1227 = vmatprep.subr.mxu0 0.0
    %1228 = vmatpush1.msra.mxu0 0.0
    %1229 = vmatprep.subr.mxu0 0.0
    %1230 = vmatpush1.msra.mxu0 0.0
    %1231 = vmatprep.subr.mxu0 0.0
    %1232 = vmatpush1.msra.mxu0 0.0
    %1233 = vmatprep.subr.mxu0 0.0
    %1234 = vmatpush1.msra.mxu0 0.0
    %1235 = vmatprep.subr.mxu0 0.0
    %1236 = vmatpush1.msra.mxu0 0.0
    %1237 = vmatprep.subr.mxu0 0.0
    %1238 = vmatpush1.msra.mxu0 0.0
    %1239 = vmatprep.subr.mxu0 0.0
    %1240 = vmatpush1.msra.mxu0 0.0
    %1241 = vmatprep.subr.mxu0 0.0
    %1242 = vmatpush1.msra.mxu0 0.0
    %1243 = vmatprep.subr.mxu0 0.0
    %1244 = vmatpush1.msra.mxu0 0.0
    %1245 = vmatprep.subr.mxu0 0.0
    %1246 = vmatpush1.msra.mxu0 0.0
    %1247 = vmatprep.subr.mxu0 0.0
    %1248 = vmatpush1.msra.mxu0 0.0
    %1249 = vmatprep.subr.mxu0 0.0
    %1250 = vmatpush1.msra.mxu0 0.0
    %1251 = vmatprep.subr.mxu0 0.0
    %1252 = vmatpush1.msra.mxu0 0.0
    %1253 = vmatprep.subr.mxu0 0.0
    %1254 = vmatpush1.msra.mxu0 0.0
    %1255 = vmatprep.subr.mxu0 0.0
    %1256 = vmatpush1.msra.mxu0 0.0
    %1257 = vmatprep.subr.mxu0 0.0
    %1258 = vmatpush1.msra.mxu0 0.0
    %1259 = vmatprep.subr.mxu0 0.0
    %1260 = vmatpush1.msra.mxu0 0.0
    %1261 = vmatprep.subr.mxu0 0.0
    %1262 = vmatpush1.msra.mxu0 0.0
    %1263 = vmatprep.subr.mxu0 0.0
    %1264 = vmatpush1.msra.mxu0 0.0
    %1265 = vmatprep.subr.mxu0 0.0
    %1266 = vmatpush1.msra.mxu0 0.0
    %1267 = vmatprep.subr.mxu0 0.0
    %1268 = vmatpush1.msra.mxu0 0.0
    %1269 = vmatprep.subr.mxu0 0.0
    %1270 = vmatpush1.msra.mxu0 0.0
    %1271 = vmatprep.subr.mxu0 0.0
    %1272 = vmatpush1.msra.mxu0 0.0
    %1273 = vmatprep.subr.mxu0 0.0
    %1274 = vmatpush1.msra.mxu0 0.0
    %1275 = vmatprep.subr.mxu0 0.0
    %1276 = vmatpush1.msra.mxu0 0.0
    %1277 = vmatprep.mubr.f32.mxu0 0.0
    %1278 = vmatmul.mubr.f32.gmra.mrb[0].mxu0 %v1187
    %v1279 = vpop.f32.mrb[0].mxu0
    %v1280 = vadd.f32 %v1184, %v1279
    %v1281 = vpop.f32.mrb[0].mxu0
    %1282 = vmatprep.mubr.f32.mxu0 0.0
    %1283 = vmatmul.mubr.f32.gmra.mrb[0].mxu0 %v1190
    %v1284 = vpop.f32.mrb[0].mxu0
    %v1285 = vadd.f32 %v1184, %v1284
    %v1286 = vpop.f32.mrb[0].mxu0
    %1287 = vmatprep.mubr.f32.mxu0 0.0
    %1288 = vmatmul.mubr.f32.gmra.mrb[0].mxu0 %v1193
    %v1289 = vpop.f32.mrb[0].mxu0
    %v1290 = vadd.f32 %v1184, %v1289
    %v1291 = vpop.f32.mrb[0].mxu0
    %1292 = vmatprep.mubr.f32.mxu0 0.0
    %1293 = vmatmul.mubr.f32.gmra.mrb[0].mxu0 %v1196
    %v1294 = vpop.f32.mrb[0].mxu0
    %v1295 = vadd.f32 %v1184, %v1294
    %v1296 = vpop.f32.mrb[0].mxu0
    %1297 = vmatprep.mubr.f32.mxu0 0.0
    %1298 = vmatmul.mubr.f32.gmra.mrb[0].mxu0 %v1199
    %v1299 = vpop.f32.mrb[0].mxu0
    %v1300 = vadd.f32 %v1184, %v1299
    %v1301 = vpop.f32.mrb[0].mxu0
    %1302 = vmatprep.mubr.f32.mxu0 0.0
    %1303 = vmatmul.mubr.f32.gmra.mrb[0].mxu0 %v1202
    %v1304 = vpop.f32.mrb[0].mxu0
    %v1305 = vadd.f32 %v1184, %v1304
    %v1306 = vpop.f32.mrb[0].mxu0
    %1307 = vmatprep.mubr.f32.mxu0 0.0
    %1308 = vmatmul.mubr.f32.gmra.mrb[0].mxu0 %v1205
    %v1309 = vpop.f32.mrb[0].mxu0
    %v1310 = vadd.f32 %v1184, %v1309
    %v1311 = vpop.f32.mrb[0].mxu0
    %1312 = vmatprep.mubr.f32.mxu0 0.0
    %1313 = vmatmul.mubr.f32.gmra.mrb[0].mxu0 %v1208
    %v1314 = vpop.f32.mrb[0].mxu0
    %v1315 = vadd.f32 %v1184, %v1314
    %v1316 = vpop.f32.mrb[0].mxu0
    %1317 = vmatprep.mubr.f32.mxu0 0.0
    %1318 = vmatmul.mubr.f32.gmra.mrb[0].mxu0 %v1211
    %v1319 = vpop.f32.mrb[0].mxu0
    %v1320 = vadd.f32 %v1184, %v1319
    %v1321 = vpop.f32.mrb[0].mxu0
    %1322 = vdwg.mxu0
    %1323 = vst [vmem:[#allocation3] sm:$0xff] %v1280
    %1324 = vst [vmem:[#allocation3 + $0x8] sm:$0xff] %v1285
    %1325 = vst [vmem:[#allocation3 + $0x10] sm:$0xff] %v1290
    %1326 = vst [vmem:[#allocation3 + $0x18] sm:$0xff] %v1295
    %1327 = vst [vmem:[#allocation3 + $0x20] sm:$0xff] %v1300
    %1328 = vst [vmem:[#allocation3 + $0x28] sm:$0xff] %v1305
    %1329 = vst [vmem:[#allocation3 + $0x30] sm:$0xff] %v1310
    %1330 = vst [vmem:[#allocation3 + $0x38] sm:$0xff] %v1315
    %1331 = vst [vmem:[#allocation3 + $0x40] sm:$0xff] %v1320
    %v1332 = vld [vmem:[#allocation3] sm:$0xff]
    %1333 = vmatprep.subr.mxu0 0.0
    %1334 = vmatpush1.msra.mxu0 %v1166
    %1335 = vmatprep.subr.mxu0 0.0
    %1336 = vmatpush1.msra.mxu0 %v1167
    %1337 = vmatprep.subr.mxu0 0.0
    %1338 = vmatpush1.msra.mxu0 %v1168
    %1339 = vmatprep.subr.mxu0 0.0
    %1340 = vmatpush1.msra.mxu0 %v1169
    %1341 = vmatprep.subr.mxu0 0.0
    %1342 = vmatpush1.msra.mxu0 0.0
    %1343 = vmatprep.subr.mxu0 0.0
    %1344 = vmatpush1.msra.mxu0 0.0
    %1345 = vmatprep.subr.mxu0 0.0
    %1346 = vmatpush1.msra.mxu0 0.0
    %1347 = vmatprep.subr.mxu0 0.0
    %1348 = vmatpush1.msra.mxu0 0.0
    %1349 = vmatprep.subr.mxu0 0.0
    %1350 = vmatpush1.msra.mxu0 0.0
    %1351 = vmatprep.subr.mxu0 0.0
    %1352 = vmatpush1.msra.mxu0 0.0
    %1353 = vmatprep.subr.mxu0 0.0
    %1354 = vmatpush1.msra.mxu0 0.0
    %1355 = vmatprep.subr.mxu0 0.0
    %1356 = vmatpush1.msra.mxu0 0.0
    %1357 = vmatprep.subr.mxu0 0.0
    %1358 = vmatpush1.msra.mxu0 0.0
    %1359 = vmatprep.subr.mxu0 0.0
    %1360 = vmatpush1.msra.mxu0 0.0
    %1361 = vmatprep.subr.mxu0 0.0
    %1362 = vmatpush1.msra.mxu0 0.0
    %1363 = vmatprep.subr.mxu0 0.0
    %1364 = vmatpush1.msra.mxu0 0.0
    %1365 = vmatprep.subr.mxu0 0.0
    %1366 = vmatpush1.msra.mxu0 0.0
    %1367 = vmatprep.subr.mxu0 0.0
    %1368 = vmatpush1.msra.mxu0 0.0
    %1369 = vmatprep.subr.mxu0 0.0
    %1370 = vmatpush1.msra.mxu0 0.0
    %1371 = vmatprep.subr.mxu0 0.0
    %1372 = vmatpush1.msra.mxu0 0.0
    %1373 = vmatprep.subr.mxu0 0.0
    %1374 = vmatpush1.msra.mxu0 0.0
    %1375 = vmatprep.subr.mxu0 0.0
    %1376 = vmatpush1.msra.mxu0 0.0
    %1377 = vmatprep.subr.mxu0 0.0
    %1378 = vmatpush1.msra.mxu0 0.0
    %1379 = vmatprep.subr.mxu0 0.0
    %1380 = vmatpush1.msra.mxu0 0.0
    %1381 = vmatprep.subr.mxu0 0.0
    %1382 = vmatpush1.msra.mxu0 0.0
    %1383 = vmatprep.subr.mxu0 0.0
    %1384 = vmatpush1.msra.mxu0 0.0
    %1385 = vmatprep.subr.mxu0 0.0
    %1386 = vmatpush1.msra.mxu0 0.0
    %1387 = vmatprep.subr.mxu0 0.0
    %1388 = vmatpush1.msra.mxu0 0.0
    %1389 = vmatprep.subr.mxu0 0.0
    %1390 = vmatpush1.msra.mxu0 0.0
    %1391 = vmatprep.subr.mxu0 0.0
    %1392 = vmatpush1.msra.mxu0 0.0
    %1393 = vmatprep.subr.mxu0 0.0
    %1394 = vmatpush1.msra.mxu0 0.0
    %1395 = vmatprep.subr.mxu0 0.0
    %1396 = vmatpush1.msra.mxu0 0.0
    %1397 = vmatprep.mubr.f32.mxu0 0.0
    %1398 = vmatmul.mubr.f32.gmra.mrb[0].mxu0 %v220
    %v1399 = vpop.f32.mrb[0].mxu0
    %v1400 = vadd.f32 0.0, %v1399
    %v1401 = vpop.f32.mrb[0].mxu0
    %1402 = vdwg.mxu0
    %v1403 = vadd.f32 %v1332, %v1400
    %v1404 = vxor.u32 %v1403, 2147483648
    %v1405 = vmul.f32 %v1404, 1.442695
    %v1406 = vpow.pop %v1405
    %v1407 = vadd.f32 %v1406, 1.0
    %v1408 = vrcp.pop %v1407
    %v1409 = vmul.f32 1.0, %v1408
    %v1410 = vtanh.pop %v1403
    %v1411 = vmul.f32 %v1409, 0.0
    %1413 = vrot.lane.b32.xlu0 %v1410, 32
    %v1414 = vpop.permute.xlu0 %1413
    %v1416 = vmul.f32 %v1409, %v1414
    %1418 = vrot.lane.b32.xlu0 %v1416, 32
    %v1419 = vpop.permute.xlu0 %1418
    %v1421 = vadd.f32 %v1411, %v1419
    %v1422 = vtanh.pop %v1421
    %1424 = vrot.lane.b32.xlu0 %v1422, 32
    %v1425 = vpop.permute.xlu0 %1424
    %v1427 = vmul.f32 %v1409, %v1425
    %1429 = vrot.lane.b32.xlu0 %v1427, 64
    %v1430 = vpop.permute.xlu0 %1429
    %1432 = vst.msk [vmem:[#allocation2] sm:$0xff] %vm71, %v1430
    %v1433 = vld [vmem:[%s322] sm:$0xff]
    %v1434 = vsel %vm71, %v1430, 0
    %1436 = vmatprep.subr.mxu0 0.0
    %1437 = vmatpush1.msra.mxu0 %v1166
    %1438 = vmatprep.subr.mxu0 0.0
    %1439 = vmatpush1.msra.mxu0 %v1167
    %1440 = vmatprep.subr.mxu0 0.0
    %1441 = vmatpush1.msra.mxu0 %v1168
    %1442 = vmatprep.subr.mxu0 0.0
    %1443 = vmatpush1.msra.mxu0 %v1169
    %1444 = vmatprep.subr.mxu0 0.0
    %1445 = vmatpush1.msra.mxu0 0.0
    %1446 = vmatprep.subr.mxu0 0.0
    %1447 = vmatpush1.msra.mxu0 0.0
    %1448 = vmatprep.subr.mxu0 0.0
    %1449 = vmatpush1.msra.mxu0 0.0
    %1450 = vmatprep.subr.mxu0 0.0
    %1451 = vmatpush1.msra.mxu0 0.0
    %1452 = vmatprep.subr.mxu0 0.0
    %1453 = vmatpush1.msra.mxu0 0.0
    %1454 = vmatprep.subr.mxu0 0.0
    %1455 = vmatpush1.msra.mxu0 0.0
    %1456 = vmatprep.subr.mxu0 0.0
    %1457 = vmatpush1.msra.mxu0 0.0
    %1458 = vmatprep.subr.mxu0 0.0
    %1459 = vmatpush1.msra.mxu0 0.0
    %1460 = vmatprep.subr.mxu0 0.0
    %1461 = vmatpush1.msra.mxu0 0.0
    %1462 = vmatprep.subr.mxu0 0.0
    %1463 = vmatpush1.msra.mxu0 0.0
    %1464 = vmatprep.subr.mxu0 0.0
    %1465 = vmatpush1.msra.mxu0 0.0
    %1466 = vmatprep.subr.mxu0 0.0
    %1467 = vmatpush1.msra.mxu0 0.0
    %1468 = vmatprep.subr.mxu0 0.0
    %1469 = vmatpush1.msra.mxu0 0.0
    %1470 = vmatprep.subr.mxu0 0.0
    %1471 = vmatpush1.msra.mxu0 0.0
    %1472 = vmatprep.subr.mxu0 0.0
    %1473 = vmatpush1.msra.mxu0 0.0
    %1474 = vmatprep.subr.mxu0 0.0
    %1475 = vmatpush1.msra.mxu0 0.0
    %1476 = vmatprep.subr.mxu0 0.0
    %1477 = vmatpush1.msra.mxu0 0.0
    %1478 = vmatprep.subr.mxu0 0.0
    %1479 = vmatpush1.msra.mxu0 0.0
    %1480 = vmatprep.subr.mxu0 0.0
    %1481 = vmatpush1.msra.mxu0 0.0
    %1482 = vmatprep.subr.mxu0 0.0
    %1483 = vmatpush1.msra.mxu0 0.0
    %1484 = vmatprep.subr.mxu0 0.0
    %1485 = vmatpush1.msra.mxu0 0.0
    %1486 = vmatprep.subr.mxu0 0.0
    %1487 = vmatpush1.msra.mxu0 0.0
    %1488 = vmatprep.subr.mxu0 0.0
    %1489 = vmatpush1.msra.mxu0 0.0
    %1490 = vmatprep.subr.mxu0 0.0
    %1491 = vmatpush1.msra.mxu0 0.0
    %1492 = vmatprep.subr.mxu0 0.0
    %1493 = vmatpush1.msra.mxu0 0.0
    %1494 = vmatprep.subr.mxu0 0.0
    %1495 = vmatpush1.msra.mxu0 0.0
    %1496 = vmatprep.subr.mxu0 0.0
    %1497 = vmatpush1.msra.mxu0 0.0
    %1498 = vmatprep.subr.mxu0 0.0
    %1499 = vmatpush1.msra.mxu0 0.0
    %1500 = vmatprep.mubr.f32.mxu0 0.0
    %1501 = vmatmul.mubr.f32.gmra.mrb[0].mxu0 %v1434
    %v1502 = vpop.f32.mrb[0].mxu0
    %v1503 = vadd.f32 0.0, %v1502
    %v1504 = vpop.f32.mrb[0].mxu0
    %1505 = vdwg.mxu0
    %v1506 = vadd.f32 %v1433, %v1503
    %v1507 = vxor.u32 %v1506, 2147483648
    %v1508 = vmul.f32 %v1507, 1.442695
    %v1509 = vpow.pop %v1508
    %v1510 = vadd.f32 %v1509, 1.0
    %v1511 = vrcp.pop %v1510
    %v1512 = vmul.f32 1.0, %v1511
    %v1513 = vtanh.pop %v1506
    %v1514 = vmul.f32 %v1512, %v1421
    %1516 = vrot.lane.b32.xlu0 %v1513, 32
    %v1517 = vpop.permute.xlu0 %1516
    %v1519 = vmul.f32 %v1512, %v1517
    %1521 = vrot.lane.b32.xlu0 %v1519, 32
    %v1522 = vpop.permute.xlu0 %1521
    %v1524 = vadd.f32 %v1514, %v1522
    %v1525 = vtanh.pop %v1524
    %1527 = vrot.lane.b32.xlu0 %v1525, 32
    %v1528 = vpop.permute.xlu0 %1527
    %v1530 = vmul.f32 %v1512, %v1528
    %1532 = vrot.lane.b32.xlu0 %v1530, 64
    %v1533 = vpop.permute.xlu0 %1532
    %1535 = vst.msk [vmem:[%s425] sm:$0xff] %vm71, %v1533
    %v1536 = vld [vmem:[%s427] sm:$0xff]
    %v1537 = vsel %vm71, %v1533, 0
    %1539 = vmatprep.subr.mxu0 0.0
    %1540 = vmatpush1.msra.mxu0 %v1166
    %1541 = vmatprep.subr.mxu0 0.0
    %1542 = vmatpush1.msra.mxu0 %v1167
    %1543 = vmatprep.subr.mxu0 0.0
    %1544 = vmatpush1.msra.mxu0 %v1168
    %1545 = vmatprep.subr.mxu0 0.0
    %1546 = vmatpush1.msra.mxu0 %v1169
    %1547 = vmatprep.subr.mxu0 0.0
    %1548 = vmatpush1.msra.mxu0 0.0
    %1549 = vmatprep.subr.mxu0 0.0
    %1550 = vmatpush1.msra.mxu0 0.0
    %1551 = vmatprep.subr.mxu0 0.0
    %1552 = vmatpush1.msra.mxu0 0.0
    %1553 = vmatprep.subr.mxu0 0.0
    %1554 = vmatpush1.msra.mxu0 0.0
    %1555 = vmatprep.subr.mxu0 0.0
    %1556 = vmatpush1.msra.mxu0 0.0
    %1557 = vmatprep.subr.mxu0 0.0
    %1558 = vmatpush1.msra.mxu0 0.0
    %1559 = vmatprep.subr.mxu0 0.0
    %1560 = vmatpush1.msra.mxu0 0.0
    %1561 = vmatprep.subr.mxu0 0.0
    %1562 = vmatpush1.msra.mxu0 0.0
    %1563 = vmatprep.subr.mxu0 0.0
    %1564 = vmatpush1.msra.mxu0 0.0
    %1565 = vmatprep.subr.mxu0 0.0
    %1566 = vmatpush1.msra.mxu0 0.0
    %1567 = vmatprep.subr.mxu0 0.0
    %1568 = vmatpush1.msra.mxu0 0.0
    %1569 = vmatprep.subr.mxu0 0.0
    %1570 = vmatpush1.msra.mxu0 0.0
    %1571 = vmatprep.subr.mxu0 0.0
    %1572 = vmatpush1.msra.mxu0 0.0
    %1573 = vmatprep.subr.mxu0 0.0
    %1574 = vmatpush1.msra.mxu0 0.0
    %1575 = vmatprep.subr.mxu0 0.0
    %1576 = vmatpush1.msra.mxu0 0.0
    %1577 = vmatprep.subr.mxu0 0.0
    %1578 = vmatpush1.msra.mxu0 0.0
    %1579 = vmatprep.subr.mxu0 0.0
    %1580 = vmatpush1.msra.mxu0 0.0
    %1581 = vmatprep.subr.mxu0 0.0
    %1582 = vmatpush1.msra.mxu0 0.0
    %1583 = vmatprep.subr.mxu0 0.0
    %1584 = vmatpush1.msra.mxu0 0.0
    %1585 = vmatprep.subr.mxu0 0.0
    %1586 = vmatpush1.msra.mxu0 0.0
    %1587 = vmatprep.subr.mxu0 0.0
    %1588 = vmatpush1.msra.mxu0 0.0
    %1589 = vmatprep.subr.mxu0 0.0
    %1590 = vmatpush1.msra.mxu0 0.0
    %1591 = vmatprep.subr.mxu0 0.0
    %1592 = vmatpush1.msra.mxu0 0.0
    %1593 = vmatprep.subr.mxu0 0.0
    %1594 = vmatpush1.msra.mxu0 0.0
    %1595 = vmatprep.subr.mxu0 0.0
    %1596 = vmatpush1.msra.mxu0 0.0
    %1597 = vmatprep.subr.mxu0 0.0
    %1598 = vmatpush1.msra.mxu0 0.0
    %1599 = vmatprep.subr.mxu0 0.0
    %1600 = vmatpush1.msra.mxu0 0.0
    %1601 = vmatprep.subr.mxu0 0.0
    %1602 = vmatpush1.msra.mxu0 0.0
    %1603 = vmatprep.mubr.f32.mxu0 0.0
    %1604 = vmatmul.mubr.f32.gmra.mrb[0].mxu0 %v1537
    %v1605 = vpop.f32.mrb[0].mxu0
    %v1606 = vadd.f32 0.0, %v1605
    %v1607 = vpop.f32.mrb[0].mxu0
    %1608 = vdwg.mxu0
    %v1609 = vadd.f32 %v1536, %v1606
    %v1610 = vxor.u32 %v1609, 2147483648
    %v1611 = vmul.f32 %v1610, 1.442695
    %v1612 = vpow.pop %v1611
    %v1613 = vadd.f32 %v1612, 1.0
    %v1614 = vrcp.pop %v1613
    %v1615 = vmul.f32 1.0, %v1614
    %v1616 = vtanh.pop %v1609
    %v1617 = vmul.f32 %v1615, %v1524
    %1619 = vrot.lane.b32.xlu0 %v1616, 32
    %v1620 = vpop.permute.xlu0 %1619
    %v1622 = vmul.f32 %v1615, %v1620
    %1624 = vrot.lane.b32.xlu0 %v1622, 32
    %v1625 = vpop.permute.xlu0 %1624
    %v1627 = vadd.f32 %v1617, %v1625
    %v1628 = vtanh.pop %v1627
    %1630 = vrot.lane.b32.xlu0 %v1628, 32
    %v1631 = vpop.permute.xlu0 %1630
    %v1633 = vmul.f32 %v1615, %v1631
    %1635 = vrot.lane.b32.xlu0 %v1633, 64
    %v1636 = vpop.permute.xlu0 %1635
    %1638 = vst.msk [vmem:[%s530] sm:$0xff] %vm71, %v1636
    %v1639 = vld [vmem:[%s532] sm:$0xff]
    %v1640 = vsel %vm71, %v1636, 0
    %1642 = vmatprep.subr.mxu0 0.0
    %1643 = vmatpush1.msra.mxu0 %v1166
    %1644 = vmatprep.subr.mxu0 0.0
    %1645 = vmatpush1.msra.mxu0 %v1167
    %1646 = vmatprep.subr.mxu0 0.0
    %1647 = vmatpush1.msra.mxu0 %v1168
    %1648 = vmatprep.subr.mxu0 0.0
    %1649 = vmatpush1.msra.mxu0 %v1169
    %1650 = vmatprep.subr.mxu0 0.0
    %1651 = vmatpush1.msra.mxu0 0.0
    %1652 = vmatprep.subr.mxu0 0.0
    %1653 = vmatpush1.msra.mxu0 0.0
    %1654 = vmatprep.subr.mxu0 0.0
    %1655 = vmatpush1.msra.mxu0 0.0
    %1656 = vmatprep.subr.mxu0 0.0
    %1657 = vmatpush1.msra.mxu0 0.0
    %1658 = vmatprep.subr.mxu0 0.0
    %1659 = vmatpush1.msra.mxu0 0.0
    %1660 = vmatprep.subr.mxu0 0.0
    %1661 = vmatpush1.msra.mxu0 0.0
    %1662 = vmatprep.subr.mxu0 0.0
    %1663 = vmatpush1.msra.mxu0 0.0
    %1664 = vmatprep.subr.mxu0 0.0
    %1665 = vmatpush1.msra.mxu0 0.0
    %1666 = vmatprep.subr.mxu0 0.0
    %1667 = vmatpush1.msra.mxu0 0.0
    %1668 = vmatprep.subr.mxu0 0.0
    %1669 = vmatpush1.msra.mxu0 0.0
    %1670 = vmatprep.subr.mxu0 0.0
    %1671 = vmatpush1.msra.mxu0 0.0
    %1672 = vmatprep.subr.mxu0 0.0
    %1673 = vmatpush1.msra.mxu0 0.0
    %1674 = vmatprep.subr.mxu0 0.0
    %1675 = vmatpush1.msra.mxu0 0.0
    %1676 = vmatprep.subr.mxu0 0.0
    %1677 = vmatpush1.msra.mxu0 0.0
    %1678 = vmatprep.subr.mxu0 0.0
    %1679 = vmatpush1.msra.mxu0 0.0
    %1680 = vmatprep.subr.mxu0 0.0
    %1681 = vmatpush1.msra.mxu0 0.0
    %1682 = vmatprep.subr.mxu0 0.0
    %1683 = vmatpush1.msra.mxu0 0.0
    %1684 = vmatprep.subr.mxu0 0.0
    %1685 = vmatpush1.msra.mxu0 0.0
    %1686 = vmatprep.subr.mxu0 0.0
    %1687 = vmatpush1.msra.mxu0 0.0
    %1688 = vmatprep.subr.mxu0 0.0
    %1689 = vmatpush1.msra.mxu0 0.0
    %1690 = vmatprep.subr.mxu0 0.0
    %1691 = vmatpush1.msra.mxu0 0.0
    %1692 = vmatprep.subr.mxu0 0.0
    %1693 = vmatpush1.msra.mxu0 0.0
    %1694 = vmatprep.subr.mxu0 0.0
    %1695 = vmatpush1.msra.mxu0 0.0
    %1696 = vmatprep.subr.mxu0 0.0
    %1697 = vmatpush1.msra.mxu0 0.0
    %1698 = vmatprep.subr.mxu0 0.0
    %1699 = vmatpush1.msra.mxu0 0.0
    %1700 = vmatprep.subr.mxu0 0.0
    %1701 = vmatpush1.msra.mxu0 0.0
    %1702 = vmatprep.subr.mxu0 0.0
    %1703 = vmatpush1.msra.mxu0 0.0
    %1704 = vmatprep.subr.mxu0 0.0
    %1705 = vmatpush1.msra.mxu0 0.0
    %1706 = vmatprep.mubr.f32.mxu0 0.0
    %1707 = vmatmul.mubr.f32.gmra.mrb[0].mxu0 %v1640
    %v1708 = vpop.f32.mrb[0].mxu0
    %v1709 = vadd.f32 0.0, %v1708
    %v1710 = vpop.f32.mrb[0].mxu0
    %1711 = vdwg.mxu0
    %v1712 = vadd.f32 %v1639, %v1709
    %v1713 = vxor.u32 %v1712, 2147483648
    %v1714 = vmul.f32 %v1713, 1.442695
    %v1715 = vpow.pop %v1714
    %v1716 = vadd.f32 %v1715, 1.0
    %v1717 = vrcp.pop %v1716
    %v1718 = vmul.f32 1.0, %v1717
    %v1719 = vtanh.pop %v1712
    %v1720 = vmul.f32 %v1718, %v1627
    %1722 = vrot.lane.b32.xlu0 %v1719, 32
    %v1723 = vpop.permute.xlu0 %1722
    %v1725 = vmul.f32 %v1718, %v1723
    %1727 = vrot.lane.b32.xlu0 %v1725, 32
    %v1728 = vpop.permute.xlu0 %1727
    %v1730 = vadd.f32 %v1720, %v1728
    %v1731 = vtanh.pop %v1730
    %1733 = vrot.lane.b32.xlu0 %v1731, 32
    %v1734 = vpop.permute.xlu0 %1733
    %v1736 = vmul.f32 %v1718, %v1734
    %1738 = vrot.lane.b32.xlu0 %v1736, 64
    %v1739 = vpop.permute.xlu0 %1738
    %1741 = vst.msk [vmem:[%s635] sm:$0xff] %vm71, %v1739
    %v1742 = vld [vmem:[%s637] sm:$0xff]
    %v1743 = vsel %vm71, %v1739, 0
    %1745 = vmatprep.subr.mxu0 0.0
    %1746 = vmatpush1.msra.mxu0 %v1166
    %1747 = vmatprep.subr.mxu0 0.0
    %1748 = vmatpush1.msra.mxu0 %v1167
    %1749 = vmatprep.subr.mxu0 0.0
    %1750 = vmatpush1.msra.mxu0 %v1168
    %1751 = vmatprep.subr.mxu0 0.0
    %1752 = vmatpush1.msra.mxu0 %v1169
    %1753 = vmatprep.subr.mxu0 0.0
    %1754 = vmatpush1.msra.mxu0 0.0
    %1755 = vmatprep.subr.mxu0 0.0
    %1756 = vmatpush1.msra.mxu0 0.0
    %1757 = vmatprep.subr.mxu0 0.0
    %1758 = vmatpush1.msra.mxu0 0.0
    %1759 = vmatprep.subr.mxu0 0.0
    %1760 = vmatpush1.msra.mxu0 0.0
    %1761 = vmatprep.subr.mxu0 0.0
    %1762 = vmatpush1.msra.mxu0 0.0
    %1763 = vmatprep.subr.mxu0 0.0
    %1764 = vmatpush1.msra.mxu0 0.0
    %1765 = vmatprep.subr.mxu0 0.0
    %1766 = vmatpush1.msra.mxu0 0.0
    %1767 = vmatprep.subr.mxu0 0.0
    %1768 = vmatpush1.msra.mxu0 0.0
    %1769 = vmatprep.subr.mxu0 0.0
    %1770 = vmatpush1.msra.mxu0 0.0
    %1771 = vmatprep.subr.mxu0 0.0
    %1772 = vmatpush1.msra.mxu0 0.0
    %1773 = vmatprep.subr.mxu0 0.0
    %1774 = vmatpush1.msra.mxu0 0.0
    %1775 = vmatprep.subr.mxu0 0.0
    %1776 = vmatpush1.msra.mxu0 0.0
    %1777 = vmatprep.subr.mxu0 0.0
    %1778 = vmatpush1.msra.mxu0 0.0
    %1779 = vmatprep.subr.mxu0 0.0
    %1780 = vmatpush1.msra.mxu0 0.0
    %1781 = vmatprep.subr.mxu0 0.0
    %1782 = vmatpush1.msra.mxu0 0.0
    %1783 = vmatprep.subr.mxu0 0.0
    %1784 = vmatpush1.msra.mxu0 0.0
    %1785 = vmatprep.subr.mxu0 0.0
    %1786 = vmatpush1.msra.mxu0 0.0
    %1787 = vmatprep.subr.mxu0 0.0
    %1788 = vmatpush1.msra.mxu0 0.0
    %1789 = vmatprep.subr.mxu0 0.0
    %1790 = vmatpush1.msra.mxu0 0.0
    %1791 = vmatprep.subr.mxu0 0.0
    %1792 = vmatpush1.msra.mxu0 0.0
    %1793 = vmatprep.subr.mxu0 0.0
    %1794 = vmatpush1.msra.mxu0 0.0
    %1795 = vmatprep.subr.mxu0 0.0
    %1796 = vmatpush1.msra.mxu0 0.0
    %1797 = vmatprep.subr.mxu0 0.0
    %1798 = vmatpush1.msra.mxu0 0.0
    %1799 = vmatprep.subr.mxu0 0.0
    %1800 = vmatpush1.msra.mxu0 0.0
    %1801 = vmatprep.subr.mxu0 0.0
    %1802 = vmatpush1.msra.mxu0 0.0
    %1803 = vmatprep.subr.mxu0 0.0
    %1804 = vmatpush1.msra.mxu0 0.0
    %1805 = vmatprep.subr.mxu0 0.0
    %1806 = vmatpush1.msra.mxu0 0.0
    %1807 = vmatprep.subr.mxu0 0.0
    %1808 = vmatpush1.msra.mxu0 0.0
    %1809 = vmatprep.mubr.f32.mxu0 0.0
    %1810 = vmatmul.mubr.f32.gmra.mrb[0].mxu0 %v1743
    %v1811 = vpop.f32.mrb[0].mxu0
    %v1812 = vadd.f32 0.0, %v1811
    %v1813 = vpop.f32.mrb[0].mxu0
    %1814 = vdwg.mxu0
    %v1815 = vadd.f32 %v1742, %v1812
    %v1816 = vxor.u32 %v1815, 2147483648
    %v1817 = vmul.f32 %v1816, 1.442695
    %v1818 = vpow.pop %v1817
    %v1819 = vadd.f32 %v1818, 1.0
    %v1820 = vrcp.pop %v1819
    %v1821 = vmul.f32 1.0, %v1820
    %v1822 = vtanh.pop %v1815
    %v1823 = vmul.f32 %v1821, %v1730
    %1825 = vrot.lane.b32.xlu0 %v1822, 32
    %v1826 = vpop.permute.xlu0 %1825
    %v1828 = vmul.f32 %v1821, %v1826
    %1830 = vrot.lane.b32.xlu0 %v1828, 32
    %v1831 = vpop.permute.xlu0 %1830
    %v1833 = vadd.f32 %v1823, %v1831
    %v1834 = vtanh.pop %v1833
    %1836 = vrot.lane.b32.xlu0 %v1834, 32
    %v1837 = vpop.permute.xlu0 %1836
    %v1839 = vmul.f32 %v1821, %v1837
    %1841 = vrot.lane.b32.xlu0 %v1839, 64
    %v1842 = vpop.permute.xlu0 %1841
    %1844 = vst.msk [vmem:[%s740] sm:$0xff] %vm71, %v1842
    %v1845 = vld [vmem:[%s742] sm:$0xff]
    %v1846 = vsel %vm71, %v1842, 0
    %1848 = vmatprep.subr.mxu0 0.0
    %1849 = vmatpush1.msra.mxu0 %v1166
    %1850 = vmatprep.subr.mxu0 0.0
    %1851 = vmatpush1.msra.mxu0 %v1167
    %1852 = vmatprep.subr.mxu0 0.0
    %1853 = vmatpush1.msra.mxu0 %v1168
    %1854 = vmatprep.subr.mxu0 0.0
    %1855 = vmatpush1.msra.mxu0 %v1169
    %1856 = vmatprep.subr.mxu0 0.0
    %1857 = vmatpush1.msra.mxu0 0.0
    %1858 = vmatprep.subr.mxu0 0.0
    %1859 = vmatpush1.msra.mxu0 0.0
    %1860 = vmatprep.subr.mxu0 0.0
    %1861 = vmatpush1.msra.mxu0 0.0
    %1862 = vmatprep.subr.mxu0 0.0
    %1863 = vmatpush1.msra.mxu0 0.0
    %1864 = vmatprep.subr.mxu0 0.0
    %1865 = vmatpush1.msra.mxu0 0.0
    %1866 = vmatprep.subr.mxu0 0.0
    %1867 = vmatpush1.msra.mxu0 0.0
    %1868 = vmatprep.subr.mxu0 0.0
    %1869 = vmatpush1.msra.mxu0 0.0
    %1870 = vmatprep.subr.mxu0 0.0
    %1871 = vmatpush1.msra.mxu0 0.0
    %1872 = vmatprep.subr.mxu0 0.0
    %1873 = vmatpush1.msra.mxu0 0.0
    %1874 = vmatprep.subr.mxu0 0.0
    %1875 = vmatpush1.msra.mxu0 0.0
    %1876 = vmatprep.subr.mxu0 0.0
    %1877 = vmatpush1.msra.mxu0 0.0
    %1878 = vmatprep.subr.mxu0 0.0
    %1879 = vmatpush1.msra.mxu0 0.0
    %1880 = vmatprep.subr.mxu0 0.0
    %1881 = vmatpush1.msra.mxu0 0.0
    %1882 = vmatprep.subr.mxu0 0.0
    %1883 = vmatpush1.msra.mxu0 0.0
    %1884 = vmatprep.subr.mxu0 0.0
    %1885 = vmatpush1.msra.mxu0 0.0
    %1886 = vmatprep.subr.mxu0 0.0
    %1887 = vmatpush1.msra.mxu0 0.0
    %1888 = vmatprep.subr.mxu0 0.0
    %1889 = vmatpush1.msra.mxu0 0.0
    %1890 = vmatprep.subr.mxu0 0.0
    %1891 = vmatpush1.msra.mxu0 0.0
    %1892 = vmatprep.subr.mxu0 0.0
    %1893 = vmatpush1.msra.mxu0 0.0
    %1894 = vmatprep.subr.mxu0 0.0
    %1895 = vmatpush1.msra.mxu0 0.0
    %1896 = vmatprep.subr.mxu0 0.0
    %1897 = vmatpush1.msra.mxu0 0.0
    %1898 = vmatprep.subr.mxu0 0.0
    %1899 = vmatpush1.msra.mxu0 0.0
    %1900 = vmatprep.subr.mxu0 0.0
    %1901 = vmatpush1.msra.mxu0 0.0
    %1902 = vmatprep.subr.mxu0 0.0
    %1903 = vmatpush1.msra.mxu0 0.0
    %1904 = vmatprep.subr.mxu0 0.0
    %1905 = vmatpush1.msra.mxu0 0.0
    %1906 = vmatprep.subr.mxu0 0.0
    %1907 = vmatpush1.msra.mxu0 0.0
    %1908 = vmatprep.subr.mxu0 0.0
    %1909 = vmatpush1.msra.mxu0 0.0
    %1910 = vmatprep.subr.mxu0 0.0
    %1911 = vmatpush1.msra.mxu0 0.0
    %1912 = vmatprep.mubr.f32.mxu0 0.0
    %1913 = vmatmul.mubr.f32.gmra.mrb[0].mxu0 %v1846
    %v1914 = vpop.f32.mrb[0].mxu0
    %v1915 = vadd.f32 0.0, %v1914
    %v1916 = vpop.f32.mrb[0].mxu0
    %1917 = vdwg.mxu0
    %v1918 = vadd.f32 %v1845, %v1915
    %v1919 = vxor.u32 %v1918, 2147483648
    %v1920 = vmul.f32 %v1919, 1.442695
    %v1921 = vpow.pop %v1920
    %v1922 = vadd.f32 %v1921, 1.0
    %v1923 = vrcp.pop %v1922
    %v1924 = vmul.f32 1.0, %v1923
    %v1925 = vtanh.pop %v1918
    %v1926 = vmul.f32 %v1924, %v1833
    %1928 = vrot.lane.b32.xlu0 %v1925, 32
    %v1929 = vpop.permute.xlu0 %1928
    %v1931 = vmul.f32 %v1924, %v1929
    %1933 = vrot.lane.b32.xlu0 %v1931, 32
    %v1934 = vpop.permute.xlu0 %1933
    %v1936 = vadd.f32 %v1926, %v1934
    %v1937 = vtanh.pop %v1936
    %1939 = vrot.lane.b32.xlu0 %v1937, 32
    %v1940 = vpop.permute.xlu0 %1939
    %v1942 = vmul.f32 %v1924, %v1940
    %1944 = vrot.lane.b32.xlu0 %v1942, 64
    %v1945 = vpop.permute.xlu0 %1944
    %1947 = vst.msk [vmem:[%s845] sm:$0xff] %vm71, %v1945
    %v1948 = vld [vmem:[%s847] sm:$0xff]
    %v1949 = vsel %vm71, %v1945, 0
    %1951 = vmatprep.subr.mxu0 0.0
    %1952 = vmatpush1.msra.mxu0 %v1166
    %1953 = vmatprep.subr.mxu0 0.0
    %1954 = vmatpush1.msra.mxu0 %v1167
    %1955 = vmatprep.subr.mxu0 0.0
    %1956 = vmatpush1.msra.mxu0 %v1168
    %1957 = vmatprep.subr.mxu0 0.0
    %1958 = vmatpush1.msra.mxu0 %v1169
    %1959 = vmatprep.subr.mxu0 0.0
    %1960 = vmatpush1.msra.mxu0 0.0
    %1961 = vmatprep.subr.mxu0 0.0
    %1962 = vmatpush1.msra.mxu0 0.0
    %1963 = vmatprep.subr.mxu0 0.0
    %1964 = vmatpush1.msra.mxu0 0.0
    %1965 = vmatprep.subr.mxu0 0.0
    %1966 = vmatpush1.msra.mxu0 0.0
    %1967 = vmatprep.subr.mxu0 0.0
    %1968 = vmatpush1.msra.mxu0 0.0
    %1969 = vmatprep.subr.mxu0 0.0
    %1970 = vmatpush1.msra.mxu0 0.0
    %1971 = vmatprep.subr.mxu0 0.0
    %1972 = vmatpush1.msra.mxu0 0.0
    %1973 = vmatprep.subr.mxu0 0.0
    %1974 = vmatpush1.msra.mxu0 0.0
    %1975 = vmatprep.subr.mxu0 0.0
    %1976 = vmatpush1.msra.mxu0 0.0
    %1977 = vmatprep.subr.mxu0 0.0
    %1978 = vmatpush1.msra.mxu0 0.0
    %1979 = vmatprep.subr.mxu0 0.0
    %1980 = vmatpush1.msra.mxu0 0.0
    %1981 = vmatprep.subr.mxu0 0.0
    %1982 = vmatpush1.msra.mxu0 0.0
    %1983 = vmatprep.subr.mxu0 0.0
    %1984 = vmatpush1.msra.mxu0 0.0
    %1985 = vmatprep.subr.mxu0 0.0
    %1986 = vmatpush1.msra.mxu0 0.0
    %1987 = vmatprep.subr.mxu0 0.0
    %1988 = vmatpush1.msra.mxu0 0.0
    %1989 = vmatprep.subr.mxu0 0.0
    %1990 = vmatpush1.msra.mxu0 0.0
    %1991 = vmatprep.subr.mxu0 0.0
    %1992 = vmatpush1.msra.mxu0 0.0
    %1993 = vmatprep.subr.mxu0 0.0
    %1994 = vmatpush1.msra.mxu0 0.0
    %1995 = vmatprep.subr.mxu0 0.0
    %1996 = vmatpush1.msra.mxu0 0.0
    %1997 = vmatprep.subr.mxu0 0.0
    %1998 = vmatpush1.msra.mxu0 0.0
    %1999 = vmatprep.subr.mxu0 0.0
    %2000 = vmatpush1.msra.mxu0 0.0
    %2001 = vmatprep.subr.mxu0 0.0
    %2002 = vmatpush1.msra.mxu0 0.0
    %2003 = vmatprep.subr.mxu0 0.0
    %2004 = vmatpush1.msra.mxu0 0.0
    %2005 = vmatprep.subr.mxu0 0.0
    %2006 = vmatpush1.msra.mxu0 0.0
    %2007 = vmatprep.subr.mxu0 0.0
    %2008 = vmatpush1.msra.mxu0 0.0
    %2009 = vmatprep.subr.mxu0 0.0
    %2010 = vmatpush1.msra.mxu0 0.0
    %2011 = vmatprep.subr.mxu0 0.0
    %2012 = vmatpush1.msra.mxu0 0.0
    %2013 = vmatprep.subr.mxu0 0.0
    %2014 = vmatpush1.msra.mxu0 0.0
    %2015 = vmatprep.mubr.f32.mxu0 0.0
    %2016 = vmatmul.mubr.f32.gmra.mrb[0].mxu0 %v1949
    %v2017 = vpop.f32.mrb[0].mxu0
    %v2018 = vadd.f32 0.0, %v2017
    %v2019 = vpop.f32.mrb[0].mxu0
    %2020 = vdwg.mxu0
    %v2021 = vadd.f32 %v1948, %v2018
    %v2022 = vxor.u32 %v2021, 2147483648
    %v2023 = vmul.f32 %v2022, 1.442695
    %v2024 = vpow.pop %v2023
    %v2025 = vadd.f32 %v2024, 1.0
    %v2026 = vrcp.pop %v2025
    %v2027 = vmul.f32 1.0, %v2026
    %v2028 = vtanh.pop %v2021
    %v2029 = vmul.f32 %v2027, %v1936
    %2031 = vrot.lane.b32.xlu0 %v2028, 32
    %v2032 = vpop.permute.xlu0 %2031
    %v2034 = vmul.f32 %v2027, %v2032
    %2036 = vrot.lane.b32.xlu0 %v2034, 32
    %v2037 = vpop.permute.xlu0 %2036
    %v2039 = vadd.f32 %v2029, %v2037
    %v2040 = vtanh.pop %v2039
    %2042 = vrot.lane.b32.xlu0 %v2040, 32
    %v2043 = vpop.permute.xlu0 %2042
    %v2045 = vmul.f32 %v2027, %v2043
    %2047 = vrot.lane.b32.xlu0 %v2045, 64
    %v2048 = vpop.permute.xlu0 %2047
    %2050 = vst.msk [vmem:[%s950] sm:$0xff] %vm71, %v2048
    %v2051 = vld [vmem:[%s952] sm:$0xff]
    %v2052 = vsel %vm71, %v2048, 0
    %2054 = vmatprep.subr.mxu0 0.0
    %2055 = vmatpush1.msra.mxu0 %v1166
    %2056 = vmatprep.subr.mxu0 0.0
    %2057 = vmatpush1.msra.mxu0 %v1167
    %2058 = vmatprep.subr.mxu0 0.0
    %2059 = vmatpush1.msra.mxu0 %v1168
    %2060 = vmatprep.subr.mxu0 0.0
    %2061 = vmatpush1.msra.mxu0 %v1169
    %2062 = vmatprep.subr.mxu0 0.0
    %2063 = vmatpush1.msra.mxu0 0.0
    %2064 = vmatprep.subr.mxu0 0.0
    %2065 = vmatpush1.msra.mxu0 0.0
    %2066 = vmatprep.subr.mxu0 0.0
    %2067 = vmatpush1.msra.mxu0 0.0
    %2068 = vmatprep.subr.mxu0 0.0
    %2069 = vmatpush1.msra.mxu0 0.0
    %2070 = vmatprep.subr.mxu0 0.0
    %2071 = vmatpush1.msra.mxu0 0.0
    %2072 = vmatprep.subr.mxu0 0.0
    %2073 = vmatpush1.msra.mxu0 0.0
    %2074 = vmatprep.subr.mxu0 0.0
    %2075 = vmatpush1.msra.mxu0 0.0
    %2076 = vmatprep.subr.mxu0 0.0
    %2077 = vmatpush1.msra.mxu0 0.0
    %2078 = vmatprep.subr.mxu0 0.0
    %2079 = vmatpush1.msra.mxu0 0.0
    %2080 = vmatprep.subr.mxu0 0.0
    %2081 = vmatpush1.msra.mxu0 0.0
    %2082 = vmatprep.subr.mxu0 0.0
    %2083 = vmatpush1.msra.mxu0 0.0
    %2084 = vmatprep.subr.mxu0 0.0
    %2085 = vmatpush1.msra.mxu0 0.0
    %2086 = vmatprep.subr.mxu0 0.0
    %2087 = vmatpush1.msra.mxu0 0.0
    %2088 = vmatprep.subr.mxu0 0.0
    %2089 = vmatpush1.msra.mxu0 0.0
    %2090 = vmatprep.subr.mxu0 0.0
    %2091 = vmatpush1.msra.mxu0 0.0
    %2092 = vmatprep.subr.mxu0 0.0
    %2093 = vmatpush1.msra.mxu0 0.0
    %2094 = vmatprep.subr.mxu0 0.0
    %2095 = vmatpush1.msra.mxu0 0.0
    %2096 = vmatprep.subr.mxu0 0.0
    %2097 = vmatpush1.msra.mxu0 0.0
    %2098 = vmatprep.subr.mxu0 0.0
    %2099 = vmatpush1.msra.mxu0 0.0
    %2100 = vmatprep.subr.mxu0 0.0
    %2101 = vmatpush1.msra.mxu0 0.0
    %2102 = vmatprep.subr.mxu0 0.0
    %2103 = vmatpush1.msra.mxu0 0.0
    %2104 = vmatprep.subr.mxu0 0.0
    %2105 = vmatpush1.msra.mxu0 0.0
    %2106 = vmatprep.subr.mxu0 0.0
    %2107 = vmatpush1.msra.mxu0 0.0
    %2108 = vmatprep.subr.mxu0 0.0
    %2109 = vmatpush1.msra.mxu0 0.0
    %2110 = vmatprep.subr.mxu0 0.0
    %2111 = vmatpush1.msra.mxu0 0.0
    %2112 = vmatprep.subr.mxu0 0.0
    %2113 = vmatpush1.msra.mxu0 0.0
    %2114 = vmatprep.subr.mxu0 0.0
    %2115 = vmatpush1.msra.mxu0 0.0
    %2116 = vmatprep.subr.mxu0 0.0
    %2117 = vmatpush1.msra.mxu0 0.0
    %2118 = vmatprep.mubr.f32.mxu0 0.0
    %2119 = vmatmul.mubr.f32.gmra.mrb[0].mxu0 %v2052
    %v2120 = vpop.f32.mrb[0].mxu0
    %v2121 = vadd.f32 0.0, %v2120
    %v2122 = vpop.f32.mrb[0].mxu0
    %2123 = vdwg.mxu0
    %v2124 = vadd.f32 %v2051, %v2121
    %v2125 = vxor.u32 %v2124, 2147483648
    %v2126 = vmul.f32 %v2125, 1.442695
    %v2127 = vpow.pop %v2126
    %v2128 = vadd.f32 %v2127, 1.0
    %v2129 = vrcp.pop %v2128
    %v2130 = vmul.f32 1.0, %v2129
    %v2131 = vtanh.pop %v2124
    %v2132 = vmul.f32 %v2130, %v2039
    %2134 = vrot.lane.b32.xlu0 %v2131, 32
    %v2135 = vpop.permute.xlu0 %2134
    %v2137 = vmul.f32 %v2130, %v2135
    %2139 = vrot.lane.b32.xlu0 %v2137, 32
    %v2140 = vpop.permute.xlu0 %2139
    %v2142 = vadd.f32 %v2132, %v2140
    %v2143 = vtanh.pop %v2142
    %2145 = vrot.lane.b32.xlu0 %v2143, 32
    %v2146 = vpop.permute.xlu0 %2145
    %v2148 = vmul.f32 %v2130, %v2146
    %2150 = vrot.lane.b32.xlu0 %v2148, 64
    %v2151 = vpop.permute.xlu0 %2150
    %2153 = vst.msk [vmem:[%s1055] sm:$0xff] %vm71, %v2151
    %v2154 = vld [vmem:[%s1057] sm:$0xff]
    %v2155 = vsel %vm71, %v2151, 0
    %2157 = vmatprep.subr.mxu0 0.0
    %2158 = vmatpush1.msra.mxu0 %v1166
    %2159 = vmatprep.subr.mxu0 0.0
    %2160 = vmatpush1.msra.mxu0 %v1167
    %2161 = vmatprep.subr.mxu0 0.0
    %2162 = vmatpush1.msra.mxu0 %v1168
    %2163 = vmatprep.subr.mxu0 0.0
    %2164 = vmatpush1.msra.mxu0 %v1169
    %2165 = vmatprep.subr.mxu0 0.0
    %2166 = vmatpush1.msra.mxu0 0.0
    %2167 = vmatprep.subr.mxu0 0.0
    %2168 = vmatpush1.msra.mxu0 0.0
    %2169 = vmatprep.subr.mxu0 0.0
    %2170 = vmatpush1.msra.mxu0 0.0
    %2171 = vmatprep.subr.mxu0 0.0
    %2172 = vmatpush1.msra.mxu0 0.0
    %2173 = vmatprep.subr.mxu0 0.0
    %2174 = vmatpush1.msra.mxu0 0.0
    %2175 = vmatprep.subr.mxu0 0.0
    %2176 = vmatpush1.msra.mxu0 0.0
    %2177 = vmatprep.subr.mxu0 0.0
    %2178 = vmatpush1.msra.mxu0 0.0
    %2179 = vmatprep.subr.mxu0 0.0
    %2180 = vmatpush1.msra.mxu0 0.0
    %2181 = vmatprep.subr.mxu0 0.0
    %2182 = vmatpush1.msra.mxu0 0.0
    %2183 = vmatprep.subr.mxu0 0.0
    %2184 = vmatpush1.msra.mxu0 0.0
    %2185 = vmatprep.subr.mxu0 0.0
    %2186 = vmatpush1.msra.mxu0 0.0
    %2187 = vmatprep.subr.mxu0 0.0
    %2188 = vmatpush1.msra.mxu0 0.0
    %2189 = vmatprep.subr.mxu0 0.0
    %2190 = vmatpush1.msra.mxu0 0.0
    %2191 = vmatprep.subr.mxu0 0.0
    %2192 = vmatpush1.msra.mxu0 0.0
    %2193 = vmatprep.subr.mxu0 0.0
    %2194 = vmatpush1.msra.mxu0 0.0
    %2195 = vmatprep.subr.mxu0 0.0
    %2196 = vmatpush1.msra.mxu0 0.0
    %2197 = vmatprep.subr.mxu0 0.0
    %2198 = vmatpush1.msra.mxu0 0.0
    %2199 = vmatprep.subr.mxu0 0.0
    %2200 = vmatpush1.msra.mxu0 0.0
    %2201 = vmatprep.subr.mxu0 0.0
    %2202 = vmatpush1.msra.mxu0 0.0
    %2203 = vmatprep.subr.mxu0 0.0
    %2204 = vmatpush1.msra.mxu0 0.0
    %2205 = vmatprep.subr.mxu0 0.0
    %2206 = vmatpush1.msra.mxu0 0.0
    %2207 = vmatprep.subr.mxu0 0.0
    %2208 = vmatpush1.msra.mxu0 0.0
    %2209 = vmatprep.subr.mxu0 0.0
    %2210 = vmatpush1.msra.mxu0 0.0
    %2211 = vmatprep.subr.mxu0 0.0
    %2212 = vmatpush1.msra.mxu0 0.0
    %2213 = vmatprep.subr.mxu0 0.0
    %2214 = vmatpush1.msra.mxu0 0.0
    %2215 = vmatprep.subr.mxu0 0.0
    %2216 = vmatpush1.msra.mxu0 0.0
    %2217 = vmatprep.subr.mxu0 0.0
    %2218 = vmatpush1.msra.mxu0 0.0
    %2219 = vmatprep.subr.mxu0 0.0
    %2220 = vmatpush1.msra.mxu0 0.0
    %2221 = vmatprep.mubr.f32.mxu0 0.0
    %2222 = vmatmul.mubr.f32.gmra.mrb[0].mxu0 %v2155
    %v2223 = vpop.f32.mrb[0].mxu0
    %v2224 = vadd.f32 0.0, %v2223
    %v2225 = vpop.f32.mrb[0].mxu0
    %2226 = vdwg.mxu0
    %v2227 = vadd.f32 %v2154, %v2224
    %v2228 = vxor.u32 %v2227, 2147483648
    %v2229 = vmul.f32 %v2228, 1.442695
    %v2230 = vpow.pop %v2229
    %v2231 = vadd.f32 %v2230, 1.0
    %v2232 = vrcp.pop %v2231
    %v2233 = vmul.f32 1.0, %v2232
    %v2234 = vtanh.pop %v2227
    %v2235 = vmul.f32 %v2233, %v2142
    %2237 = vrot.lane.b32.xlu0 %v2234, 32
    %v2238 = vpop.permute.xlu0 %2237
    %v2240 = vmul.f32 %v2233, %v2238
    %2242 = vrot.lane.b32.xlu0 %v2240, 32
    %v2243 = vpop.permute.xlu0 %2242
    %v2245 = vadd.f32 %v2235, %v2243
    %v2246 = vtanh.pop %v2245
    %2248 = vrot.lane.b32.xlu0 %v2246, 32
    %v2249 = vpop.permute.xlu0 %2248
    %v2251 = vmul.f32 %v2233, %v2249
    %2253 = vrot.lane.b32.xlu0 %v2251, 64
    %v2254 = vpop.permute.xlu0 %2253
    %2256 = vst.msk [vmem:[%s1160] sm:$0xff] %vm71, %v2254
    %v2257 = vld [vmem:[#allocation2] sm:$0xff]
    %v2258 = vld [vmem:[#allocation2 + $0x8] sm:$0xff]
    %v2259 = vld [vmem:[#allocation2 + $0x10] sm:$0xff]
    %v2260 = vld [vmem:[#allocation2 + $0x18] sm:$0xff]
    %v2261 = vld [vmem:[#allocation2 + $0x20] sm:$0xff]
    %v2262 = vld [vmem:[#allocation2 + $0x28] sm:$0xff]
    %v2263 = vld [vmem:[#allocation2 + $0x30] sm:$0xff]
    %v2264 = vld [vmem:[#allocation2 + $0x38] sm:$0xff]
    %v2265 = vld [vmem:[#allocation2 + $0x40] sm:$0xff]
    %v2266 = vld [vmem:[%s7] sm:$0xff]
    %v2267 = vld [vmem:[%s7 + $0x8] sm:$0xff]
    %v2268 = vld [vmem:[%s7 + $0x10] sm:$0xff]
    %v2269 = vld [vmem:[%s7 + $0x18] sm:$0xff]
    %v2270 = vld [vmem:[%s8] sm:$0x1]
    %v2272 = vlaneseq
    %v2273 = vshrl.u32 %v2272, 7
    %v2274 = vsub.s32 0, %v2273
    %v2275 = vrot.slane %v2270, %v2274
    %v2278 = vsel %vm71, %v2257, 0
    %v2281 = vsel %vm71, %v2258, 0
    %v2284 = vsel %vm71, %v2259, 0
    %v2287 = vsel %vm71, %v2260, 0
    %v2290 = vsel %vm71, %v2261, 0
    %v2293 = vsel %vm71, %v2262, 0
    %v2296 = vsel %vm71, %v2263, 0
    %v2299 = vsel %vm71, %v2264, 0
    %v2302 = vsel %vm71, %v2265, 0
    %2304 = vmatprep.subr.mxu0 0.0
    %2305 = vmatpush1.msra.mxu0 %v2266
    %2306 = vmatprep.subr.mxu0 0.0
    %2307 = vmatpush1.msra.mxu0 %v2267
    %2308 = vmatprep.subr.mxu0 0.0
    %2309 = vmatpush1.msra.mxu0 %v2268
    %2310 = vmatprep.subr.mxu0 0.0
    %2311 = vmatpush1.msra.mxu0 %v2269
    %2312 = vmatprep.subr.mxu0 0.0
    %2313 = vmatpush1.msra.mxu0 0.0
    %2314 = vmatprep.subr.mxu0 0.0
    %2315 = vmatpush1.msra.mxu0 0.0
    %2316 = vmatprep.subr.mxu0 0.0
    %2317 = vmatpush1.msra.mxu0 0.0
    %2318 = vmatprep.subr.mxu0 0.0
    %2319 = vmatpush1.msra.mxu0 0.0
    %2320 = vmatprep.subr.mxu0 0.0
    %2321 = vmatpush1.msra.mxu0 0.0
    %2322 = vmatprep.subr.mxu0 0.0
    %2323 = vmatpush1.msra.mxu0 0.0
    %2324 = vmatprep.subr.mxu0 0.0
    %2325 = vmatpush1.msra.mxu0 0.0
    %2326 = vmatprep.subr.mxu0 0.0
    %2327 = vmatpush1.msra.mxu0 0.0
    %2328 = vmatprep.subr.mxu0 0.0
    %2329 = vmatpush1.msra.mxu0 0.0
    %2330 = vmatprep.subr.mxu0 0.0
    %2331 = vmatpush1.msra.mxu0 0.0
    %2332 = vmatprep.subr.mxu0 0.0
    %2333 = vmatpush1.msra.mxu0 0.0
    %2334 = vmatprep.subr.mxu0 0.0
    %2335 = vmatpush1.msra.mxu0 0.0
    %2336 = vmatprep.subr.mxu0 0.0
    %2337 = vmatpush1.msra.mxu0 0.0
    %2338 = vmatprep.subr.mxu0 0.0
    %2339 = vmatpush1.msra.mxu0 0.0
    %2340 = vmatprep.subr.mxu0 0.0
    %2341 = vmatpush1.msra.mxu0 0.0
    %2342 = vmatprep.subr.mxu0 0.0
    %2343 = vmatpush1.msra.mxu0 0.0
    %2344 = vmatprep.subr.mxu0 0.0
    %2345 = vmatpush1.msra.mxu0 0.0
    %2346 = vmatprep.subr.mxu0 0.0
    %2347 = vmatpush1.msra.mxu0 0.0
    %2348 = vmatprep.subr.mxu0 0.0
    %2349 = vmatpush1.msra.mxu0 0.0
    %2350 = vmatprep.subr.mxu0 0.0
    %2351 = vmatpush1.msra.mxu0 0.0
    %2352 = vmatprep.subr.mxu0 0.0
    %2353 = vmatpush1.msra.mxu0 0.0
    %2354 = vmatprep.subr.mxu0 0.0
    %2355 = vmatpush1.msra.mxu0 0.0
    %2356 = vmatprep.subr.mxu0 0.0
    %2357 = vmatpush1.msra.mxu0 0.0
    %2358 = vmatprep.subr.mxu0 0.0
    %2359 = vmatpush1.msra.mxu0 0.0
    %2360 = vmatprep.subr.mxu0 0.0
    %2361 = vmatpush1.msra.mxu0 0.0
    %2362 = vmatprep.subr.mxu0 0.0
    %2363 = vmatpush1.msra.mxu0 0.0
    %2364 = vmatprep.subr.mxu0 0.0
    %2365 = vmatpush1.msra.mxu0 0.0
    %2366 = vmatprep.subr.mxu0 0.0
    %2367 = vmatpush1.msra.mxu0 0.0
    %2368 = vmatprep.mubr.f32.mxu0 0.0
    %2369 = vmatmul.mubr.f32.gmra.mrb[0].mxu0 %v2278
    %v2370 = vpop.f32.mrb[0].mxu0
    %v2371 = vadd.f32 %v2275, %v2370
    %v2372 = vpop.f32.mrb[0].mxu0
    %2373 = vmatprep.mubr.f32.mxu0 0.0
    %2374 = vmatmul.mubr.f32.gmra.mrb[0].mxu0 %v2281
    %v2375 = vpop.f32.mrb[0].mxu0
    %v2376 = vadd.f32 %v2275, %v2375
    %v2377 = vpop.f32.mrb[0].mxu0
    %2378 = vmatprep.mubr.f32.mxu0 0.0
    %2379 = vmatmul.mubr.f32.gmra.mrb[0].mxu0 %v2284
    %v2380 = vpop.f32.mrb[0].mxu0
    %v2381 = vadd.f32 %v2275, %v2380
    %v2382 = vpop.f32.mrb[0].mxu0
    %2383 = vmatprep.mubr.f32.mxu0 0.0
    %2384 = vmatmul.mubr.f32.gmra.mrb[0].mxu0 %v2287
    %v2385 = vpop.f32.mrb[0].mxu0
    %v2386 = vadd.f32 %v2275, %v2385
    %v2387 = vpop.f32.mrb[0].mxu0
    %2388 = vmatprep.mubr.f32.mxu0 0.0
    %2389 = vmatmul.mubr.f32.gmra.mrb[0].mxu0 %v2290
    %v2390 = vpop.f32.mrb[0].mxu0
    %v2391 = vadd.f32 %v2275, %v2390
    %v2392 = vpop.f32.mrb[0].mxu0
    %2393 = vmatprep.mubr.f32.mxu0 0.0
    %2394 = vmatmul.mubr.f32.gmra.mrb[0].mxu0 %v2293
    %v2395 = vpop.f32.mrb[0].mxu0
    %v2396 = vadd.f32 %v2275, %v2395
    %v2397 = vpop.f32.mrb[0].mxu0
    %2398 = vmatprep.mubr.f32.mxu0 0.0
    %2399 = vmatmul.mubr.f32.gmra.mrb[0].mxu0 %v2296
    %v2400 = vpop.f32.mrb[0].mxu0
    %v2401 = vadd.f32 %v2275, %v2400
    %v2402 = vpop.f32.mrb[0].mxu0
    %2403 = vmatprep.mubr.f32.mxu0 0.0
    %2404 = vmatmul.mubr.f32.gmra.mrb[0].mxu0 %v2299
    %v2405 = vpop.f32.mrb[0].mxu0
    %v2406 = vadd.f32 %v2275, %v2405
    %v2407 = vpop.f32.mrb[0].mxu0
    %2408 = vmatprep.mubr.f32.mxu0 0.0
    %2409 = vmatmul.mubr.f32.gmra.mrb[0].mxu0 %v2302
    %v2410 = vpop.f32.mrb[0].mxu0
    %v2411 = vadd.f32 %v2275, %v2410
    %v2412 = vpop.f32.mrb[0].mxu0
    %2413 = vdwg.mxu0
    %2414 = vst [vmem:[#allocation7] sm:$0xff] %v2371
    %2415 = vst [vmem:[#allocation7 + $0x8] sm:$0xff] %v2376
    %2416 = vst [vmem:[#allocation7 + $0x10] sm:$0xff] %v2381
    %2417 = vst [vmem:[#allocation7 + $0x18] sm:$0xff] %v2386
    %2418 = vst [vmem:[#allocation7 + $0x20] sm:$0xff] %v2391
    %2419 = vst [vmem:[#allocation7 + $0x28] sm:$0xff] %v2396
    %2420 = vst [vmem:[#allocation7 + $0x30] sm:$0xff] %v2401
    %2421 = vst [vmem:[#allocation7 + $0x38] sm:$0xff] %v2406
    %2422 = vst [vmem:[#allocation7 + $0x40] sm:$0xff] %v2411
    // Predicated region
    $region42: #{tpu_custom_call.1} parent=1 // pred_check
      _
    $region43: #{tpu_custom_call.1} parent=1 // pred_check_branch
      %2424 = sbr.rel (0) target = $region45
    $region44: #{tpu_custom_call.1} parent=1 // pred_region
      %s2426 = ssub.s32 1152, 1152
      %2427 = vsyncadd [#allocation6], %s2426
      %s2428 = sshll.u32 [#allocation7], 4
      %s2429 = int_to_ptr.vmem [resolvable:$true] %s2428
      %2434 = dma.vmem_to_hbm [thread:$0]  %s2429, 1152, %s9, [#allocation6], 128, 128, 8
    $region45: #{tpu_custom_call.1} parent=1 // pred_fallthru
      _
    // Predicated region
    $region46: #{tpu_custom_call.1} parent=1 // pred_check
      _
    $region47: #{tpu_custom_call.1} parent=1 // pred_check_branch
      %2436 = sbr.rel (0) target = $region49
    $region48: #{tpu_custom_call.1} parent=1 // pred_region
      %2437 = dma.done [#allocation6], 1152
    $region49: #{tpu_custom_call.1} parent=1 // pred_fallthru
      _
    %2438 = vsyncpa [#allocation5], 1
    %2439 = vsyncpa [#allocation6], 1

</llo_original>
